<compile_context>
chip_gen: v5e
topology: v5e:2x2
jax: 0.10.0
libtpu: 0.0.40
codegen_flags: <defaults>
</compile_context>

<pallas_src>
import functools

import jax
import jax.numpy as jnp
from jax.experimental import pallas as pl
from jax.experimental.pallas import tpu as pltpu

LAYER_NUM = 3
LANE = 128       # vreg lane width
SUBLANE = 8      # vreg sublane count (f32)
GATE_PERM = (0, 1, 3, 2)   # PyTorch [i|f|g|o] -> kernel [i|f|o|g]


def _round_up(x, m):
    return (x + m - 1) // m * m


def _vmem_limit_bytes(default=48 * 1024 * 1024):
    """3/4 of the chip's physical VMEM (v5e/v6e -> 96 MiB, v7x -> 48 MiB)."""
    try:
        cap = getattr(pltpu.get_tpu_info(), "vmem_capacity_bytes", None)
        if cap:
            return int(cap) * 3 // 4
    except Exception:
        pass
    return default


def _lstm_layer_kernel(lens_ref, x_ref, wih_ref, whh_ref, b_ref,
                       seq_ref, gx_buf, *, T, Bp, Hp, Ip, time_unroll):
    """One LSTM layer per grid step (grid=(LAYER_NUM,), "arbitrary").

    lens_ref : (Bp, Hp)     f32  valid length per (padded) batch row
    x_ref    : (T*Bp, Ip)   mm   embedded tokens (time-major, padded); layer 0
    wih_ref  : (Dp, 4*Hp)   mm   this layer's W_ih^T (gate cols [i|f|o|g])
    whh_ref  : (Hp, 4*Hp)   mm   this layer's W_hh^T
    b_ref    : (1, 4*Hp)    f32  combined bias b_ih + b_hh
    seq_ref  : (T*Bp, Hp)   mm   resident output block: previous layer's hidden
                                 sequence on entry, this layer's on exit
    gx_buf   : (T*Bp, 4*Hp) mm   scratch: hoisted input-projection gates
    """
    layer = pl.program_id(0)
    f32 = jnp.float32

    # Input projection (and bias) hoisted out of the recurrence: one big MXU
    # matmul over all timesteps at once.  Layer 0 reads the embedded tokens;
    # deeper layers read the previous layer's sequence (resident output).
    @pl.when(layer == 0)
    def _():
        gx_buf[...] = (
            jnp.dot(x_ref[...], wih_ref[0:Ip, :], preferred_element_type=f32)
            + b_ref[...]).astype(gx_buf.dtype)

    @pl.when(layer > 0)
    def _():
        gx_buf[...] = (
            jnp.dot(seq_ref[...], wih_ref[0:Hp, :], preferred_element_type=f32)
            + b_ref[...]).astype(gx_buf.dtype)

    def step(t, carry):
        h, c = carry
        off = pl.multiple_of(t * Bp, Bp)
        gx = gx_buf[pl.ds(off, Bp), :].astype(f32)               # (Bp, 4*Hp)
        # 0/1 freeze mask for packed-sequence semantics: t < len[b].
        m = (lens_ref[...] > t.astype(f32)).astype(f32)          # (Bp, Hp)
        # TODO(synk): whh could be pinned in the MXU across the T steps with
        # pltpu.matmul_push_rhs / matmul_acc_lhs; jnp.dot re-streams it.
        gates = gx + jnp.dot(h.astype(whh_ref.dtype), whh_ref[...],
                             preferred_element_type=f32)
        # Gate layout [i|f|o|g]: one contiguous sigmoid, one tanh (EUP).
        sig = jax.nn.sigmoid(gates[:, 0:3 * Hp])
        i_g = sig[:, 0:Hp]
        f_g = sig[:, Hp:2 * Hp]
        o_g = sig[:, 2 * Hp:3 * Hp]
        g_g = jnp.tanh(gates[:, 3 * Hp:4 * Hp])
        c_new = f_g * c + i_g * g_g
        h_new = o_g * jnp.tanh(c_new)
        # pad_packed_sequence pads with zeros; (h, c) freeze when t >= len[b].
        seq_ref[pl.ds(off, Bp), :] = (m * h_new).astype(seq_ref.dtype)
        h = h + m * (h_new - h)
        c = c + m * (c_new - c)
        return h, c

    h0 = jnp.zeros((Bp, Hp), f32)
    c0 = jnp.zeros((Bp, Hp), f32)
    jax.lax.fori_loop(0, T, step, (h0, c0), unroll=time_unroll)


def _projection_kernel(seq_ref, wlin_ref, blin_ref, out_ref):
    """Final Linear for one (row-tile, vocab-tile): lane-dense output."""
    out_ref[...] = (
        jnp.dot(seq_ref[...], wlin_ref[...], preferred_element_type=jnp.float32)
        + blin_ref[...])


def lstm_net_forward(tokens, lens, params, *, matmul_dtype=jnp.bfloat16,
                     vocab_tile=512, max_row_tile=512):
    """tokens: (B, T) int32, lens: (B,) int32 valid lengths (sorted desc).

    Returns logits (B, T, vocab), matching LstmNet.forward (batch_first).
    matmul_dtype: dtype fed to the MXU (bf16 default; f32 for bit-accuracy).
    State / accumulation always stay f32.
    """
    assert vocab_tile % LANE == 0
    B, T = tokens.shape
    H = params["w_hh"][0].shape[1]
    V = params["w_lin"].shape[0]
    I = params["embedding"].shape[1]

    # TODO(synk): at Bp=8 the recurrent matmul uses only 8 MXU rows; padding /
    # packing the batch to >=128 rows is the real lever for the recurrence.
    Bp = _round_up(B, SUBLANE)
    Hp = _round_up(H, LANE)
    Ip = _round_up(I, LANE)
    Dp = max(Ip, Hp)

    mm = matmul_dtype
    f32 = jnp.float32
    vmem_limit = _vmem_limit_bytes()

    def pack_gates(w):
        # w: (Din, 4*H), PyTorch gate order [i|f|g|o] along columns.
        # -> (Din, 4*Hp): gates reordered to [i|f|o|g], H zero-padded to Hp.
        din = w.shape[0]
        w = w.reshape(din, 4, H)[:, GATE_PERM, :]
        return jnp.pad(w, ((0, 0), (0, 0), (0, Hp - H))).reshape(din, 4 * Hp)

    # --- XLA glue: embedding gather, padding, lens vector -------------------
    # TODO(synk): the embedding gather and the final time-major -> batch-first
    # transpose of the logits stay in XLA; they could move in-kernel
    # (jnp.take / batch-first out index map) if they dominate at large T*B*V.
    x_emb = params["embedding"][tokens].astype(f32)            # (B, T, I)
    x_tm = jnp.transpose(x_emb, (1, 0, 2))                     # (T, B, I)
    x_tm = jnp.pad(x_tm, ((0, 0), (0, Bp - B), (0, Ip - I)))
    x_flat = x_tm.reshape(T * Bp, Ip).astype(mm)

    lens_p = jnp.pad(lens.astype(f32), (0, Bp - B))            # padded rows: 0
    lens_hp = jnp.broadcast_to(lens_p[:, None], (Bp, Hp))

    # --- stacked per-layer weights (one layer resident per grid step) -------
    wih_l, whh_l, b_l = [], [], []
    for l in range(LAYER_NUM):
        din = I if l == 0 else H
        wih = pack_gates(params["w_ih"][l].T)                  # (din, 4*Hp)
        wih_l.append(jnp.pad(wih, ((0, Dp - din), (0, 0))))
        whh = pack_gates(params["w_hh"][l].T)                  # (H, 4*Hp)
        whh_l.append(jnp.pad(whh, ((0, Hp - H), (0, 0))))
        b_l.append(pack_gates(
            (params["b_ih"][l] + params["b_hh"][l]).reshape(1, 4 * H)))
    wih_all = jnp.stack(wih_l).astype(mm)                      # (3, Dp, 4*Hp)
    whh_all = jnp.stack(whh_l).astype(mm)                      # (3, Hp, 4*Hp)
    b_all = jnp.stack(b_l).astype(f32)                         # (3, 1, 4*Hp)

    time_unroll = T if T <= 8 else 8

    # --- kernel 1: 3-layer LSTM, one layer per ("arbitrary") grid step ------
    seq = pl.pallas_call(
        functools.partial(_lstm_layer_kernel, T=T, Bp=Bp, Hp=Hp, Ip=Ip,
                          time_unroll=time_unroll),
        out_shape=jax.ShapeDtypeStruct((T * Bp, Hp), mm),
        grid=(LAYER_NUM,),
        in_specs=[
            pl.BlockSpec((Bp, Hp), lambda l: (0, 0)),              # lens
            pl.BlockSpec((T * Bp, Ip), lambda l: (0, 0)),          # x (layer 0)
            pl.BlockSpec((None, Dp, 4 * Hp), lambda l: (l, 0, 0)),  # wih
            pl.BlockSpec((None, Hp, 4 * Hp), lambda l: (l, 0, 0)),  # whh
            pl.BlockSpec((None, 1, 4 * Hp), lambda l: (l, 0, 0)),   # bias
        ],
        out_specs=pl.BlockSpec((T * Bp, Hp), lambda l: (0, 0)),
        scratch_shapes=[pltpu.VMEM((T * Bp, 4 * Hp), mm)],         # gx_buf
        compiler_params=pltpu.CompilerParams(
            dimension_semantics=("arbitrary",),
            vmem_limit_bytes=vmem_limit),
    )(lens_hp, x_flat, wih_all, whh_all, b_all)

    # --- kernel 2: output Linear on a 2-D parallel (rows, vocab) grid -------
    TV = min(vocab_tile, _round_up(V, LANE))
    Vp = _round_up(_round_up(V, LANE), TV)
    n_vtiles = Vp // TV

    rows = T * Bp
    t_chunk = max(1, min(T, max(1, max_row_tile // Bp)))
    while T % t_chunk:                                 # row tile divides T*Bp
        t_chunk -= 1
    TM = t_chunk * Bp
    n_mtiles = rows // TM

    wlin = jnp.pad(params["w_lin"].T, ((0, Hp - H), (0, Vp - V))).astype(mm)
    blin = jnp.pad(params["b_lin"].reshape(1, V),
                   ((0, 0), (0, Vp - V))).astype(f32)

    logits_tm = pl.pallas_call(
        _projection_kernel,
        out_shape=jax.ShapeDtypeStruct((rows, Vp), f32),
        grid=(n_mtiles, n_vtiles),
        in_specs=[
            pl.BlockSpec((TM, Hp), lambda i, j: (i, 0)),
            pl.BlockSpec((Hp, TV), lambda i, j: (0, j)),
            pl.BlockSpec((1, TV), lambda i, j: (0, j)),
        ],
        out_specs=pl.BlockSpec((TM, TV), lambda i, j: (i, j)),
        compiler_params=pltpu.CompilerParams(
            dimension_semantics=("parallel", "parallel"),
            vmem_limit_bytes=vmem_limit),
    )(seq, wlin, blin)

    logits = jnp.transpose(logits_tm.reshape(T, Bp, Vp), (1, 0, 2))
    return logits[:B, :, :V]                                   # (B, T, V)


def lstm_net_reference(tokens, lens, params, matmul_dtype=jnp.float32):
    """Pure-JAX reference of LstmNet.forward (packed-sequence semantics)."""
    def mm_cast(a):
        return a.astype(matmul_dtype)

    x = params["embedding"][tokens].astype(jnp.float32)        # (B, T, I)
    x = jnp.transpose(x, (1, 0, 2))                            # (T, B, I)
    B, T = tokens.shape
    for l in range(LAYER_NUM):
        wih = mm_cast(params["w_ih"][l])
        whh = mm_cast(params["w_hh"][l])
        b = params["b_ih"][l] + params["b_hh"][l]
        H = params["w_hh"][l].shape[1]

        def step(carry, inp, wih=wih, whh=whh, b=b, H=H):
            h, c = carry
            x_t, t = inp
            gates = (jnp.dot(mm_cast(x_t), wih.T,
                             preferred_element_type=jnp.float32)
                     + jnp.dot(mm_cast(h), whh.T,
                               preferred_element_type=jnp.float32)
                     + b)
            i = jax.nn.sigmoid(gates[:, :H])
            f = jax.nn.sigmoid(gates[:, H:2 * H])
            g = jnp.tanh(gates[:, 2 * H:3 * H])
            o = jax.nn.sigmoid(gates[:, 3 * H:])
            c_new = f * c + i * g
            h_new = o * jnp.tanh(c_new)
            mask = (lens > t)[:, None]
            h = jnp.where(mask, h_new, h)
            c = jnp.where(mask, c_new, c)
            return (h, c), jnp.where(mask, h, 0.0)

        init = (jnp.zeros((B, H), jnp.float32), jnp.zeros((B, H), jnp.float32))
        _, x = jax.lax.scan(step, init, (x, jnp.arange(T)))
    out = (jnp.dot(mm_cast(x), mm_cast(params["w_lin"]).T,
                   preferred_element_type=jnp.float32)
           + params["b_lin"])
    return jnp.transpose(out, (1, 0, 2))


def make_params(key, vocab_size, input_size, hidden_size):
    """Deterministic synthetic parameters (shapes match the nn.Module)."""
    keys = iter(jax.random.split(key, 4 * LAYER_NUM + 4))
    scale = 1.0 / jnp.sqrt(hidden_size)
    params = {
        "embedding": jax.random.normal(
            next(keys), (vocab_size, input_size), jnp.float32),
        "w_ih": [], "w_hh": [], "b_ih": [], "b_hh": [],
    }
    for l in range(LAYER_NUM):
        din = input_size if l == 0 else hidden_size
        params["w_ih"].append(jax.random.uniform(
            next(keys), (4 * hidden_size, din), jnp.float32, -scale, scale))
        params["w_hh"].append(jax.random.uniform(
            next(keys), (4 * hidden_size, hidden_size), jnp.float32,
            -scale, scale))
        params["b_ih"].append(jax.random.uniform(
            next(keys), (4 * hidden_size,), jnp.float32, -scale, scale))
        params["b_hh"].append(jax.random.uniform(
            next(keys), (4 * hidden_size,), jnp.float32, -scale, scale))
    params["w_lin"] = jax.random.uniform(
        next(keys), (vocab_size, hidden_size), jnp.float32, -scale, scale)
    params["b_lin"] = jax.random.uniform(
        next(keys), (vocab_size,), jnp.float32, -scale, scale)
    return params


if __name__ == "__main__":
    VOCAB, INPUT, HIDDEN = 50, 16, 32
    B, T = 2, 8

    key = jax.random.PRNGKey(0)
    pkey, tkey = jax.random.split(key)
    params = make_params(pkey, VOCAB, INPUT, HIDDEN)

    tokens = jax.random.randint(tkey, (B, T), 0, VOCAB, dtype=jnp.int32)
    # pack_padded_sequence requires lengths sorted descending.
    lens = jnp.array([T, 5], dtype=jnp.int32)

    # bf16 MXU fast path (the default): f32 state/accumulation, loose tol.
    out_bf16 = jax.block_until_ready(lstm_net_forward(tokens, lens, params))
    assert out_bf16.shape == (B, T, VOCAB), out_bf16.shape
    ref_bf16 = jax.block_until_ready(
        lstm_net_reference(tokens, lens, params, matmul_dtype=jnp.bfloat16))
    assert jnp.allclose(out_bf16, ref_bf16, atol=2e-2, rtol=2e-2), (
        float(jnp.max(jnp.abs(out_bf16 - ref_bf16))))

    # f32 MXU path (v5e-friendly, bit-accurate): tight tolerance.
    out_f32 = jax.block_until_ready(
        lstm_net_forward(tokens, lens, params, matmul_dtype=jnp.float32))
    ref_f32 = jax.block_until_ready(lstm_net_reference(tokens, lens, params))
    assert jnp.allclose(out_f32, ref_f32, atol=2e-3, rtol=2e-3), (
        float(jnp.max(jnp.abs(out_f32 - ref_f32))))

    print("KERNEL_OK")
</pallas_src>

<mosaic_0001>
module attributes {stable_mosaic.version = 11 : i64} {
  func.func @_lstm_layer_kernel(%arg0: i32, %arg1: memref<8x128xf32, #tpu.memory_space<vmem>>, %arg2: memref<64x128xbf16, #tpu.memory_space<vmem>>, %arg3: memref<1x128x512xbf16, #tpu.memory_space<vmem>>, %arg4: memref<1x128x512xbf16, #tpu.memory_space<vmem>>, %arg5: memref<1x1x512xf32, #tpu.memory_space<vmem>>, %arg6: memref<64x128xbf16, #tpu.memory_space<vmem>>, %arg7: memref<64x512xbf16, #tpu.memory_space<vmem>>) attributes {dimension_semantics = [#tpu.dimension_semantics<arbitrary>], iteration_bounds = array<i64: 3>, scalar_prefetch = 0 : i64, scratch_operands = 1 : i64, tpu.core_type = #tpu.core_type<tc>, window_params = [{pipeline_mode = #tpu.pipeline_mode<synchronous>, transform_indices = @transform_0, window_bounds = array<i64: 8, 128>}, {pipeline_mode = #tpu.pipeline_mode<synchronous>, transform_indices = @transform_1, window_bounds = array<i64: 64, 128>}, {transform_indices = @transform_2, window_bounds = array<i64: 1, 128, 512>}, {transform_indices = @transform_3, window_bounds = array<i64: 1, 128, 512>}, {transform_indices = @transform_4, window_bounds = array<i64: 1, 1, 512>}, {pipeline_mode = #tpu.pipeline_mode<synchronous>, transform_indices = @transform_5, window_bounds = array<i64: 64, 128>}]} {
    %c0_i32 = arith.constant 0 : i32
    %0 = arith.cmpi eq, %arg0, %c0_i32 : i32
    %1 = arith.extui %0 : i1 to i32
    %c0_i32_0 = arith.constant 0 : i32
    %2 = arith.cmpi ne, %1, %c0_i32_0 : i32
    scf.if %2 {
      %c0_84 = arith.constant 0 : index
      %c0_85 = arith.constant 0 : index
      %344 = vector.load %arg2[%c0_84, %c0_85] : memref<64x128xbf16, #tpu.memory_space<vmem>>, vector<64x128xbf16>
      %c0_86 = arith.constant 0 : index
      %c0_87 = arith.constant 0 : index
      %c0_88 = arith.constant 0 : index
      %345 = vector.load %arg3[%c0_86, %c0_87, %c0_88] : memref<1x128x512xbf16, #tpu.memory_space<vmem>>, vector<1x128x512xbf16>
      %346 = vector.shape_cast %345 : vector<1x128x512xbf16> to vector<128x512xbf16>
      %cst_89 = arith.constant dense<0.000000e+00> : vector<64x512xf32>
      %347 = tpu.matmul %344, %346, %cst_89 {dimension_numbers = #tpu.dot_dimension_numbers<[1], [0], [0], [1], [0, 0, 1, 1], [], []>} : vector<64x128xbf16>, vector<128x512xbf16>, vector<64x512xf32> -> vector<64x512xf32>
      %c0_90 = arith.constant 0 : index
      %c0_91 = arith.constant 0 : index
      %c0_92 = arith.constant 0 : index
      %348 = vector.load %arg5[%c0_90, %c0_91, %c0_92] : memref<1x1x512xf32, #tpu.memory_space<vmem>>, vector<1x1x512xf32>
      %349 = vector.shape_cast %348 : vector<1x1x512xf32> to vector<1x512xf32>
      %350 = vector.broadcast %349 : vector<1x512xf32> to vector<64x512xf32>
      %351 = arith.addf %347, %350 : vector<64x512xf32>
      %352 = arith.truncf %351 : vector<64x512xf32> to vector<64x512xbf16>
      %c0_93 = arith.constant 0 : index
      %c0_94 = arith.constant 0 : index
      %353 = vector.load %arg7[%c0_93, %c0_94] : memref<64x512xbf16, #tpu.memory_space<vmem>>, vector<64x512xbf16>
      tpu.vector_store %arg7[%c0_93, %c0_94], %352 {strides = array<i32>} : memref<64x512xbf16, #tpu.memory_space<vmem>>, vector<64x512xbf16>,
    } else {
    }
    %c0_i32_1 = arith.constant 0 : i32
    %3 = arith.cmpi sgt, %arg0, %c0_i32_1 : i32
    %4 = arith.extui %3 : i1 to i32
    %c0_i32_2 = arith.constant 0 : i32
    %5 = arith.cmpi ne, %4, %c0_i32_2 : i32
    scf.if %5 {
      %c0_84 = arith.constant 0 : index
      %c0_85 = arith.constant 0 : index
      %344 = vector.load %arg6[%c0_84, %c0_85] : memref<64x128xbf16, #tpu.memory_space<vmem>>, vector<64x128xbf16>
      %c0_86 = arith.constant 0 : index
      %c0_87 = arith.constant 0 : index
      %c0_88 = arith.constant 0 : index
      %345 = vector.load %arg3[%c0_86, %c0_87, %c0_88] : memref<1x128x512xbf16, #tpu.memory_space<vmem>>, vector<1x128x512xbf16>
      %346 = vector.shape_cast %345 : vector<1x128x512xbf16> to vector<128x512xbf16>
      %cst_89 = arith.constant dense<0.000000e+00> : vector<64x512xf32>
      %347 = tpu.matmul %344, %346, %cst_89 {dimension_numbers = #tpu.dot_dimension_numbers<[1], [0], [0], [1], [0, 0, 1, 1], [], []>} : vector<64x128xbf16>, vector<128x512xbf16>, vector<64x512xf32> -> vector<64x512xf32>
      %c0_90 = arith.constant 0 : index
      %c0_91 = arith.constant 0 : index
      %c0_92 = arith.constant 0 : index
      %348 = vector.load %arg5[%c0_90, %c0_91, %c0_92] : memref<1x1x512xf32, #tpu.memory_space<vmem>>, vector<1x1x512xf32>
      %349 = vector.shape_cast %348 : vector<1x1x512xf32> to vector<1x512xf32>
      %350 = vector.broadcast %349 : vector<1x512xf32> to vector<64x512xf32>
      %351 = arith.addf %347, %350 : vector<64x512xf32>
      %352 = arith.truncf %351 : vector<64x512xf32> to vector<64x512xbf16>
      %c0_93 = arith.constant 0 : index
      %c0_94 = arith.constant 0 : index
      %353 = vector.load %arg7[%c0_93, %c0_94] : memref<64x512xbf16, #tpu.memory_space<vmem>>, vector<64x512xbf16>
      tpu.vector_store %arg7[%c0_93, %c0_94], %352 {strides = array<i32>} : memref<64x512xbf16, #tpu.memory_space<vmem>>, vector<64x512xbf16>,
    } else {
    }
    %cst = arith.constant 0.000000e+00 : f32
    %6 = vector.broadcast %cst : f32 to vector<8x128xf32>
    %cst_3 = arith.constant 0.000000e+00 : f32
    %7 = vector.broadcast %cst_3 : f32 to vector<8x128xf32>
    %c0_i32_4 = arith.constant 0 : i32
    %c8_i32 = arith.constant 8 : i32
    %8 = arith.muli %c0_i32_4, %c8_i32 : i32
    %9 = tpu.assume_multiple %8, 8 : i32
    %10 = arith.index_cast %9 : i32 to index
    %c0 = arith.constant 0 : index
    %11 = vector.load %arg7[%10, %c0] : memref<64x512xbf16, #tpu.memory_space<vmem>>, vector<8x512xbf16>
    %12 = arith.extf %11 : vector<8x512xbf16> to vector<8x512xf32>
    %c0_5 = arith.constant 0 : index
    %c0_6 = arith.constant 0 : index
    %13 = vector.load %arg1[%c0_5, %c0_6] : memref<8x128xf32, #tpu.memory_space<vmem>>, vector<8x128xf32>
    %14 = arith.sitofp %c0_i32_4 : i32 to f32
    %15 = vector.broadcast %14 : f32 to vector<8x128xf32>
    %16 = arith.cmpf ogt, %13, %15 : vector<8x128xf32>
    %17 = arith.extui %16 : vector<8x128xi1> to vector<8x128xi32>
    %18 = arith.sitofp %17 : vector<8x128xi32> to vector<8x128xf32>
    %19 = arith.truncf %6 : vector<8x128xf32> to vector<8x128xbf16>
    %c0_7 = arith.constant 0 : index
    %c0_8 = arith.constant 0 : index
    %c0_9 = arith.constant 0 : index
    %20 = vector.load %arg4[%c0_7, %c0_8, %c0_9] : memref<1x128x512xbf16, #tpu.memory_space<vmem>>, vector<1x128x512xbf16>
    %21 = vector.shape_cast %20 : vector<1x128x512xbf16> to vector<128x512xbf16>
    %cst_10 = arith.constant dense<0.000000e+00> : vector<8x512xf32>
    %22 = tpu.matmul %19, %21, %cst_10 {dimension_numbers = #tpu.dot_dimension_numbers<[1], [0], [0], [1], [0, 0, 1, 1], [], []>} : vector<8x128xbf16>, vector<128x512xbf16>, vector<8x512xf32> -> vector<8x512xf32>
    %23 = arith.addf %12, %22 : vector<8x512xf32>
    %24 = vector.extract_strided_slice %23 {offsets = [0, 0], sizes = [8, 384], strides = [1, 1]} : vector<8x512xf32> to vector<8x384xf32>
    %25 = arith.negf %24 : vector<8x384xf32>
    %26 = math.exp %25 : vector<8x384xf32>
    %cst_11 = arith.constant 1.000000e+00 : f32
    %27 = vector.broadcast %cst_11 : f32 to vector<8x384xf32>
    %28 = arith.addf %27, %26 : vector<8x384xf32>
    %29 = arith.divf %27, %28 : vector<8x384xf32>
    %30 = vector.extract_strided_slice %29 {offsets = [0, 0], sizes = [8, 128], strides = [1, 1]} : vector<8x384xf32> to vector<8x128xf32>
    %31 = vector.extract_strided_slice %29 {offsets = [0, 128], sizes = [8, 128], strides = [1, 1]} : vector<8x384xf32> to vector<8x128xf32>
    %32 = vector.extract_strided_slice %29 {offsets = [0, 256], sizes = [8, 128], strides = [1, 1]} : vector<8x384xf32> to vector<8x128xf32>
    %33 = vector.extract_strided_slice %23 {offsets = [0, 384], sizes = [8, 128], strides = [1, 1]} : vector<8x512xf32> to vector<8x128xf32>
    %34 = math.tanh %33 : vector<8x128xf32>
    %35 = arith.mulf %31, %7 : vector<8x128xf32>
    %36 = arith.mulf %30, %34 : vector<8x128xf32>
    %37 = arith.addf %35, %36 : vector<8x128xf32>
    %38 = math.tanh %37 : vector<8x128xf32>
    %39 = arith.mulf %32, %38 : vector<8x128xf32>
    %40 = arith.mulf %18, %39 : vector<8x128xf32>
    %41 = arith.truncf %40 : vector<8x128xf32> to vector<8x128xbf16>
    %42 = arith.index_cast %9 : i32 to index
    %c0_12 = arith.constant 0 : index
    %43 = vector.load %arg6[%42, %c0_12] : memref<64x128xbf16, #tpu.memory_space<vmem>>, vector<8x128xbf16>
    tpu.vector_store %arg6[%42, %c0_12], %41 {strides = array<i32>} : memref<64x128xbf16, #tpu.memory_space<vmem>>, vector<8x128xbf16>,
    %44 = arith.subf %39, %6 : vector<8x128xf32>
    %45 = arith.mulf %18, %44 : vector<8x128xf32>
    %46 = arith.addf %6, %45 : vector<8x128xf32>
    %47 = arith.subf %37, %7 : vector<8x128xf32>
    %48 = arith.mulf %18, %47 : vector<8x128xf32>
    %49 = arith.addf %7, %48 : vector<8x128xf32>
    %c1_i32 = arith.constant 1 : i32
    %c8_i32_13 = arith.constant 8 : i32
    %50 = arith.muli %c1_i32, %c8_i32_13 : i32
    %51 = tpu.assume_multiple %50, 8 : i32
    %52 = arith.index_cast %51 : i32 to index
    %c0_14 = arith.constant 0 : index
    %53 = vector.load %arg7[%52, %c0_14] : memref<64x512xbf16, #tpu.memory_space<vmem>>, vector<8x512xbf16>
    %54 = arith.extf %53 : vector<8x512xbf16> to vector<8x512xf32>
    %c0_15 = arith.constant 0 : index
    %c0_16 = arith.constant 0 : index
    %55 = vector.load %arg1[%c0_15, %c0_16] : memref<8x128xf32, #tpu.memory_space<vmem>>, vector<8x128xf32>
    %56 = arith.sitofp %c1_i32 : i32 to f32
    %57 = vector.broadcast %56 : f32 to vector<8x128xf32>
    %58 = arith.cmpf ogt, %55, %57 : vector<8x128xf32>
    %59 = arith.extui %58 : vector<8x128xi1> to vector<8x128xi32>
    %60 = arith.sitofp %59 : vector<8x128xi32> to vector<8x128xf32>
    %61 = arith.truncf %46 : vector<8x128xf32> to vector<8x128xbf16>
    %c0_17 = arith.constant 0 : index
    %c0_18 = arith.constant 0 : index
    %c0_19 = arith.constant 0 : index
    %62 = vector.load %arg4[%c0_17, %c0_18, %c0_19] : memref<1x128x512xbf16, #tpu.memory_space<vmem>>, vector<1x128x512xbf16>
    %63 = vector.shape_cast %62 : vector<1x128x512xbf16> to vector<128x512xbf16>
    %cst_20 = arith.constant dense<0.000000e+00> : vector<8x512xf32>
    %64 = tpu.matmul %61, %63, %cst_20 {dimension_numbers = #tpu.dot_dimension_numbers<[1], [0], [0], [1], [0, 0, 1, 1], [], []>} : vector<8x128xbf16>, vector<128x512xbf16>, vector<8x512xf32> -> vector<8x512xf32>
    %65 = arith.addf %54, %64 : vector<8x512xf32>
    %66 = vector.extract_strided_slice %65 {offsets = [0, 0], sizes = [8, 384], strides = [1, 1]} : vector<8x512xf32> to vector<8x384xf32>
    %67 = arith.negf %66 : vector<8x384xf32>
    %68 = math.exp %67 : vector<8x384xf32>
    %cst_21 = arith.constant 1.000000e+00 : f32
    %69 = vector.broadcast %cst_21 : f32 to vector<8x384xf32>
    %70 = arith.addf %69, %68 : vector<8x384xf32>
    %71 = arith.divf %69, %70 : vector<8x384xf32>
    %72 = vector.extract_strided_slice %71 {offsets = [0, 0], sizes = [8, 128], strides = [1, 1]} : vector<8x384xf32> to vector<8x128xf32>
    %73 = vector.extract_strided_slice %71 {offsets = [0, 128], sizes = [8, 128], strides = [1, 1]} : vector<8x384xf32> to vector<8x128xf32>
    %74 = vector.extract_strided_slice %71 {offsets = [0, 256], sizes = [8, 128], strides = [1, 1]} : vector<8x384xf32> to vector<8x128xf32>
    %75 = vector.extract_strided_slice %65 {offsets = [0, 384], sizes = [8, 128], strides = [1, 1]} : vector<8x512xf32> to vector<8x128xf32>
    %76 = math.tanh %75 : vector<8x128xf32>
    %77 = arith.mulf %73, %49 : vector<8x128xf32>
    %78 = arith.mulf %72, %76 : vector<8x128xf32>
    %79 = arith.addf %77, %78 : vector<8x128xf32>
    %80 = math.tanh %79 : vector<8x128xf32>
    %81 = arith.mulf %74, %80 : vector<8x128xf32>
    %82 = arith.mulf %60, %81 : vector<8x128xf32>
    %83 = arith.truncf %82 : vector<8x128xf32> to vector<8x128xbf16>
    %84 = arith.index_cast %51 : i32 to index
    %c0_22 = arith.constant 0 : index
    %85 = vector.load %arg6[%84, %c0_22] : memref<64x128xbf16, #tpu.memory_space<vmem>>, vector<8x128xbf16>
    tpu.vector_store %arg6[%84, %c0_22], %83 {strides = array<i32>} : memref<64x128xbf16, #tpu.memory_space<vmem>>, vector<8x128xbf16>,
    %86 = arith.subf %81, %46 : vector<8x128xf32>
    %87 = arith.mulf %60, %86 : vector<8x128xf32>
    %88 = arith.addf %46, %87 : vector<8x128xf32>
    %89 = arith.subf %79, %49 : vector<8x128xf32>
    %90 = arith.mulf %60, %89 : vector<8x128xf32>
    %91 = arith.addf %49, %90 : vector<8x128xf32>
    %c2_i32 = arith.constant 2 : i32
    %c8_i32_23 = arith.constant 8 : i32
    %92 = arith.muli %c2_i32, %c8_i32_23 : i32
    %93 = tpu.assume_multiple %92, 8 : i32
    %94 = arith.index_cast %93 : i32 to index
    %c0_24 = arith.constant 0 : index
    %95 = vector.load %arg7[%94, %c0_24] : memref<64x512xbf16, #tpu.memory_space<vmem>>, vector<8x512xbf16>
    %96 = arith.extf %95 : vector<8x512xbf16> to vector<8x512xf32>
    %c0_25 = arith.constant 0 : index
    %c0_26 = arith.constant 0 : index
    %97 = vector.load %arg1[%c0_25, %c0_26] : memref<8x128xf32, #tpu.memory_space<vmem>>, vector<8x128xf32>
    %98 = arith.sitofp %c2_i32 : i32 to f32
    %99 = vector.broadcast %98 : f32 to vector<8x128xf32>
    %100 = arith.cmpf ogt, %97, %99 : vector<8x128xf32>
    %101 = arith.extui %100 : vector<8x128xi1> to vector<8x128xi32>
    %102 = arith.sitofp %101 : vector<8x128xi32> to vector<8x128xf32>
    %103 = arith.truncf %88 : vector<8x128xf32> to vector<8x128xbf16>
    %c0_27 = arith.constant 0 : index
    %c0_28 = arith.constant 0 : index
    %c0_29 = arith.constant 0 : index
    %104 = vector.load %arg4[%c0_27, %c0_28, %c0_29] : memref<1x128x512xbf16, #tpu.memory_space<vmem>>, vector<1x128x512xbf16>
    %105 = vector.shape_cast %104 : vector<1x128x512xbf16> to vector<128x512xbf16>
    %cst_30 = arith.constant dense<0.000000e+00> : vector<8x512xf32>
    %106 = tpu.matmul %103, %105, %cst_30 {dimension_numbers = #tpu.dot_dimension_numbers<[1], [0], [0], [1], [0, 0, 1, 1], [], []>} : vector<8x128xbf16>, vector<128x512xbf16>, vector<8x512xf32> -> vector<8x512xf32>
    %107 = arith.addf %96, %106 : vector<8x512xf32>
    %108 = vector.extract_strided_slice %107 {offsets = [0, 0], sizes = [8, 384], strides = [1, 1]} : vector<8x512xf32> to vector<8x384xf32>
    %109 = arith.negf %108 : vector<8x384xf32>
    %110 = math.exp %109 : vector<8x384xf32>
    %cst_31 = arith.constant 1.000000e+00 : f32
    %111 = vector.broadcast %cst_31 : f32 to vector<8x384xf32>
    %112 = arith.addf %111, %110 : vector<8x384xf32>
    %113 = arith.divf %111, %112 : vector<8x384xf32>
    %114 = vector.extract_strided_slice %113 {offsets = [0, 0], sizes = [8, 128], strides = [1, 1]} : vector<8x384xf32> to vector<8x128xf32>
    %115 = vector.extract_strided_slice %113 {offsets = [0, 128], sizes = [8, 128], strides = [1, 1]} : vector<8x384xf32> to vector<8x128xf32>
    %116 = vector.extract_strided_slice %113 {offsets = [0, 256], sizes = [8, 128], strides = [1, 1]} : vector<8x384xf32> to vector<8x128xf32>
    %117 = vector.extract_strided_slice %107 {offsets = [0, 384], sizes = [8, 128], strides = [1, 1]} : vector<8x512xf32> to vector<8x128xf32>
    %118 = math.tanh %117 : vector<8x128xf32>
    %119 = arith.mulf %115, %91 : vector<8x128xf32>
    %120 = arith.mulf %114, %118 : vector<8x128xf32>
    %121 = arith.addf %119, %120 : vector<8x128xf32>
    %122 = math.tanh %121 : vector<8x128xf32>
    %123 = arith.mulf %116, %122 : vector<8x128xf32>
    %124 = arith.mulf %102, %123 : vector<8x128xf32>
    %125 = arith.truncf %124 : vector<8x128xf32> to vector<8x128xbf16>
    %126 = arith.index_cast %93 : i32 to index
    %c0_32 = arith.constant 0 : index
    %127 = vector.load %arg6[%126, %c0_32] : memref<64x128xbf16, #tpu.memory_space<vmem>>, vector<8x128xbf16>
    tpu.vector_store %arg6[%126, %c0_32], %125 {strides = array<i32>} : memref<64x128xbf16, #tpu.memory_space<vmem>>, vector<8x128xbf16>,
    %128 = arith.subf %123, %88 : vector<8x128xf32>
    %129 = arith.mulf %102, %128 : vector<8x128xf32>
    %130 = arith.addf %88, %129 : vector<8x128xf32>
    %131 = arith.subf %121, %91 : vector<8x128xf32>
    %132 = arith.mulf %102, %131 : vector<8x128xf32>
    %133 = arith.addf %91, %132 : vector<8x128xf32>
    %c3_i32 = arith.constant 3 : i32
    %c8_i32_33 = arith.constant 8 : i32
    %134 = arith.muli %c3_i32, %c8_i32_33 : i32
    %135 = tpu.assume_multiple %134, 8 : i32
    %136 = arith.index_cast %135 : i32 to index
    %c0_34 = arith.constant 0 : index
    %137 = vector.load %arg7[%136, %c0_34] : memref<64x512xbf16, #tpu.memory_space<vmem>>, vector<8x512xbf16>
    %138 = arith.extf %137 : vector<8x512xbf16> to vector<8x512xf32>
    %c0_35 = arith.constant 0 : index
    %c0_36 = arith.constant 0 : index
    %139 = vector.load %arg1[%c0_35, %c0_36] : memref<8x128xf32, #tpu.memory_space<vmem>>, vector<8x128xf32>
    %140 = arith.sitofp %c3_i32 : i32 to f32
    %141 = vector.broadcast %140 : f32 to vector<8x128xf32>
    %142 = arith.cmpf ogt, %139, %141 : vector<8x128xf32>
    %143 = arith.extui %142 : vector<8x128xi1> to vector<8x128xi32>
    %144 = arith.sitofp %143 : vector<8x128xi32> to vector<8x128xf32>
    %145 = arith.truncf %130 : vector<8x128xf32> to vector<8x128xbf16>
    %c0_37 = arith.constant 0 : index
    %c0_38 = arith.constant 0 : index
    %c0_39 = arith.constant 0 : index
    %146 = vector.load %arg4[%c0_37, %c0_38, %c0_39] : memref<1x128x512xbf16, #tpu.memory_space<vmem>>, vector<1x128x512xbf16>
    %147 = vector.shape_cast %146 : vector<1x128x512xbf16> to vector<128x512xbf16>
    %cst_40 = arith.constant dense<0.000000e+00> : vector<8x512xf32>
    %148 = tpu.matmul %145, %147, %cst_40 {dimension_numbers = #tpu.dot_dimension_numbers<[1], [0], [0], [1], [0, 0, 1, 1], [], []>} : vector<8x128xbf16>, vector<128x512xbf16>, vector<8x512xf32> -> vector<8x512xf32>
    %149 = arith.addf %138, %148 : vector<8x512xf32>
    %150 = vector.extract_strided_slice %149 {offsets = [0, 0], sizes = [8, 384], strides = [1, 1]} : vector<8x512xf32> to vector<8x384xf32>
    %151 = arith.negf %150 : vector<8x384xf32>
    %152 = math.exp %151 : vector<8x384xf32>
    %cst_41 = arith.constant 1.000000e+00 : f32
    %153 = vector.broadcast %cst_41 : f32 to vector<8x384xf32>
    %154 = arith.addf %153, %152 : vector<8x384xf32>
    %155 = arith.divf %153, %154 : vector<8x384xf32>
    %156 = vector.extract_strided_slice %155 {offsets = [0, 0], sizes = [8, 128], strides = [1, 1]} : vector<8x384xf32> to vector<8x128xf32>
    %157 = vector.extract_strided_slice %155 {offsets = [0, 128], sizes = [8, 128], strides = [1, 1]} : vector<8x384xf32> to vector<8x128xf32>
    %158 = vector.extract_strided_slice %155 {offsets = [0, 256], sizes = [8, 128], strides = [1, 1]} : vector<8x384xf32> to vector<8x128xf32>
    %159 = vector.extract_strided_slice %149 {offsets = [0, 384], sizes = [8, 128], strides = [1, 1]} : vector<8x512xf32> to vector<8x128xf32>
    %160 = math.tanh %159 : vector<8x128xf32>
    %161 = arith.mulf %157, %133 : vector<8x128xf32>
    %162 = arith.mulf %156, %160 : vector<8x128xf32>
    %163 = arith.addf %161, %162 : vector<8x128xf32>
    %164 = math.tanh %163 : vector<8x128xf32>
    %165 = arith.mulf %158, %164 : vector<8x128xf32>
    %166 = arith.mulf %144, %165 : vector<8x128xf32>
    %167 = arith.truncf %166 : vector<8x128xf32> to vector<8x128xbf16>
    %168 = arith.index_cast %135 : i32 to index
    %c0_42 = arith.constant 0 : index
    %169 = vector.load %arg6[%168, %c0_42] : memref<64x128xbf16, #tpu.memory_space<vmem>>, vector<8x128xbf16>
    tpu.vector_store %arg6[%168, %c0_42], %167 {strides = array<i32>} : memref<64x128xbf16, #tpu.memory_space<vmem>>, vector<8x128xbf16>,
    %170 = arith.subf %165, %130 : vector<8x128xf32>
    %171 = arith.mulf %144, %170 : vector<8x128xf32>
    %172 = arith.addf %130, %171 : vector<8x128xf32>
    %173 = arith.subf %163, %133 : vector<8x128xf32>
    %174 = arith.mulf %144, %173 : vector<8x128xf32>
    %175 = arith.addf %133, %174 : vector<8x128xf32>
    %c4_i32 = arith.constant 4 : i32
    %c8_i32_43 = arith.constant 8 : i32
    %176 = arith.muli %c4_i32, %c8_i32_43 : i32
    %177 = tpu.assume_multiple %176, 8 : i32
    %178 = arith.index_cast %177 : i32 to index
    %c0_44 = arith.constant 0 : index
    %179 = vector.load %arg7[%178, %c0_44] : memref<64x512xbf16, #tpu.memory_space<vmem>>, vector<8x512xbf16>
    %180 = arith.extf %179 : vector<8x512xbf16> to vector<8x512xf32>
    %c0_45 = arith.constant 0 : index
    %c0_46 = arith.constant 0 : index
    %181 = vector.load %arg1[%c0_45, %c0_46] : memref<8x128xf32, #tpu.memory_space<vmem>>, vector<8x128xf32>
    %182 = arith.sitofp %c4_i32 : i32 to f32
    %183 = vector.broadcast %182 : f32 to vector<8x128xf32>
    %184 = arith.cmpf ogt, %181, %183 : vector<8x128xf32>
    %185 = arith.extui %184 : vector<8x128xi1> to vector<8x128xi32>
    %186 = arith.sitofp %185 : vector<8x128xi32> to vector<8x128xf32>
    %187 = arith.truncf %172 : vector<8x128xf32> to vector<8x128xbf16>
    %c0_47 = arith.constant 0 : index
    %c0_48 = arith.constant 0 : index
    %c0_49 = arith.constant 0 : index
    %188 = vector.load %arg4[%c0_47, %c0_48, %c0_49] : memref<1x128x512xbf16, #tpu.memory_space<vmem>>, vector<1x128x512xbf16>
    %189 = vector.shape_cast %188 : vector<1x128x512xbf16> to vector<128x512xbf16>
    %cst_50 = arith.constant dense<0.000000e+00> : vector<8x512xf32>
    %190 = tpu.matmul %187, %189, %cst_50 {dimension_numbers = #tpu.dot_dimension_numbers<[1], [0], [0], [1], [0, 0, 1, 1], [], []>} : vector<8x128xbf16>, vector<128x512xbf16>, vector<8x512xf32> -> vector<8x512xf32>
    %191 = arith.addf %180, %190 : vector<8x512xf32>
    %192 = vector.extract_strided_slice %191 {offsets = [0, 0], sizes = [8, 384], strides = [1, 1]} : vector<8x512xf32> to vector<8x384xf32>
    %193 = arith.negf %192 : vector<8x384xf32>
    %194 = math.exp %193 : vector<8x384xf32>
    %cst_51 = arith.constant 1.000000e+00 : f32
    %195 = vector.broadcast %cst_51 : f32 to vector<8x384xf32>
    %196 = arith.addf %195, %194 : vector<8x384xf32>
    %197 = arith.divf %195, %196 : vector<8x384xf32>
    %198 = vector.extract_strided_slice %197 {offsets = [0, 0], sizes = [8, 128], strides = [1, 1]} : vector<8x384xf32> to vector<8x128xf32>
    %199 = vector.extract_strided_slice %197 {offsets = [0, 128], sizes = [8, 128], strides = [1, 1]} : vector<8x384xf32> to vector<8x128xf32>
    %200 = vector.extract_strided_slice %197 {offsets = [0, 256], sizes = [8, 128], strides = [1, 1]} : vector<8x384xf32> to vector<8x128xf32>
    %201 = vector.extract_strided_slice %191 {offsets = [0, 384], sizes = [8, 128], strides = [1, 1]} : vector<8x512xf32> to vector<8x128xf32>
    %202 = math.tanh %201 : vector<8x128xf32>
    %203 = arith.mulf %199, %175 : vector<8x128xf32>
    %204 = arith.mulf %198, %202 : vector<8x128xf32>
    %205 = arith.addf %203, %204 : vector<8x128xf32>
    %206 = math.tanh %205 : vector<8x128xf32>
    %207 = arith.mulf %200, %206 : vector<8x128xf32>
    %208 = arith.mulf %186, %207 : vector<8x128xf32>
    %209 = arith.truncf %208 : vector<8x128xf32> to vector<8x128xbf16>
    %210 = arith.index_cast %177 : i32 to index
    %c0_52 = arith.constant 0 : index
    %211 = vector.load %arg6[%210, %c0_52] : memref<64x128xbf16, #tpu.memory_space<vmem>>, vector<8x128xbf16>
    tpu.vector_store %arg6[%210, %c0_52], %209 {strides = array<i32>} : memref<64x128xbf16, #tpu.memory_space<vmem>>, vector<8x128xbf16>,
    %212 = arith.subf %207, %172 : vector<8x128xf32>
    %213 = arith.mulf %186, %212 : vector<8x128xf32>
    %214 = arith.addf %172, %213 : vector<8x128xf32>
    %215 = arith.subf %205, %175 : vector<8x128xf32>
    %216 = arith.mulf %186, %215 : vector<8x128xf32>
    %217 = arith.addf %175, %216 : vector<8x128xf32>
    %c5_i32 = arith.constant 5 : i32
    %c8_i32_53 = arith.constant 8 : i32
    %218 = arith.muli %c5_i32, %c8_i32_53 : i32
    %219 = tpu.assume_multiple %218, 8 : i32
    %220 = arith.index_cast %219 : i32 to index
    %c0_54 = arith.constant 0 : index
    %221 = vector.load %arg7[%220, %c0_54] : memref<64x512xbf16, #tpu.memory_space<vmem>>, vector<8x512xbf16>
    %222 = arith.extf %221 : vector<8x512xbf16> to vector<8x512xf32>
    %c0_55 = arith.constant 0 : index
    %c0_56 = arith.constant 0 : index
    %223 = vector.load %arg1[%c0_55, %c0_56] : memref<8x128xf32, #tpu.memory_space<vmem>>, vector<8x128xf32>
    %224 = arith.sitofp %c5_i32 : i32 to f32
    %225 = vector.broadcast %224 : f32 to vector<8x128xf32>
    %226 = arith.cmpf ogt, %223, %225 : vector<8x128xf32>
    %227 = arith.extui %226 : vector<8x128xi1> to vector<8x128xi32>
    %228 = arith.sitofp %227 : vector<8x128xi32> to vector<8x128xf32>
    %229 = arith.truncf %214 : vector<8x128xf32> to vector<8x128xbf16>
    %c0_57 = arith.constant 0 : index
    %c0_58 = arith.constant 0 : index
    %c0_59 = arith.constant 0 : index
    %230 = vector.load %arg4[%c0_57, %c0_58, %c0_59] : memref<1x128x512xbf16, #tpu.memory_space<vmem>>, vector<1x128x512xbf16>
    %231 = vector.shape_cast %230 : vector<1x128x512xbf16> to vector<128x512xbf16>
    %cst_60 = arith.constant dense<0.000000e+00> : vector<8x512xf32>
    %232 = tpu.matmul %229, %231, %cst_60 {dimension_numbers = #tpu.dot_dimension_numbers<[1], [0], [0], [1], [0, 0, 1, 1], [], []>} : vector<8x128xbf16>, vector<128x512xbf16>, vector<8x512xf32> -> vector<8x512xf32>
    %233 = arith.addf %222, %232 : vector<8x512xf32>
    %234 = vector.extract_strided_slice %233 {offsets = [0, 0], sizes = [8, 384], strides = [1, 1]} : vector<8x512xf32> to vector<8x384xf32>
    %235 = arith.negf %234 : vector<8x384xf32>
    %236 = math.exp %235 : vector<8x384xf32>
    %cst_61 = arith.constant 1.000000e+00 : f32
    %237 = vector.broadcast %cst_61 : f32 to vector<8x384xf32>
    %238 = arith.addf %237, %236 : vector<8x384xf32>
    %239 = arith.divf %237, %238 : vector<8x384xf32>
    %240 = vector.extract_strided_slice %239 {offsets = [0, 0], sizes = [8, 128], strides = [1, 1]} : vector<8x384xf32> to vector<8x128xf32>
    %241 = vector.extract_strided_slice %239 {offsets = [0, 128], sizes = [8, 128], strides = [1, 1]} : vector<8x384xf32> to vector<8x128xf32>
    %242 = vector.extract_strided_slice %239 {offsets = [0, 256], sizes = [8, 128], strides = [1, 1]} : vector<8x384xf32> to vector<8x128xf32>
    %243 = vector.extract_strided_slice %233 {offsets = [0, 384], sizes = [8, 128], strides = [1, 1]} : vector<8x512xf32> to vector<8x128xf32>
    %244 = math.tanh %243 : vector<8x128xf32>
    %245 = arith.mulf %241, %217 : vector<8x128xf32>
    %246 = arith.mulf %240, %244 : vector<8x128xf32>
    %247 = arith.addf %245, %246 : vector<8x128xf32>
    %248 = math.tanh %247 : vector<8x128xf32>
    %249 = arith.mulf %242, %248 : vector<8x128xf32>
    %250 = arith.mulf %228, %249 : vector<8x128xf32>
    %251 = arith.truncf %250 : vector<8x128xf32> to vector<8x128xbf16>
    %252 = arith.index_cast %219 : i32 to index
    %c0_62 = arith.constant 0 : index
    %253 = vector.load %arg6[%252, %c0_62] : memref<64x128xbf16, #tpu.memory_space<vmem>>, vector<8x128xbf16>
    tpu.vector_store %arg6[%252, %c0_62], %251 {strides = array<i32>} : memref<64x128xbf16, #tpu.memory_space<vmem>>, vector<8x128xbf16>,
    %254 = arith.subf %249, %214 : vector<8x128xf32>
    %255 = arith.mulf %228, %254 : vector<8x128xf32>
    %256 = arith.addf %214, %255 : vector<8x128xf32>
    %257 = arith.subf %247, %217 : vector<8x128xf32>
    %258 = arith.mulf %228, %257 : vector<8x128xf32>
    %259 = arith.addf %217, %258 : vector<8x128xf32>
    %c6_i32 = arith.constant 6 : i32
    %c8_i32_63 = arith.constant 8 : i32
    %260 = arith.muli %c6_i32, %c8_i32_63 : i32
    %261 = tpu.assume_multiple %260, 8 : i32
    %262 = arith.index_cast %261 : i32 to index
    %c0_64 = arith.constant 0 : index
    %263 = vector.load %arg7[%262, %c0_64] : memref<64x512xbf16, #tpu.memory_space<vmem>>, vector<8x512xbf16>
    %264 = arith.extf %263 : vector<8x512xbf16> to vector<8x512xf32>
    %c0_65 = arith.constant 0 : index
    %c0_66 = arith.constant 0 : index
    %265 = vector.load %arg1[%c0_65, %c0_66] : memref<8x128xf32, #tpu.memory_space<vmem>>, vector<8x128xf32>
    %266 = arith.sitofp %c6_i32 : i32 to f32
    %267 = vector.broadcast %266 : f32 to vector<8x128xf32>
    %268 = arith.cmpf ogt, %265, %267 : vector<8x128xf32>
    %269 = arith.extui %268 : vector<8x128xi1> to vector<8x128xi32>
    %270 = arith.sitofp %269 : vector<8x128xi32> to vector<8x128xf32>
    %271 = arith.truncf %256 : vector<8x128xf32> to vector<8x128xbf16>
    %c0_67 = arith.constant 0 : index
    %c0_68 = arith.constant 0 : index
    %c0_69 = arith.constant 0 : index
    %272 = vector.load %arg4[%c0_67, %c0_68, %c0_69] : memref<1x128x512xbf16, #tpu.memory_space<vmem>>, vector<1x128x512xbf16>
    %273 = vector.shape_cast %272 : vector<1x128x512xbf16> to vector<128x512xbf16>
    %cst_70 = arith.constant dense<0.000000e+00> : vector<8x512xf32>
    %274 = tpu.matmul %271, %273, %cst_70 {dimension_numbers = #tpu.dot_dimension_numbers<[1], [0], [0], [1], [0, 0, 1, 1], [], []>} : vector<8x128xbf16>, vector<128x512xbf16>, vector<8x512xf32> -> vector<8x512xf32>
    %275 = arith.addf %264, %274 : vector<8x512xf32>
    %276 = vector.extract_strided_slice %275 {offsets = [0, 0], sizes = [8, 384], strides = [1, 1]} : vector<8x512xf32> to vector<8x384xf32>
    %277 = arith.negf %276 : vector<8x384xf32>
    %278 = math.exp %277 : vector<8x384xf32>
    %cst_71 = arith.constant 1.000000e+00 : f32
    %279 = vector.broadcast %cst_71 : f32 to vector<8x384xf32>
    %280 = arith.addf %279, %278 : vector<8x384xf32>
    %281 = arith.divf %279, %280 : vector<8x384xf32>
    %282 = vector.extract_strided_slice %281 {offsets = [0, 0], sizes = [8, 128], strides = [1, 1]} : vector<8x384xf32> to vector<8x128xf32>
    %283 = vector.extract_strided_slice %281 {offsets = [0, 128], sizes = [8, 128], strides = [1, 1]} : vector<8x384xf32> to vector<8x128xf32>
    %284 = vector.extract_strided_slice %281 {offsets = [0, 256], sizes = [8, 128], strides = [1, 1]} : vector<8x384xf32> to vector<8x128xf32>
    %285 = vector.extract_strided_slice %275 {offsets = [0, 384], sizes = [8, 128], strides = [1, 1]} : vector<8x512xf32> to vector<8x128xf32>
    %286 = math.tanh %285 : vector<8x128xf32>
    %287 = arith.mulf %283, %259 : vector<8x128xf32>
    %288 = arith.mulf %282, %286 : vector<8x128xf32>
    %289 = arith.addf %287, %288 : vector<8x128xf32>
    %290 = math.tanh %289 : vector<8x128xf32>
    %291 = arith.mulf %284, %290 : vector<8x128xf32>
    %292 = arith.mulf %270, %291 : vector<8x128xf32>
    %293 = arith.truncf %292 : vector<8x128xf32> to vector<8x128xbf16>
    %294 = arith.index_cast %261 : i32 to index
    %c0_72 = arith.constant 0 : index
    %295 = vector.load %arg6[%294, %c0_72] : memref<64x128xbf16, #tpu.memory_space<vmem>>, vector<8x128xbf16>
    tpu.vector_store %arg6[%294, %c0_72], %293 {strides = array<i32>} : memref<64x128xbf16, #tpu.memory_space<vmem>>, vector<8x128xbf16>,
    %296 = arith.subf %291, %256 : vector<8x128xf32>
    %297 = arith.mulf %270, %296 : vector<8x128xf32>
    %298 = arith.addf %256, %297 : vector<8x128xf32>
    %299 = arith.subf %289, %259 : vector<8x128xf32>
    %300 = arith.mulf %270, %299 : vector<8x128xf32>
    %301 = arith.addf %259, %300 : vector<8x128xf32>
    %c7_i32 = arith.constant 7 : i32
    %c8_i32_73 = arith.constant 8 : i32
    %302 = arith.muli %c7_i32, %c8_i32_73 : i32
    %303 = tpu.assume_multiple %302, 8 : i32
    %304 = arith.index_cast %303 : i32 to index
    %c0_74 = arith.constant 0 : index
    %305 = vector.load %arg7[%304, %c0_74] : memref<64x512xbf16, #tpu.memory_space<vmem>>, vector<8x512xbf16>
    %306 = arith.extf %305 : vector<8x512xbf16> to vector<8x512xf32>
    %c0_75 = arith.constant 0 : index
    %c0_76 = arith.constant 0 : index
    %307 = vector.load %arg1[%c0_75, %c0_76] : memref<8x128xf32, #tpu.memory_space<vmem>>, vector<8x128xf32>
    %308 = arith.sitofp %c7_i32 : i32 to f32
    %309 = vector.broadcast %308 : f32 to vector<8x128xf32>
    %310 = arith.cmpf ogt, %307, %309 : vector<8x128xf32>
    %311 = arith.extui %310 : vector<8x128xi1> to vector<8x128xi32>
    %312 = arith.sitofp %311 : vector<8x128xi32> to vector<8x128xf32>
    %313 = arith.truncf %298 : vector<8x128xf32> to vector<8x128xbf16>
    %c0_77 = arith.constant 0 : index
    %c0_78 = arith.constant 0 : index
    %c0_79 = arith.constant 0 : index
    %314 = vector.load %arg4[%c0_77, %c0_78, %c0_79] : memref<1x128x512xbf16, #tpu.memory_space<vmem>>, vector<1x128x512xbf16>
    %315 = vector.shape_cast %314 : vector<1x128x512xbf16> to vector<128x512xbf16>
    %cst_80 = arith.constant dense<0.000000e+00> : vector<8x512xf32>
    %316 = tpu.matmul %313, %315, %cst_80 {dimension_numbers = #tpu.dot_dimension_numbers<[1], [0], [0], [1], [0, 0, 1, 1], [], []>} : vector<8x128xbf16>, vector<128x512xbf16>, vector<8x512xf32> -> vector<8x512xf32>
    %317 = arith.addf %306, %316 : vector<8x512xf32>
    %318 = vector.extract_strided_slice %317 {offsets = [0, 0], sizes = [8, 384], strides = [1, 1]} : vector<8x512xf32> to vector<8x384xf32>
    %319 = arith.negf %318 : vector<8x384xf32>
    %320 = math.exp %319 : vector<8x384xf32>
    %cst_81 = arith.constant 1.000000e+00 : f32
    %321 = vector.broadcast %cst_81 : f32 to vector<8x384xf32>
    %322 = arith.addf %321, %320 : vector<8x384xf32>
    %323 = arith.divf %321, %322 : vector<8x384xf32>
    %324 = vector.extract_strided_slice %323 {offsets = [0, 0], sizes = [8, 128], strides = [1, 1]} : vector<8x384xf32> to vector<8x128xf32>
    %325 = vector.extract_strided_slice %323 {offsets = [0, 128], sizes = [8, 128], strides = [1, 1]} : vector<8x384xf32> to vector<8x128xf32>
    %326 = vector.extract_strided_slice %323 {offsets = [0, 256], sizes = [8, 128], strides = [1, 1]} : vector<8x384xf32> to vector<8x128xf32>
    %327 = vector.extract_strided_slice %317 {offsets = [0, 384], sizes = [8, 128], strides = [1, 1]} : vector<8x512xf32> to vector<8x128xf32>
    %328 = math.tanh %327 : vector<8x128xf32>
    %329 = arith.mulf %325, %301 : vector<8x128xf32>
    %330 = arith.mulf %324, %328 : vector<8x128xf32>
    %331 = arith.addf %329, %330 : vector<8x128xf32>
    %332 = math.tanh %331 : vector<8x128xf32>
    %333 = arith.mulf %326, %332 : vector<8x128xf32>
    %334 = arith.mulf %312, %333 : vector<8x128xf32>
    %335 = arith.truncf %334 : vector<8x128xf32> to vector<8x128xbf16>
    %336 = arith.index_cast %303 : i32 to index
    %c0_82 = arith.constant 0 : index
    %337 = vector.load %arg6[%336, %c0_82] : memref<64x128xbf16, #tpu.memory_space<vmem>>, vector<8x128xbf16>
    tpu.vector_store %arg6[%336, %c0_82], %335 {strides = array<i32>} : memref<64x128xbf16, #tpu.memory_space<vmem>>, vector<8x128xbf16>,
    %338 = arith.subf %333, %298 : vector<8x128xf32>
    %339 = arith.mulf %312, %338 : vector<8x128xf32>
    %340 = arith.addf %298, %339 : vector<8x128xf32>
    %341 = arith.subf %331, %301 : vector<8x128xf32>
    %342 = arith.mulf %312, %341 : vector<8x128xf32>
    %343 = arith.addf %301, %342 : vector<8x128xf32>
    %c8_i32_83 = arith.constant 8 : i32
    return
  }
  func.func @transform_0(%arg0: i32) -> (i32, i32) {
    %c0_i32 = arith.constant 0 : i32
    %c0_i32_0 = arith.constant 0 : i32
    %c0_i32_1 = arith.constant 0 : i32
    return %c0_i32, %c0_i32_0 : i32, i32
  }
  func.func @transform_1(%arg0: i32) -> (i32, i32) {
    %c0_i32 = arith.constant 0 : i32
    %c0_i32_0 = arith.constant 0 : i32
    %c0_i32_1 = arith.constant 0 : i32
    return %c0_i32, %c0_i32_0 : i32, i32
  }
  func.func @transform_2(%arg0: i32) -> (i32, i32, i32) {
    %c0_i32 = arith.constant 0 : i32
    %c0_i32_0 = arith.constant 0 : i32
    %c0_i32_1 = arith.constant 0 : i32
    return %arg0, %c0_i32, %c0_i32_0 : i32, i32, i32
  }
  func.func @transform_3(%arg0: i32) -> (i32, i32, i32) {
    %c0_i32 = arith.constant 0 : i32
    %c0_i32_0 = arith.constant 0 : i32
    %c0_i32_1 = arith.constant 0 : i32
    return %arg0, %c0_i32, %c0_i32_0 : i32, i32, i32
  }
  func.func @transform_4(%arg0: i32) -> (i32, i32, i32) {
    %c0_i32 = arith.constant 0 : i32
    %c0_i32_0 = arith.constant 0 : i32
    %c0_i32_1 = arith.constant 0 : i32
    return %arg0, %c0_i32, %c0_i32_0 : i32, i32, i32
  }
  func.func @transform_5(%arg0: i32) -> (i32, i32) {
    %c0_i32 = arith.constant 0 : i32
    %c0_i32_0 = arith.constant 0 : i32
    %c0_i32_1 = arith.constant 0 : i32
    return %c0_i32, %c0_i32_0 : i32, i32
  }
}

</mosaic_0001>

<llo_original>
// kernel: tpu_custom_call.1
$region0: #{tpu_custom_call.1}
  #allocation0 [shape = 'u32[]', space=smem, size = 0x4, offset = 0x4, fixed_abs, tag = 'smem constant byte address 0x4 - core index']
  #allocation1 [shape = 'u32[72,128]{1,0:T(1,128)}', space=vmem, size = 0x9000, scoped, tag = 'internal scratch']
  #allocation2 [shape = 'bf16[64,512]{1,0:T(8,128)(2,1)}', space=vmem, size = 0x10000, scoped, tag = 'scratch operand']
  %s0 = inlined_call_operand.hbm [shape: f32[8,128], index: 0, kind: input, shape index: {}]
  %s1 = inlined_call_operand.hbm [shape: bf16[64,128], index: 1, kind: input, shape index: {}]
  %s2 = inlined_call_operand.hbm [shape: bf16[3,128,512], index: 2, kind: input, shape index: {}]
  %s3 = inlined_call_operand.hbm [shape: bf16[3,128,512], index: 3, kind: input, shape index: {}]
  %s4 = inlined_call_operand.hbm [shape: f32[3,1,512], index: 4, kind: input, shape index: {}]
  %s5 = inlined_call_operand.hbm [shape: bf16[64,128], index: 5, kind: output, shape index: {}]
  %s6 = sld [smem:[#allocation0]]
  $region81: #{tpu_custom_call.1} parent=0
    _
  %s8 = ssub.s32 1, %s6
  %s9 = scalar_select 0, %s8, %s6
  $region1: #{tpu_custom_call.1} parent=0
    #allocation3 [shape = 'u8[4096]{0}', space=vmem, size = 0x1000, scoped, tag = 'input window, operand 0, single buffered']
    #allocation4 [shape = 's32[2]{0}', space=sflag, size = 0x8, scoped, tag = 'scoped memory for tpu_custom_call.1']
    #allocation5 [shape = 's32[2]{0}', space=sflag, size = 0x8, scoped, tag = 'scoped memory for tpu_custom_call.1']
    #allocation6 [shape = 'u8[16384]{0}', space=vmem, size = 0x4000, scoped, tag = 'input window, operand 1, single buffered']
    #allocation7 [shape = 's32[1]{0}', space=sflag, size = 0x4, scoped, tag = 'scoped memory for tpu_custom_call.1']
    #allocation8 [shape = 'u8[262144]{0}', space=vmem, size = 0x40000, scoped, tag = 'input window, operand 2']
    #allocation9 [shape = 'u8[262144]{0}', space=vmem, size = 0x40000, scoped, tag = 'input window, operand 3']
    #allocation10 [shape = 'u8[4096]{0}', space=vmem, size = 0x1000, scoped, tag = 'input window, operand 4']
    #allocation11 [shape = 'u8[16384]{0}', space=vmem, size = 0x4000, scoped, tag = 'output window, operand 0, single buffered']
    %10 = vsyncpa [#allocation4], 0
    %11 = vsyncpa [#allocation7], 0
    %12 = vsyncpa [#allocation5], 0
    loop: start=0, step=1, limit=5
    $region2: #{tpu_custom_call.1} parent=1 // loop_pre_header
      _
    $region3: #{tpu_custom_call.1} parent=1 // loop_header
      %s14 = sphi 0, %s18
      %p15 = scmp.ge.s32.totalorder %s14, 5
      %s22 = sphi 0, %s22
      %s24 = sphi 0, %s22
      %s25 = sphi 0, %s24
      %s39 = sphi 0, %s25
      %s43 = sphi 0, %s43
      %s45 = sphi 0, %s43
      %s46 = sphi 0, %s45
      %s60 = sphi 0, %s46
      %s66 = sphi 0, %s68
      %s69 = sphi 0, %s66
      %s70 = sphi 0, %s69
      %s86 = sphi 0, %s70
      %s92 = sphi 0, %s94
      %s95 = sphi 0, %s92
      %s96 = sphi 0, %s95
      %s112 = sphi 0, %s96
      %s118 = sphi 0, %s120
      %s121 = sphi 0, %s118
      %s122 = sphi 0, %s121
      %s138 = sphi 0, %s122
      %s142 = sphi 0, %s142
      %s144 = sphi 0, %s142
      %s145 = sphi 0, %s144
      %s159 = sphi 0, %s145
    $region4: #{tpu_custom_call.1} parent=1 // loop_header_branch
      %17 = sbr.rel (%p15) target = $region8
    $region5: #{tpu_custom_call.1} parent=1 // loop_body
      %s19 = ssub.s32 %s14, 1
      %s20 = ssub.s32 %s14, 2
      %s21 = sadd.s32 %s14, 1
      %s23 = sadd.s32 %s22, 1
      %p26 = scmp.eq.s32.totalorder %s14, 2
      %p27 = scmp.ne.s32.totalorder %s22, %s24
      %p28 = scmp.eq.s32.totalorder %s14, 0
      %p29 = por %p27, %p28
      %p30 = scmp.ne.s32.totalorder %s22, %s24
      %p31 = scmp.eq.s32.totalorder %s19, 2
      %p32 = por %p30, %p31
      %p33 = scmp.ne.s32.totalorder %s24, %s25
      %p34 = scmp.eq.s32.totalorder %s19, 0
      %p35 = por %p33, %p34
      %p36 = scmp.ne.s32.totalorder %s24, %s25
      %p37 = scmp.eq.s32.totalorder %s20, 2
      %p38 = por %p36, %p37
      %p40 = scmp.ne.s32.totalorder %s25, %s39
      %p41 = scmp.eq.s32.totalorder %s20, 0
      %p42 = por %p40, %p41
      %s44 = sadd.s32 %s43, 1
      %p47 = scmp.eq.s32.totalorder %s14, 2
      %p48 = scmp.ne.s32.totalorder %s43, %s45
      %p49 = scmp.eq.s32.totalorder %s14, 0
      %p50 = por %p48, %p49
      %p51 = scmp.ne.s32.totalorder %s43, %s45
      %p52 = scmp.eq.s32.totalorder %s19, 2
      %p53 = por %p51, %p52
      %p54 = scmp.ne.s32.totalorder %s45, %s46
      %p55 = scmp.eq.s32.totalorder %s19, 0
      %p56 = por %p54, %p55
      %p57 = scmp.ne.s32.totalorder %s45, %s46
      %p58 = scmp.eq.s32.totalorder %s20, 2
      %p59 = por %p57, %p58
      %p61 = scmp.ne.s32.totalorder %s46, %s60
      %p62 = scmp.eq.s32.totalorder %s20, 0
      %p63 = por %p61, %p62
      %s64 = ssub.s32 %s14, %s21
      %p65 = scmp.eq.s32.totalorder %s64, 0
      %s67 = sadd.s32 %s66, 1
      %s68 = scalar_select %p65, %s66, %s67
      %p71 = pneg %p65
      %p72 = scmp.eq.s32.totalorder %s14, 2
      %p73 = por %p71, %p72
      %p74 = scmp.ne.s32.totalorder %s66, %s69
      %p75 = scmp.eq.s32.totalorder %s14, 0
      %p76 = por %p74, %p75
      %p77 = scmp.ne.s32.totalorder %s66, %s69
      %p78 = scmp.eq.s32.totalorder %s19, 2
      %p79 = por %p77, %p78
      %p80 = scmp.ne.s32.totalorder %s69, %s70
      %p81 = scmp.eq.s32.totalorder %s19, 0
      %p82 = por %p80, %p81
      %p83 = scmp.ne.s32.totalorder %s69, %s70
      %p84 = scmp.eq.s32.totalorder %s20, 2
      %p85 = por %p83, %p84
      %p87 = scmp.ne.s32.totalorder %s70, %s86
      %p88 = scmp.eq.s32.totalorder %s20, 0
      %p89 = por %p87, %p88
      %s90 = ssub.s32 %s14, %s21
      %p91 = scmp.eq.s32.totalorder %s90, 0
      %s93 = sadd.s32 %s92, 1
      %s94 = scalar_select %p91, %s92, %s93
      %p97 = pneg %p91
      %p98 = scmp.eq.s32.totalorder %s14, 2
      %p99 = por %p97, %p98
      %p100 = scmp.ne.s32.totalorder %s92, %s95
      %p101 = scmp.eq.s32.totalorder %s14, 0
      %p102 = por %p100, %p101
      %p103 = scmp.ne.s32.totalorder %s92, %s95
      %p104 = scmp.eq.s32.totalorder %s19, 2
      %p105 = por %p103, %p104
      %p106 = scmp.ne.s32.totalorder %s95, %s96
      %p107 = scmp.eq.s32.totalorder %s19, 0
      %p108 = por %p106, %p107
      %p109 = scmp.ne.s32.totalorder %s95, %s96
      %p110 = scmp.eq.s32.totalorder %s20, 2
      %p111 = por %p109, %p110
      %p113 = scmp.ne.s32.totalorder %s96, %s112
      %p114 = scmp.eq.s32.totalorder %s20, 0
      %p115 = por %p113, %p114
      %s116 = ssub.s32 %s14, %s21
      %p117 = scmp.eq.s32.totalorder %s116, 0
      %s119 = sadd.s32 %s118, 1
      %s120 = scalar_select %p117, %s118, %s119
      %p123 = pneg %p117
      %p124 = scmp.eq.s32.totalorder %s14, 2
      %p125 = por %p123, %p124
      %p126 = scmp.ne.s32.totalorder %s118, %s121
      %p127 = scmp.eq.s32.totalorder %s14, 0
      %p128 = por %p126, %p127
      %p129 = scmp.ne.s32.totalorder %s118, %s121
      %p130 = scmp.eq.s32.totalorder %s19, 2
      %p131 = por %p129, %p130
      %p132 = scmp.ne.s32.totalorder %s121, %s122
      %p133 = scmp.eq.s32.totalorder %s19, 0
      %p134 = por %p132, %p133
      %p135 = scmp.ne.s32.totalorder %s121, %s122
      %p136 = scmp.eq.s32.totalorder %s20, 2
      %p137 = por %p135, %p136
      %p139 = scmp.ne.s32.totalorder %s122, %s138
      %p140 = scmp.eq.s32.totalorder %s20, 0
      %p141 = por %p139, %p140
      %s143 = sadd.s32 %s142, 1
      %p146 = scmp.eq.s32.totalorder %s14, 2
      %p147 = scmp.ne.s32.totalorder %s142, %s144
      %p148 = scmp.eq.s32.totalorder %s14, 0
      %p149 = por %p147, %p148
      %p150 = scmp.ne.s32.totalorder %s142, %s144
      %p151 = scmp.eq.s32.totalorder %s19, 2
      %p152 = por %p150, %p151
      %p153 = scmp.ne.s32.totalorder %s144, %s145
      %p154 = scmp.eq.s32.totalorder %s19, 0
      %p155 = por %p153, %p154
      %p156 = scmp.ne.s32.totalorder %s144, %s145
      %p157 = scmp.eq.s32.totalorder %s20, 2
      %p158 = por %p156, %p157
      %p160 = scmp.ne.s32.totalorder %s145, %s159
      %p161 = scmp.eq.s32.totalorder %s20, 0
      %p162 = por %p160, %p161
      %p163 = scmp.le.s32.totalorder 1, %s14
      %p164 = scmp.lt.s32.totalorder %s14, 4
      %p165 = pnand %p163, %p164
      %p166 = pneg %p165
      // Predicated region
      $region9: #{tpu_custom_call.1} parent=5 // pred_check
        _
      $region10: #{tpu_custom_call.1} parent=5 // pred_check_branch
        %168 = sbr.rel (%p165) target = $region12
      $region11: #{tpu_custom_call.1} parent=5 // pred_region
        %s169 = ssub.s32 %s14, 1
        // Predicated region
        $region13: #{tpu_custom_call.1} parent=11 // pred_check
          %p170 = pneg %p35
        $region14: #{tpu_custom_call.1} parent=11 // pred_check_branch
          %172 = sbr.rel (%p170) target = $region16
        $region15: #{tpu_custom_call.1} parent=11 // pred_region
          %174 = vsyncadd [#allocation4], 0
          %s176 = sshll.u32 %s0, 4
          %s177 = int_to_ptr.hbm [resolvable:$true] %s176
          %s178 = sshll.u32 [#allocation3], 4
          %s179 = int_to_ptr.vmem [resolvable:$true] %s178
          %181 = dma.hbm_to_vmem [thread:$0]  %s177, 128, %s179, [#allocation4]
        $region16: #{tpu_custom_call.1} parent=11 // pred_fallthru
          _
        // Predicated region
        $region17: #{tpu_custom_call.1} parent=11 // pred_check
          %p182 = pneg %p56
        $region18: #{tpu_custom_call.1} parent=11 // pred_check_branch
          %184 = sbr.rel (%p182) target = $region20
        $region19: #{tpu_custom_call.1} parent=11 // pred_region
          %186 = vsyncadd [#allocation7], 0
          %s187 = sshll.u32 %s1, 4
          %s188 = int_to_ptr.hbm [resolvable:$true] %s187
          %s189 = sshll.u32 [#allocation6], 4
          %s190 = int_to_ptr.vmem [resolvable:$true] %s189
          %195 = dma.hbm_to_vmem [thread:$0]  %s188, 512, %s190, [#allocation7], 64, 64, 4
        $region20: #{tpu_custom_call.1} parent=11 // pred_fallthru
          _
      $region12: #{tpu_custom_call.1} parent=5 // pred_fallthru
        _
      %p196 = scmp.lt.s32.totalorder %s14, 3
      // Predicated region
      $region21: #{tpu_custom_call.1} parent=5 // pred_check
        %p197 = pneg %p196
      $region22: #{tpu_custom_call.1} parent=5 // pred_check_branch
        %199 = sbr.rel (%p197) target = $region24
      $region23: #{tpu_custom_call.1} parent=5 // pred_region
        // Predicated region
        $region25: #{tpu_custom_call.1} parent=23 // pred_check
          %p200 = pneg %p76
        $region26: #{tpu_custom_call.1} parent=23 // pred_check_branch
          %202 = sbr.rel (%p200) target = $region28
        $region27: #{tpu_custom_call.1} parent=23 // pred_region
          %s203 = sand.u32 %s14, 1
          %s204 = scalar_lea.sflag [#allocation4], %s203
          %s205 = sand.u32 %s66, 1
          %s206 = smul.addr %s205, 256
          %s207 = scalar_lea.vmem [#allocation8], %s206
          %209 = vsyncadd %s204, 0
          %s210 = smul.addr %s14, 64
          %s211 = smul.addr %s210, 4
          %s212 = scalar_lea.hbm %s2, %s211
          %s213 = sshll.u32 %s212, 4
          %s214 = int_to_ptr.hbm [resolvable:$true] %s213
          %s215 = sshll.u32 %s207, 4
          %s216 = int_to_ptr.vmem [resolvable:$true] %s215
          %221 = dma.hbm_to_vmem [thread:$0]  %s214, 4096, %s216, %s204, 256, 256, 16
        $region28: #{tpu_custom_call.1} parent=23 // pred_fallthru
          _
        // Predicated region
        $region29: #{tpu_custom_call.1} parent=23 // pred_check
          %p222 = pneg %p102
        $region30: #{tpu_custom_call.1} parent=23 // pred_check_branch
          %224 = sbr.rel (%p222) target = $region32
        $region31: #{tpu_custom_call.1} parent=23 // pred_region
          %s225 = sand.u32 %s14, 1
          %s226 = scalar_lea.sflag [#allocation4], %s225
          %s227 = sand.u32 %s92, 1
          %s228 = smul.addr %s227, 256
          %s229 = scalar_lea.vmem [#allocation9], %s228
          %231 = vsyncadd %s226, 0
          %s232 = smul.addr %s14, 64
          %s233 = smul.addr %s232, 4
          %s234 = scalar_lea.hbm %s3, %s233
          %s235 = sshll.u32 %s234, 4
          %s236 = int_to_ptr.hbm [resolvable:$true] %s235
          %s237 = sshll.u32 %s229, 4
          %s238 = int_to_ptr.vmem [resolvable:$true] %s237
          %243 = dma.hbm_to_vmem [thread:$0]  %s236, 4096, %s238, %s226, 256, 256, 16
        $region32: #{tpu_custom_call.1} parent=23 // pred_fallthru
          _
        // Predicated region
        $region33: #{tpu_custom_call.1} parent=23 // pred_check
          %p244 = pneg %p128
        $region34: #{tpu_custom_call.1} parent=23 // pred_check_branch
          %246 = sbr.rel (%p244) target = $region36
        $region35: #{tpu_custom_call.1} parent=23 // pred_region
          %s247 = sand.u32 %s14, 1
          %s248 = scalar_lea.sflag [#allocation4], %s247
          %s249 = sand.u32 %s118, 1
          %s250 = smul.addr %s249, 4
          %s251 = scalar_lea.vmem [#allocation10], %s250
          %253 = vsyncadd %s248, 0
          %s254 = smul.addr %s14, 4
          %s255 = scalar_lea.hbm %s4, %s254
          %s257 = sshll.u32 %s255, 4
          %s258 = int_to_ptr.hbm [resolvable:$true] %s257
          %s259 = sshll.u32 %s251, 4
          %s260 = int_to_ptr.vmem [resolvable:$true] %s259
          %262 = dma.hbm_to_vmem [thread:$0]  %s258, 64, %s260, %s248
        $region36: #{tpu_custom_call.1} parent=23 // pred_fallthru
          _
      $region24: #{tpu_custom_call.1} parent=5 // pred_fallthru
        _
      %p263 = scmp.le.s32.totalorder 1, %s14
      %p264 = scmp.lt.s32.totalorder %s14, 4
      %p265 = pnand %p263, %p264
      %p266 = pneg %p265
      // Predicated region
      $region37: #{tpu_custom_call.1} parent=5 // pred_check
        _
      $region38: #{tpu_custom_call.1} parent=5 // pred_check_branch
        %268 = sbr.rel (%p265) target = $region40
      $region39: #{tpu_custom_call.1} parent=5 // pred_region
        %s269 = ssub.s32 %s14, 1
        // Predicated region
        $region41: #{tpu_custom_call.1} parent=39 // pred_check
          %p270 = pneg %p35
        $region42: #{tpu_custom_call.1} parent=39 // pred_check_branch
          %272 = sbr.rel (%p270) target = $region44
        $region43: #{tpu_custom_call.1} parent=39 // pred_region
          %274 = dma.done [#allocation4], 128
        $region44: #{tpu_custom_call.1} parent=39 // pred_fallthru
          _
        // Predicated region
        $region45: #{tpu_custom_call.1} parent=39 // pred_check
          %p275 = pneg %p56
        $region46: #{tpu_custom_call.1} parent=39 // pred_check_branch
          %277 = sbr.rel (%p275) target = $region48
        $region47: #{tpu_custom_call.1} parent=39 // pred_region
          %279 = dma.done [#allocation7], 512
        $region48: #{tpu_custom_call.1} parent=39 // pred_fallthru
          _
        %s280 = sand.u32 %s19, 1
        %s281 = scalar_lea.sflag [#allocation4], %s280
        %s282 = sand.u32 %s69, 1
        %s283 = smul.addr %s282, 256
        %s284 = scalar_lea.vmem [#allocation8], %s283
        // Predicated region
        $region49: #{tpu_custom_call.1} parent=39 // pred_check
          %p285 = pneg %p82
        $region50: #{tpu_custom_call.1} parent=39 // pred_check_branch
          %287 = sbr.rel (%p285) target = $region52
        $region51: #{tpu_custom_call.1} parent=39 // pred_region
          %289 = dma.done %s281, 4096
        $region52: #{tpu_custom_call.1} parent=39 // pred_fallthru
          _
        %s290 = sand.u32 %s19, 1
        %s291 = scalar_lea.sflag [#allocation4], %s290
        %s292 = sand.u32 %s95, 1
        %s293 = smul.addr %s292, 256
        %s294 = scalar_lea.vmem [#allocation9], %s293
        // Predicated region
        $region53: #{tpu_custom_call.1} parent=39 // pred_check
          %p295 = pneg %p108
        $region54: #{tpu_custom_call.1} parent=39 // pred_check_branch
          %297 = sbr.rel (%p295) target = $region56
        $region55: #{tpu_custom_call.1} parent=39 // pred_region
          %299 = dma.done %s291, 4096
        $region56: #{tpu_custom_call.1} parent=39 // pred_fallthru
          _
        %s300 = sand.u32 %s19, 1
        %s301 = scalar_lea.sflag [#allocation4], %s300
        %s302 = sand.u32 %s121, 1
        %s303 = smul.addr %s302, 4
        %s304 = scalar_lea.vmem [#allocation10], %s303
        // Predicated region
        $region57: #{tpu_custom_call.1} parent=39 // pred_check
          %p305 = pneg %p134
        $region58: #{tpu_custom_call.1} parent=39 // pred_check_branch
          %307 = sbr.rel (%p305) target = $region60
        $region59: #{tpu_custom_call.1} parent=39 // pred_region
          %309 = dma.done %s301, 64
        $region60: #{tpu_custom_call.1} parent=39 // pred_fallthru
          _
        %p310 = pneg %p35
        %p311 = pneg %p32
        %p312 = pneg %p56
        %p313 = pneg %p53
        %s314 = sand.u32 %s19, 1
        %s315 = scalar_lea.sflag [#allocation4], %s314
        %s316 = sand.u32 %s69, 1
        %s317 = smul.addr %s316, 256
        %s318 = scalar_lea.vmem [#allocation8], %s317
        %p319 = pneg %p82
        %p320 = pneg %p79
        %s321 = sand.u32 %s19, 1
        %s322 = scalar_lea.sflag [#allocation4], %s321
        %s323 = sand.u32 %s95, 1
        %s324 = smul.addr %s323, 256
        %s325 = scalar_lea.vmem [#allocation9], %s324
        %p326 = pneg %p108
        %p327 = pneg %p105
        %s328 = sand.u32 %s19, 1
        %s329 = scalar_lea.sflag [#allocation4], %s328
        %s330 = sand.u32 %s121, 1
        %s331 = smul.addr %s330, 4
        %s332 = scalar_lea.vmem [#allocation10], %s331
        %p333 = pneg %p134
        %p334 = pneg %p131
        %p335 = pneg %p155
        %p336 = pneg %p152
        %p338 = scmp.eq.s32.totalorder %s19, 0
        // Predicated region
        $region61: #{tpu_custom_call.1} parent=39 // pred_check
          %p339 = pneg %p338
        $region62: #{tpu_custom_call.1} parent=39 // pred_check_branch
          %341 = sbr.rel (%p339) target = $region64
        $region63: #{tpu_custom_call.1} parent=39 // pred_region
          %v342 = vld [vmem:[#allocation6] sm:$0xf]
          %v343 = vld [vmem:[#allocation6 + $0x4] sm:$0xf]
          %v344 = vld [vmem:[#allocation6 + $0x8] sm:$0xf]
          %v345 = vld [vmem:[#allocation6 + $0xc] sm:$0xf]
          %v346 = vld [vmem:[#allocation6 + $0x10] sm:$0xf]
          %v347 = vld [vmem:[#allocation6 + $0x14] sm:$0xf]
          %v348 = vld [vmem:[#allocation6 + $0x18] sm:$0xf]
          %v349 = vld [vmem:[#allocation6 + $0x1c] sm:$0xf]
          %v350 = vld [vmem:[%s284] sm:$0xff]
          %v351 = vld [vmem:[%s284 + $0x8] sm:$0xff]
          %v352 = vld [vmem:[%s284 + $0x10] sm:$0xff]
          %v353 = vld [vmem:[%s284 + $0x18] sm:$0xff]
          %v354 = vld [vmem:[%s284 + $0x20] sm:$0xff]
          %v355 = vld [vmem:[%s284 + $0x28] sm:$0xff]
          %v356 = vld [vmem:[%s284 + $0x30] sm:$0xff]
          %v357 = vld [vmem:[%s284 + $0x38] sm:$0xff]
          %v358 = vld [vmem:[%s284 + $0x40] sm:$0xff]
          %v359 = vld [vmem:[%s284 + $0x48] sm:$0xff]
          %v360 = vld [vmem:[%s284 + $0x50] sm:$0xff]
          %v361 = vld [vmem:[%s284 + $0x58] sm:$0xff]
          %v362 = vld [vmem:[%s284 + $0x60] sm:$0xff]
          %v363 = vld [vmem:[%s284 + $0x68] sm:$0xff]
          %v364 = vld [vmem:[%s284 + $0x70] sm:$0xff]
          %v365 = vld [vmem:[%s284 + $0x78] sm:$0xff]
          %v366 = vld [vmem:[%s284 + $0x80] sm:$0xff]
          %v367 = vld [vmem:[%s284 + $0x88] sm:$0xff]
          %v368 = vld [vmem:[%s284 + $0x90] sm:$0xff]
          %v369 = vld [vmem:[%s284 + $0x98] sm:$0xff]
          %v370 = vld [vmem:[%s284 + $0xa0] sm:$0xff]
          %v371 = vld [vmem:[%s284 + $0xa8] sm:$0xff]
          %v372 = vld [vmem:[%s284 + $0xb0] sm:$0xff]
          %v373 = vld [vmem:[%s284 + $0xb8] sm:$0xff]
          %v374 = vld [vmem:[%s284 + $0xc0] sm:$0xff]
          %v375 = vld [vmem:[%s284 + $0xc8] sm:$0xff]
          %v376 = vld [vmem:[%s284 + $0xd0] sm:$0xff]
          %v377 = vld [vmem:[%s284 + $0xd8] sm:$0xff]
          %v378 = vld [vmem:[%s284 + $0xe0] sm:$0xff]
          %v379 = vld [vmem:[%s284 + $0xe8] sm:$0xff]
          %v380 = vld [vmem:[%s284 + $0xf0] sm:$0xff]
          %v381 = vld [vmem:[%s284 + $0xf8] sm:$0xff]
          %v382 = vld [vmem:[%s304] sm:$0xf]
          %v384 = vperm.slane %v382, 0
          %v385 = vperm.slane %v382, 1
          %v386 = vperm.slane %v382, 2
          %v387 = vperm.slane %v382, 3
          %v400 = vunpack.c.l.b16 %v342
          %v401 = vunpack.c.l.b16 %v343
          %v402 = vunpack.c.l.b16 %v344
          %v403 = vunpack.c.l.b16 %v345
          %v404 = vunpack.c.l.b16 %v346
          %v405 = vunpack.c.l.b16 %v347
          %v406 = vunpack.c.l.b16 %v348
          %v407 = vunpack.c.l.b16 %v349
          %v408 = vpack.c.b16 %v401, %v400
          %v409 = vpack.c.b16 %v403, %v402
          %v410 = vpack.c.b16 %v405, %v404
          %v411 = vpack.c.b16 %v407, %v406
          %v448 = vunpack.c.l.b16 %v350
          %v449 = vunpack.c.h.b16 %v350
          %v450 = vunpack.c.l.b16 %v351
          %v451 = vunpack.c.h.b16 %v351
          %v452 = vunpack.c.l.b16 %v352
          %v453 = vunpack.c.h.b16 %v352
          %v454 = vunpack.c.l.b16 %v353
          %v455 = vunpack.c.h.b16 %v353
          %v456 = vunpack.c.l.b16 %v354
          %v457 = vunpack.c.h.b16 %v354
          %v458 = vunpack.c.l.b16 %v355
          %v459 = vunpack.c.h.b16 %v355
          %v460 = vunpack.c.l.b16 %v356
          %v461 = vunpack.c.h.b16 %v356
          %v462 = vunpack.c.l.b16 %v357
          %v463 = vunpack.c.h.b16 %v357
          %v464 = vunpack.c.l.b16 %v358
          %v465 = vunpack.c.h.b16 %v358
          %v466 = vunpack.c.l.b16 %v359
          %v467 = vunpack.c.h.b16 %v359
          %v468 = vunpack.c.l.b16 %v360
          %v469 = vunpack.c.h.b16 %v360
          %v470 = vunpack.c.l.b16 %v361
          %v471 = vunpack.c.h.b16 %v361
          %v472 = vunpack.c.l.b16 %v362
          %v473 = vunpack.c.h.b16 %v362
          %v474 = vunpack.c.l.b16 %v363
          %v475 = vunpack.c.h.b16 %v363
          %v476 = vunpack.c.l.b16 %v364
          %v477 = vunpack.c.h.b16 %v364
          %v478 = vunpack.c.l.b16 %v365
          %v479 = vunpack.c.h.b16 %v365
          %v480 = vunpack.c.l.b16 %v366
          %v481 = vunpack.c.h.b16 %v366
          %v482 = vunpack.c.l.b16 %v367
          %v483 = vunpack.c.h.b16 %v367
          %v484 = vunpack.c.l.b16 %v368
          %v485 = vunpack.c.h.b16 %v368
          %v486 = vunpack.c.l.b16 %v369
          %v487 = vunpack.c.h.b16 %v369
          %v488 = vunpack.c.l.b16 %v370
          %v489 = vunpack.c.h.b16 %v370
          %v490 = vunpack.c.l.b16 %v371
          %v491 = vunpack.c.h.b16 %v371
          %v492 = vunpack.c.l.b16 %v372
          %v493 = vunpack.c.h.b16 %v372
          %v494 = vunpack.c.l.b16 %v373
          %v495 = vunpack.c.h.b16 %v373
          %v496 = vunpack.c.l.b16 %v374
          %v497 = vunpack.c.h.b16 %v374
          %v498 = vunpack.c.l.b16 %v375
          %v499 = vunpack.c.h.b16 %v375
          %v500 = vunpack.c.l.b16 %v376
          %v501 = vunpack.c.h.b16 %v376
          %v502 = vunpack.c.l.b16 %v377
          %v503 = vunpack.c.h.b16 %v377
          %v504 = vunpack.c.l.b16 %v378
          %v505 = vunpack.c.h.b16 %v378
          %v506 = vunpack.c.l.b16 %v379
          %v507 = vunpack.c.h.b16 %v379
          %v508 = vunpack.c.l.b16 %v380
          %v509 = vunpack.c.h.b16 %v380
          %v510 = vunpack.c.l.b16 %v381
          %v511 = vunpack.c.h.b16 %v381
          %v512 = vpack.c.b16 %v452, %v448
          %v513 = vpack.c.b16 %v453, %v449
          %v514 = vpack.c.b16 %v454, %v450
          %v515 = vpack.c.b16 %v455, %v451
          %v516 = vpack.c.b16 %v460, %v456
          %v517 = vpack.c.b16 %v461, %v457
          %v518 = vpack.c.b16 %v462, %v458
          %v519 = vpack.c.b16 %v463, %v459
          %v520 = vpack.c.b16 %v468, %v464
          %v521 = vpack.c.b16 %v469, %v465
          %v522 = vpack.c.b16 %v470, %v466
          %v523 = vpack.c.b16 %v471, %v467
          %v524 = vpack.c.b16 %v476, %v472
          %v525 = vpack.c.b16 %v477, %v473
          %v526 = vpack.c.b16 %v478, %v474
          %v527 = vpack.c.b16 %v479, %v475
          %v528 = vpack.c.b16 %v484, %v480
          %v529 = vpack.c.b16 %v485, %v481
          %v530 = vpack.c.b16 %v486, %v482
          %v531 = vpack.c.b16 %v487, %v483
          %v532 = vpack.c.b16 %v492, %v488
          %v533 = vpack.c.b16 %v493, %v489
          %v534 = vpack.c.b16 %v494, %v490
          %v535 = vpack.c.b16 %v495, %v491
          %v536 = vpack.c.b16 %v500, %v496
          %v537 = vpack.c.b16 %v501, %v497
          %v538 = vpack.c.b16 %v502, %v498
          %v539 = vpack.c.b16 %v503, %v499
          %v540 = vpack.c.b16 %v508, %v504
          %v541 = vpack.c.b16 %v509, %v505
          %v542 = vpack.c.b16 %v510, %v506
          %v543 = vpack.c.b16 %v511, %v507
          %576 = vmatpush.bf16.msra.mxu0 %v540
          %577 = vmatpush.bf16.msra.mxu0 %v536
          %578 = vmatpush.bf16.msra.mxu0 %v532
          %579 = vmatpush.bf16.msra.mxu0 %v528
          %580 = vmatpush.bf16.msra.mxu0 %v524
          %581 = vmatpush.bf16.msra.mxu0 %v520
          %582 = vmatpush.bf16.msra.mxu0 %v516
          %583 = vmatpush.bf16.msra.mxu0 %v512
          %584 = vmatmul.bf16.gmra.mxu0 %v408
          %v585 = vpop.f32.mrf.mxu0
          %v586 = vadd.f32 %v384, %v585
          %v587 = vpop.f32.mrf.mxu0
          %v588 = vadd.f32 %v384, %v587
          %589 = vmatmul.bf16.gmra.mxu0 %v409
          %v590 = vpop.f32.mrf.mxu0
          %v591 = vadd.f32 %v384, %v590
          %v592 = vpop.f32.mrf.mxu0
          %v593 = vadd.f32 %v384, %v592
          %594 = vmatmul.bf16.gmra.mxu0 %v410
          %v595 = vpop.f32.mrf.mxu0
          %v596 = vadd.f32 %v384, %v595
          %v597 = vpop.f32.mrf.mxu0
          %v598 = vadd.f32 %v384, %v597
          %599 = vmatmul.bf16.gmra.mxu0 %v411
          %v600 = vpop.f32.mrf.mxu0
          %v601 = vadd.f32 %v384, %v600
          %v602 = vpop.f32.mrf.mxu0
          %v603 = vadd.f32 %v384, %v602
          %604 = vdwg.mxu0
          %605 = vmatpush.bf16.msra.mxu0 %v541
          %606 = vmatpush.bf16.msra.mxu0 %v537
          %607 = vmatpush.bf16.msra.mxu0 %v533
          %608 = vmatpush.bf16.msra.mxu0 %v529
          %609 = vmatpush.bf16.msra.mxu0 %v525
          %610 = vmatpush.bf16.msra.mxu0 %v521
          %611 = vmatpush.bf16.msra.mxu0 %v517
          %612 = vmatpush.bf16.msra.mxu0 %v513
          %613 = vmatmul.bf16.gmra.mxu0 %v408
          %v614 = vpop.f32.mrf.mxu0
          %v615 = vadd.f32 %v385, %v614
          %v616 = vpop.f32.mrf.mxu0
          %v617 = vadd.f32 %v385, %v616
          %618 = vmatmul.bf16.gmra.mxu0 %v409
          %v619 = vpop.f32.mrf.mxu0
          %v620 = vadd.f32 %v385, %v619
          %v621 = vpop.f32.mrf.mxu0
          %v622 = vadd.f32 %v385, %v621
          %623 = vmatmul.bf16.gmra.mxu0 %v410
          %v624 = vpop.f32.mrf.mxu0
          %v625 = vadd.f32 %v385, %v624
          %v626 = vpop.f32.mrf.mxu0
          %v627 = vadd.f32 %v385, %v626
          %628 = vmatmul.bf16.gmra.mxu0 %v411
          %v629 = vpop.f32.mrf.mxu0
          %v630 = vadd.f32 %v385, %v629
          %v631 = vpop.f32.mrf.mxu0
          %v632 = vadd.f32 %v385, %v631
          %633 = vdwg.mxu0
          %634 = vmatpush.bf16.msra.mxu0 %v542
          %635 = vmatpush.bf16.msra.mxu0 %v538
          %636 = vmatpush.bf16.msra.mxu0 %v534
          %637 = vmatpush.bf16.msra.mxu0 %v530
          %638 = vmatpush.bf16.msra.mxu0 %v526
          %639 = vmatpush.bf16.msra.mxu0 %v522
          %640 = vmatpush.bf16.msra.mxu0 %v518
          %641 = vmatpush.bf16.msra.mxu0 %v514
          %642 = vmatmul.bf16.gmra.mxu0 %v408
          %v643 = vpop.f32.mrf.mxu0
          %v644 = vadd.f32 %v386, %v643
          %v645 = vpop.f32.mrf.mxu0
          %v646 = vadd.f32 %v386, %v645
          %647 = vmatmul.bf16.gmra.mxu0 %v409
          %v648 = vpop.f32.mrf.mxu0
          %v649 = vadd.f32 %v386, %v648
          %v650 = vpop.f32.mrf.mxu0
          %v651 = vadd.f32 %v386, %v650
          %652 = vmatmul.bf16.gmra.mxu0 %v410
          %v653 = vpop.f32.mrf.mxu0
          %v654 = vadd.f32 %v386, %v653
          %v655 = vpop.f32.mrf.mxu0
          %v656 = vadd.f32 %v386, %v655
          %657 = vmatmul.bf16.gmra.mxu0 %v411
          %v658 = vpop.f32.mrf.mxu0
          %v659 = vadd.f32 %v386, %v658
          %v660 = vpop.f32.mrf.mxu0
          %v661 = vadd.f32 %v386, %v660
          %662 = vdwg.mxu0
          %663 = vmatpush.bf16.msra.mxu0 %v543
          %664 = vmatpush.bf16.msra.mxu0 %v539
          %665 = vmatpush.bf16.msra.mxu0 %v535
          %666 = vmatpush.bf16.msra.mxu0 %v531
          %667 = vmatpush.bf16.msra.mxu0 %v527
          %668 = vmatpush.bf16.msra.mxu0 %v523
          %669 = vmatpush.bf16.msra.mxu0 %v519
          %670 = vmatpush.bf16.msra.mxu0 %v515
          %671 = vmatmul.bf16.gmra.mxu0 %v408
          %v672 = vpop.f32.mrf.mxu0
          %v673 = vadd.f32 %v387, %v672
          %v674 = vpop.f32.mrf.mxu0
          %v675 = vadd.f32 %v387, %v674
          %676 = vmatmul.bf16.gmra.mxu0 %v409
          %v677 = vpop.f32.mrf.mxu0
          %v678 = vadd.f32 %v387, %v677
          %v679 = vpop.f32.mrf.mxu0
          %v680 = vadd.f32 %v387, %v679
          %681 = vmatmul.bf16.gmra.mxu0 %v410
          %v682 = vpop.f32.mrf.mxu0
          %v683 = vadd.f32 %v387, %v682
          %v684 = vpop.f32.mrf.mxu0
          %v685 = vadd.f32 %v387, %v684
          %686 = vmatmul.bf16.gmra.mxu0 %v411
          %v687 = vpop.f32.mrf.mxu0
          %v688 = vadd.f32 %v387, %v687
          %v689 = vpop.f32.mrf.mxu0
          %v690 = vadd.f32 %v387, %v689
          %691 = vdwg.mxu0
          %v692 = vpack.c.bf16 %v615, %v586
          %v693 = vpack.c.bf16 %v673, %v644
          %v694 = vpack.c.bf16 %v617, %v588
          %v695 = vpack.c.bf16 %v675, %v646
          %v696 = vpack.c.bf16 %v620, %v591
          %v697 = vpack.c.bf16 %v678, %v649
          %v698 = vpack.c.bf16 %v622, %v593
          %v699 = vpack.c.bf16 %v680, %v651
          %v700 = vpack.c.bf16 %v625, %v596
          %v701 = vpack.c.bf16 %v683, %v654
          %v702 = vpack.c.bf16 %v627, %v598
          %v703 = vpack.c.bf16 %v685, %v656
          %v704 = vpack.c.bf16 %v630, %v601
          %v705 = vpack.c.bf16 %v688, %v659
          %v706 = vpack.c.bf16 %v632, %v603
          %v707 = vpack.c.bf16 %v690, %v661
          %708 = vst [vmem:[#allocation2] sm:$0xff] %v692
          %709 = vst [vmem:[#allocation2 + $0x8] sm:$0xff] %v693
          %710 = vst [vmem:[#allocation2 + $0x10] sm:$0xff] %v694
          %711 = vst [vmem:[#allocation2 + $0x18] sm:$0xff] %v695
          %712 = vst [vmem:[#allocation2 + $0x20] sm:$0xff] %v696
          %713 = vst [vmem:[#allocation2 + $0x28] sm:$0xff] %v697
          %714 = vst [vmem:[#allocation2 + $0x30] sm:$0xff] %v698
          %715 = vst [vmem:[#allocation2 + $0x38] sm:$0xff] %v699
          %716 = vst [vmem:[#allocation2 + $0x40] sm:$0xff] %v700
          %717 = vst [vmem:[#allocation2 + $0x48] sm:$0xff] %v701
          %718 = vst [vmem:[#allocation2 + $0x50] sm:$0xff] %v702
          %719 = vst [vmem:[#allocation2 + $0x58] sm:$0xff] %v703
          %720 = vst [vmem:[#allocation2 + $0x60] sm:$0xff] %v704
          %721 = vst [vmem:[#allocation2 + $0x68] sm:$0xff] %v705
          %722 = vst [vmem:[#allocation2 + $0x70] sm:$0xff] %v706
          %723 = vst [vmem:[#allocation2 + $0x78] sm:$0xff] %v707
        $region64: #{tpu_custom_call.1} parent=39 // pred_fallthru
          _
        %p724 = scmp.gt.s32.totalorder %s19, 0
        // Predicated region
        $region65: #{tpu_custom_call.1} parent=39 // pred_check
          %p725 = pneg %p724
        $region66: #{tpu_custom_call.1} parent=39 // pred_check_branch
          %727 = sbr.rel (%p725) target = $region68
        $region67: #{tpu_custom_call.1} parent=39 // pred_region
          %v728 = vld [vmem:[#allocation11] sm:$0xf]
          %v729 = vld [vmem:[#allocation11 + $0x4] sm:$0xf]
          %v730 = vld [vmem:[#allocation11 + $0x8] sm:$0xf]
          %v731 = vld [vmem:[#allocation11 + $0xc] sm:$0xf]
          %v732 = vld [vmem:[#allocation11 + $0x10] sm:$0xf]
          %v733 = vld [vmem:[#allocation11 + $0x14] sm:$0xf]
          %v734 = vld [vmem:[#allocation11 + $0x18] sm:$0xf]
          %v735 = vld [vmem:[#allocation11 + $0x1c] sm:$0xf]
          %v736 = vld [vmem:[%s284] sm:$0xff]
          %v737 = vld [vmem:[%s284 + $0x8] sm:$0xff]
          %v738 = vld [vmem:[%s284 + $0x10] sm:$0xff]
          %v739 = vld [vmem:[%s284 + $0x18] sm:$0xff]
          %v740 = vld [vmem:[%s284 + $0x20] sm:$0xff]
          %v741 = vld [vmem:[%s284 + $0x28] sm:$0xff]
          %v742 = vld [vmem:[%s284 + $0x30] sm:$0xff]
          %v743 = vld [vmem:[%s284 + $0x38] sm:$0xff]
          %v744 = vld [vmem:[%s284 + $0x40] sm:$0xff]
          %v745 = vld [vmem:[%s284 + $0x48] sm:$0xff]
          %v746 = vld [vmem:[%s284 + $0x50] sm:$0xff]
          %v747 = vld [vmem:[%s284 + $0x58] sm:$0xff]
          %v748 = vld [vmem:[%s284 + $0x60] sm:$0xff]
          %v749 = vld [vmem:[%s284 + $0x68] sm:$0xff]
          %v750 = vld [vmem:[%s284 + $0x70] sm:$0xff]
          %v751 = vld [vmem:[%s284 + $0x78] sm:$0xff]
          %v752 = vld [vmem:[%s284 + $0x80] sm:$0xff]
          %v753 = vld [vmem:[%s284 + $0x88] sm:$0xff]
          %v754 = vld [vmem:[%s284 + $0x90] sm:$0xff]
          %v755 = vld [vmem:[%s284 + $0x98] sm:$0xff]
          %v756 = vld [vmem:[%s284 + $0xa0] sm:$0xff]
          %v757 = vld [vmem:[%s284 + $0xa8] sm:$0xff]
          %v758 = vld [vmem:[%s284 + $0xb0] sm:$0xff]
          %v759 = vld [vmem:[%s284 + $0xb8] sm:$0xff]
          %v760 = vld [vmem:[%s284 + $0xc0] sm:$0xff]
          %v761 = vld [vmem:[%s284 + $0xc8] sm:$0xff]
          %v762 = vld [vmem:[%s284 + $0xd0] sm:$0xff]
          %v763 = vld [vmem:[%s284 + $0xd8] sm:$0xff]
          %v764 = vld [vmem:[%s284 + $0xe0] sm:$0xff]
          %v765 = vld [vmem:[%s284 + $0xe8] sm:$0xff]
          %v766 = vld [vmem:[%s284 + $0xf0] sm:$0xff]
          %v767 = vld [vmem:[%s284 + $0xf8] sm:$0xff]
          %v768 = vld [vmem:[%s304] sm:$0xf]
          %v770 = vperm.slane %v768, 0
          %v771 = vperm.slane %v768, 1
          %v772 = vperm.slane %v768, 2
          %v773 = vperm.slane %v768, 3
          %v786 = vunpack.c.l.b16 %v728
          %v787 = vunpack.c.l.b16 %v729
          %v788 = vunpack.c.l.b16 %v730
          %v789 = vunpack.c.l.b16 %v731
          %v790 = vunpack.c.l.b16 %v732
          %v791 = vunpack.c.l.b16 %v733
          %v792 = vunpack.c.l.b16 %v734
          %v793 = vunpack.c.l.b16 %v735
          %v794 = vpack.c.b16 %v787, %v786
          %v795 = vpack.c.b16 %v789, %v788
          %v796 = vpack.c.b16 %v791, %v790
          %v797 = vpack.c.b16 %v793, %v792
          %v834 = vunpack.c.l.b16 %v736
          %v835 = vunpack.c.h.b16 %v736
          %v836 = vunpack.c.l.b16 %v737
          %v837 = vunpack.c.h.b16 %v737
          %v838 = vunpack.c.l.b16 %v738
          %v839 = vunpack.c.h.b16 %v738
          %v840 = vunpack.c.l.b16 %v739
          %v841 = vunpack.c.h.b16 %v739
          %v842 = vunpack.c.l.b16 %v740
          %v843 = vunpack.c.h.b16 %v740
          %v844 = vunpack.c.l.b16 %v741
          %v845 = vunpack.c.h.b16 %v741
          %v846 = vunpack.c.l.b16 %v742
          %v847 = vunpack.c.h.b16 %v742
          %v848 = vunpack.c.l.b16 %v743
          %v849 = vunpack.c.h.b16 %v743
          %v850 = vunpack.c.l.b16 %v744
          %v851 = vunpack.c.h.b16 %v744
          %v852 = vunpack.c.l.b16 %v745
          %v853 = vunpack.c.h.b16 %v745
          %v854 = vunpack.c.l.b16 %v746
          %v855 = vunpack.c.h.b16 %v746
          %v856 = vunpack.c.l.b16 %v747
          %v857 = vunpack.c.h.b16 %v747
          %v858 = vunpack.c.l.b16 %v748
          %v859 = vunpack.c.h.b16 %v748
          %v860 = vunpack.c.l.b16 %v749
          %v861 = vunpack.c.h.b16 %v749
          %v862 = vunpack.c.l.b16 %v750
          %v863 = vunpack.c.h.b16 %v750
          %v864 = vunpack.c.l.b16 %v751
          %v865 = vunpack.c.h.b16 %v751
          %v866 = vunpack.c.l.b16 %v752
          %v867 = vunpack.c.h.b16 %v752
          %v868 = vunpack.c.l.b16 %v753
          %v869 = vunpack.c.h.b16 %v753
          %v870 = vunpack.c.l.b16 %v754
          %v871 = vunpack.c.h.b16 %v754
          %v872 = vunpack.c.l.b16 %v755
          %v873 = vunpack.c.h.b16 %v755
          %v874 = vunpack.c.l.b16 %v756
          %v875 = vunpack.c.h.b16 %v756
          %v876 = vunpack.c.l.b16 %v757
          %v877 = vunpack.c.h.b16 %v757
          %v878 = vunpack.c.l.b16 %v758
          %v879 = vunpack.c.h.b16 %v758
          %v880 = vunpack.c.l.b16 %v759
          %v881 = vunpack.c.h.b16 %v759
          %v882 = vunpack.c.l.b16 %v760
          %v883 = vunpack.c.h.b16 %v760
          %v884 = vunpack.c.l.b16 %v761
          %v885 = vunpack.c.h.b16 %v761
          %v886 = vunpack.c.l.b16 %v762
          %v887 = vunpack.c.h.b16 %v762
          %v888 = vunpack.c.l.b16 %v763
          %v889 = vunpack.c.h.b16 %v763
          %v890 = vunpack.c.l.b16 %v764
          %v891 = vunpack.c.h.b16 %v764
          %v892 = vunpack.c.l.b16 %v765
          %v893 = vunpack.c.h.b16 %v765
          %v894 = vunpack.c.l.b16 %v766
          %v895 = vunpack.c.h.b16 %v766
          %v896 = vunpack.c.l.b16 %v767
          %v897 = vunpack.c.h.b16 %v767
          %v898 = vpack.c.b16 %v838, %v834
          %v899 = vpack.c.b16 %v839, %v835
          %v900 = vpack.c.b16 %v840, %v836
          %v901 = vpack.c.b16 %v841, %v837
          %v902 = vpack.c.b16 %v846, %v842
          %v903 = vpack.c.b16 %v847, %v843
          %v904 = vpack.c.b16 %v848, %v844
          %v905 = vpack.c.b16 %v849, %v845
          %v906 = vpack.c.b16 %v854, %v850
          %v907 = vpack.c.b16 %v855, %v851
          %v908 = vpack.c.b16 %v856, %v852
          %v909 = vpack.c.b16 %v857, %v853
          %v910 = vpack.c.b16 %v862, %v858
          %v911 = vpack.c.b16 %v863, %v859
          %v912 = vpack.c.b16 %v864, %v860
          %v913 = vpack.c.b16 %v865, %v861
          %v914 = vpack.c.b16 %v870, %v866
          %v915 = vpack.c.b16 %v871, %v867
          %v916 = vpack.c.b16 %v872, %v868
          %v917 = vpack.c.b16 %v873, %v869
          %v918 = vpack.c.b16 %v878, %v874
          %v919 = vpack.c.b16 %v879, %v875
          %v920 = vpack.c.b16 %v880, %v876
          %v921 = vpack.c.b16 %v881, %v877
          %v922 = vpack.c.b16 %v886, %v882
          %v923 = vpack.c.b16 %v887, %v883
          %v924 = vpack.c.b16 %v888, %v884
          %v925 = vpack.c.b16 %v889, %v885
          %v926 = vpack.c.b16 %v894, %v890
          %v927 = vpack.c.b16 %v895, %v891
          %v928 = vpack.c.b16 %v896, %v892
          %v929 = vpack.c.b16 %v897, %v893
          %962 = vmatpush.bf16.msra.mxu0 %v926
          %963 = vmatpush.bf16.msra.mxu0 %v922
          %964 = vmatpush.bf16.msra.mxu0 %v918
          %965 = vmatpush.bf16.msra.mxu0 %v914
          %966 = vmatpush.bf16.msra.mxu0 %v910
          %967 = vmatpush.bf16.msra.mxu0 %v906
          %968 = vmatpush.bf16.msra.mxu0 %v902
          %969 = vmatpush.bf16.msra.mxu0 %v898
          %970 = vmatmul.bf16.gmra.mxu0 %v794
          %v971 = vpop.f32.mrf.mxu0
          %v972 = vadd.f32 %v770, %v971
          %v973 = vpop.f32.mrf.mxu0
          %v974 = vadd.f32 %v770, %v973
          %975 = vmatmul.bf16.gmra.mxu0 %v795
          %v976 = vpop.f32.mrf.mxu0
          %v977 = vadd.f32 %v770, %v976
          %v978 = vpop.f32.mrf.mxu0
          %v979 = vadd.f32 %v770, %v978
          %980 = vmatmul.bf16.gmra.mxu0 %v796
          %v981 = vpop.f32.mrf.mxu0
          %v982 = vadd.f32 %v770, %v981
          %v983 = vpop.f32.mrf.mxu0
          %v984 = vadd.f32 %v770, %v983
          %985 = vmatmul.bf16.gmra.mxu0 %v797
          %v986 = vpop.f32.mrf.mxu0
          %v987 = vadd.f32 %v770, %v986
          %v988 = vpop.f32.mrf.mxu0
          %v989 = vadd.f32 %v770, %v988
          %990 = vdwg.mxu0
          %991 = vmatpush.bf16.msra.mxu0 %v927
          %992 = vmatpush.bf16.msra.mxu0 %v923
          %993 = vmatpush.bf16.msra.mxu0 %v919
          %994 = vmatpush.bf16.msra.mxu0 %v915
          %995 = vmatpush.bf16.msra.mxu0 %v911
          %996 = vmatpush.bf16.msra.mxu0 %v907
          %997 = vmatpush.bf16.msra.mxu0 %v903
          %998 = vmatpush.bf16.msra.mxu0 %v899
          %999 = vmatmul.bf16.gmra.mxu0 %v794
          %v1000 = vpop.f32.mrf.mxu0
          %v1001 = vadd.f32 %v771, %v1000
          %v1002 = vpop.f32.mrf.mxu0
          %v1003 = vadd.f32 %v771, %v1002
          %1004 = vmatmul.bf16.gmra.mxu0 %v795
          %v1005 = vpop.f32.mrf.mxu0
          %v1006 = vadd.f32 %v771, %v1005
          %v1007 = vpop.f32.mrf.mxu0
          %v1008 = vadd.f32 %v771, %v1007
          %1009 = vmatmul.bf16.gmra.mxu0 %v796
          %v1010 = vpop.f32.mrf.mxu0
          %v1011 = vadd.f32 %v771, %v1010
          %v1012 = vpop.f32.mrf.mxu0
          %v1013 = vadd.f32 %v771, %v1012
          %1014 = vmatmul.bf16.gmra.mxu0 %v797
          %v1015 = vpop.f32.mrf.mxu0
          %v1016 = vadd.f32 %v771, %v1015
          %v1017 = vpop.f32.mrf.mxu0
          %v1018 = vadd.f32 %v771, %v1017
          %1019 = vdwg.mxu0
          %1020 = vmatpush.bf16.msra.mxu0 %v928
          %1021 = vmatpush.bf16.msra.mxu0 %v924
          %1022 = vmatpush.bf16.msra.mxu0 %v920
          %1023 = vmatpush.bf16.msra.mxu0 %v916
          %1024 = vmatpush.bf16.msra.mxu0 %v912
          %1025 = vmatpush.bf16.msra.mxu0 %v908
          %1026 = vmatpush.bf16.msra.mxu0 %v904
          %1027 = vmatpush.bf16.msra.mxu0 %v900
          %1028 = vmatmul.bf16.gmra.mxu0 %v794
          %v1029 = vpop.f32.mrf.mxu0
          %v1030 = vadd.f32 %v772, %v1029
          %v1031 = vpop.f32.mrf.mxu0
          %v1032 = vadd.f32 %v772, %v1031
          %1033 = vmatmul.bf16.gmra.mxu0 %v795
          %v1034 = vpop.f32.mrf.mxu0
          %v1035 = vadd.f32 %v772, %v1034
          %v1036 = vpop.f32.mrf.mxu0
          %v1037 = vadd.f32 %v772, %v1036
          %1038 = vmatmul.bf16.gmra.mxu0 %v796
          %v1039 = vpop.f32.mrf.mxu0
          %v1040 = vadd.f32 %v772, %v1039
          %v1041 = vpop.f32.mrf.mxu0
          %v1042 = vadd.f32 %v772, %v1041
          %1043 = vmatmul.bf16.gmra.mxu0 %v797
          %v1044 = vpop.f32.mrf.mxu0
          %v1045 = vadd.f32 %v772, %v1044
          %v1046 = vpop.f32.mrf.mxu0
          %v1047 = vadd.f32 %v772, %v1046
          %1048 = vdwg.mxu0
          %1049 = vmatpush.bf16.msra.mxu0 %v929
          %1050 = vmatpush.bf16.msra.mxu0 %v925
          %1051 = vmatpush.bf16.msra.mxu0 %v921
          %1052 = vmatpush.bf16.msra.mxu0 %v917
          %1053 = vmatpush.bf16.msra.mxu0 %v913
          %1054 = vmatpush.bf16.msra.mxu0 %v909
          %1055 = vmatpush.bf16.msra.mxu0 %v905
          %1056 = vmatpush.bf16.msra.mxu0 %v901
          %1057 = vmatmul.bf16.gmra.mxu0 %v794
          %v1058 = vpop.f32.mrf.mxu0
          %v1059 = vadd.f32 %v773, %v1058
          %v1060 = vpop.f32.mrf.mxu0
          %v1061 = vadd.f32 %v773, %v1060
          %1062 = vmatmul.bf16.gmra.mxu0 %v795
          %v1063 = vpop.f32.mrf.mxu0
          %v1064 = vadd.f32 %v773, %v1063
          %v1065 = vpop.f32.mrf.mxu0
          %v1066 = vadd.f32 %v773, %v1065
          %1067 = vmatmul.bf16.gmra.mxu0 %v796
          %v1068 = vpop.f32.mrf.mxu0
          %v1069 = vadd.f32 %v773, %v1068
          %v1070 = vpop.f32.mrf.mxu0
          %v1071 = vadd.f32 %v773, %v1070
          %1072 = vmatmul.bf16.gmra.mxu0 %v797
          %v1073 = vpop.f32.mrf.mxu0
          %v1074 = vadd.f32 %v773, %v1073
          %v1075 = vpop.f32.mrf.mxu0
          %v1076 = vadd.f32 %v773, %v1075
          %1077 = vdwg.mxu0
          %v1078 = vpack.c.bf16 %v1001, %v972
          %v1079 = vpack.c.bf16 %v1059, %v1030
          %v1080 = vpack.c.bf16 %v1003, %v974
          %v1081 = vpack.c.bf16 %v1061, %v1032
          %v1082 = vpack.c.bf16 %v1006, %v977
          %v1083 = vpack.c.bf16 %v1064, %v1035
          %v1084 = vpack.c.bf16 %v1008, %v979
          %v1085 = vpack.c.bf16 %v1066, %v1037
          %v1086 = vpack.c.bf16 %v1011, %v982
          %v1087 = vpack.c.bf16 %v1069, %v1040
          %v1088 = vpack.c.bf16 %v1013, %v984
          %v1089 = vpack.c.bf16 %v1071, %v1042
          %v1090 = vpack.c.bf16 %v1016, %v987
          %v1091 = vpack.c.bf16 %v1074, %v1045
          %v1092 = vpack.c.bf16 %v1018, %v989
          %v1093 = vpack.c.bf16 %v1076, %v1047
          %1094 = vst [vmem:[#allocation2] sm:$0xff] %v1078
          %1095 = vst [vmem:[#allocation2 + $0x8] sm:$0xff] %v1079
          %1096 = vst [vmem:[#allocation2 + $0x10] sm:$0xff] %v1080
          %1097 = vst [vmem:[#allocation2 + $0x18] sm:$0xff] %v1081
          %1098 = vst [vmem:[#allocation2 + $0x20] sm:$0xff] %v1082
          %1099 = vst [vmem:[#allocation2 + $0x28] sm:$0xff] %v1083
          %1100 = vst [vmem:[#allocation2 + $0x30] sm:$0xff] %v1084
          %1101 = vst [vmem:[#allocation2 + $0x38] sm:$0xff] %v1085
          %1102 = vst [vmem:[#allocation2 + $0x40] sm:$0xff] %v1086
          %1103 = vst [vmem:[#allocation2 + $0x48] sm:$0xff] %v1087
          %1104 = vst [vmem:[#allocation2 + $0x50] sm:$0xff] %v1088
          %1105 = vst [vmem:[#allocation2 + $0x58] sm:$0xff] %v1089
          %1106 = vst [vmem:[#allocation2 + $0x60] sm:$0xff] %v1090
          %1107 = vst [vmem:[#allocation2 + $0x68] sm:$0xff] %v1091
          %1108 = vst [vmem:[#allocation2 + $0x70] sm:$0xff] %v1092
          %1109 = vst [vmem:[#allocation2 + $0x78] sm:$0xff] %v1093
        $region68: #{tpu_custom_call.1} parent=39 // pred_fallthru
          _
        %s1110 = smul.u32 0, 4
        %s1111 = smul.addr %s1110, 4
        %s1112 = scalar_lea.vmem [#allocation2], %s1111
        %v1113 = vld [vmem:[%s1112] sm:$0xff]
        %v1114 = vld [vmem:[%s1112 + $0x8] sm:$0xff]
        %v1115 = vunpack.c.l.bf16 %v1113
        %v1116 = vunpack.c.h.bf16 %v1113
        %v1117 = vunpack.c.l.bf16 %v1114
        %v1118 = vunpack.c.h.bf16 %v1114
        %v1119 = vld [vmem:[#allocation3] sm:$0xff]
        %vm1120 = vcmp.gt.f32.partialorder %v1119, 0.0
        %v1121 = vsel %vm1120, 1, 0
        %v1122 = vcvt.s32.f32 %v1121
        %v1123 = vld [vmem:[%s294] sm:$0xff]
        %v1124 = vld [vmem:[%s294 + $0x8] sm:$0xff]
        %v1125 = vld [vmem:[%s294 + $0x10] sm:$0xff]
        %v1126 = vld [vmem:[%s294 + $0x18] sm:$0xff]
        %v1127 = vld [vmem:[%s294 + $0x20] sm:$0xff]
        %v1128 = vld [vmem:[%s294 + $0x28] sm:$0xff]
        %v1129 = vld [vmem:[%s294 + $0x30] sm:$0xff]
        %v1130 = vld [vmem:[%s294 + $0x38] sm:$0xff]
        %v1131 = vld [vmem:[%s294 + $0x40] sm:$0xff]
        %v1132 = vld [vmem:[%s294 + $0x48] sm:$0xff]
        %v1133 = vld [vmem:[%s294 + $0x50] sm:$0xff]
        %v1134 = vld [vmem:[%s294 + $0x58] sm:$0xff]
        %v1135 = vld [vmem:[%s294 + $0x60] sm:$0xff]
        %v1136 = vld [vmem:[%s294 + $0x68] sm:$0xff]
        %v1137 = vld [vmem:[%s294 + $0x70] sm:$0xff]
        %v1138 = vld [vmem:[%s294 + $0x78] sm:$0xff]
        %v1139 = vld [vmem:[%s294 + $0x80] sm:$0xff]
        %v1140 = vld [vmem:[%s294 + $0x88] sm:$0xff]
        %v1141 = vld [vmem:[%s294 + $0x90] sm:$0xff]
        %v1142 = vld [vmem:[%s294 + $0x98] sm:$0xff]
        %v1143 = vld [vmem:[%s294 + $0xa0] sm:$0xff]
        %v1144 = vld [vmem:[%s294 + $0xa8] sm:$0xff]
        %v1145 = vld [vmem:[%s294 + $0xb0] sm:$0xff]
        %v1146 = vld [vmem:[%s294 + $0xb8] sm:$0xff]
        %v1147 = vld [vmem:[%s294 + $0xc0] sm:$0xff]
        %v1148 = vld [vmem:[%s294 + $0xc8] sm:$0xff]
        %v1149 = vld [vmem:[%s294 + $0xd0] sm:$0xff]
        %v1150 = vld [vmem:[%s294 + $0xd8] sm:$0xff]
        %v1151 = vld [vmem:[%s294 + $0xe0] sm:$0xff]
        %v1152 = vld [vmem:[%s294 + $0xe8] sm:$0xff]
        %v1153 = vld [vmem:[%s294 + $0xf0] sm:$0xff]
        %v1154 = vld [vmem:[%s294 + $0xf8] sm:$0xff]
        %v1187 = vunpack.c.l.b16 %v1123
        %v1188 = vunpack.c.h.b16 %v1123
        %v1189 = vunpack.c.l.b16 %v1124
        %v1190 = vunpack.c.h.b16 %v1124
        %v1191 = vunpack.c.l.b16 %v1125
        %v1192 = vunpack.c.h.b16 %v1125
        %v1193 = vunpack.c.l.b16 %v1126
        %v1194 = vunpack.c.h.b16 %v1126
        %v1195 = vunpack.c.l.b16 %v1127
        %v1196 = vunpack.c.h.b16 %v1127
        %v1197 = vunpack.c.l.b16 %v1128
        %v1198 = vunpack.c.h.b16 %v1128
        %v1199 = vunpack.c.l.b16 %v1129
        %v1200 = vunpack.c.h.b16 %v1129
        %v1201 = vunpack.c.l.b16 %v1130
        %v1202 = vunpack.c.h.b16 %v1130
        %v1203 = vunpack.c.l.b16 %v1131
        %v1204 = vunpack.c.h.b16 %v1131
        %v1205 = vunpack.c.l.b16 %v1132
        %v1206 = vunpack.c.h.b16 %v1132
        %v1207 = vunpack.c.l.b16 %v1133
        %v1208 = vunpack.c.h.b16 %v1133
        %v1209 = vunpack.c.l.b16 %v1134
        %v1210 = vunpack.c.h.b16 %v1134
        %v1211 = vunpack.c.l.b16 %v1135
        %v1212 = vunpack.c.h.b16 %v1135
        %v1213 = vunpack.c.l.b16 %v1136
        %v1214 = vunpack.c.h.b16 %v1136
        %v1215 = vunpack.c.l.b16 %v1137
        %v1216 = vunpack.c.h.b16 %v1137
        %v1217 = vunpack.c.l.b16 %v1138
        %v1218 = vunpack.c.h.b16 %v1138
        %v1219 = vunpack.c.l.b16 %v1139
        %v1220 = vunpack.c.h.b16 %v1139
        %v1221 = vunpack.c.l.b16 %v1140
        %v1222 = vunpack.c.h.b16 %v1140
        %v1223 = vunpack.c.l.b16 %v1141
        %v1224 = vunpack.c.h.b16 %v1141
        %v1225 = vunpack.c.l.b16 %v1142
        %v1226 = vunpack.c.h.b16 %v1142
        %v1227 = vunpack.c.l.b16 %v1143
        %v1228 = vunpack.c.h.b16 %v1143
        %v1229 = vunpack.c.l.b16 %v1144
        %v1230 = vunpack.c.h.b16 %v1144
        %v1231 = vunpack.c.l.b16 %v1145
        %v1232 = vunpack.c.h.b16 %v1145
        %v1233 = vunpack.c.l.b16 %v1146
        %v1234 = vunpack.c.h.b16 %v1146
        %v1235 = vunpack.c.l.b16 %v1147
        %v1236 = vunpack.c.h.b16 %v1147
        %v1237 = vunpack.c.l.b16 %v1148
        %v1238 = vunpack.c.h.b16 %v1148
        %v1239 = vunpack.c.l.b16 %v1149
        %v1240 = vunpack.c.h.b16 %v1149
        %v1241 = vunpack.c.l.b16 %v1150
        %v1242 = vunpack.c.h.b16 %v1150
        %v1243 = vunpack.c.l.b16 %v1151
        %v1244 = vunpack.c.h.b16 %v1151
        %v1245 = vunpack.c.l.b16 %v1152
        %v1246 = vunpack.c.h.b16 %v1152
        %v1247 = vunpack.c.l.b16 %v1153
        %v1248 = vunpack.c.h.b16 %v1153
        %v1249 = vunpack.c.l.b16 %v1154
        %v1250 = vunpack.c.h.b16 %v1154
        %v1251 = vpack.c.b16 %v1191, %v1187
        %v1252 = vpack.c.b16 %v1192, %v1188
        %v1253 = vpack.c.b16 %v1193, %v1189
        %v1254 = vpack.c.b16 %v1194, %v1190
        %v1255 = vpack.c.b16 %v1199, %v1195
        %v1256 = vpack.c.b16 %v1200, %v1196
        %v1257 = vpack.c.b16 %v1201, %v1197
        %v1258 = vpack.c.b16 %v1202, %v1198
        %v1259 = vpack.c.b16 %v1207, %v1203
        %v1260 = vpack.c.b16 %v1208, %v1204
        %v1261 = vpack.c.b16 %v1209, %v1205
        %v1262 = vpack.c.b16 %v1210, %v1206
        %v1263 = vpack.c.b16 %v1215, %v1211
        %v1264 = vpack.c.b16 %v1216, %v1212
        %v1265 = vpack.c.b16 %v1217, %v1213
        %v1266 = vpack.c.b16 %v1218, %v1214
        %v1267 = vpack.c.b16 %v1223, %v1219
        %v1268 = vpack.c.b16 %v1224, %v1220
        %v1269 = vpack.c.b16 %v1225, %v1221
        %v1270 = vpack.c.b16 %v1226, %v1222
        %v1271 = vpack.c.b16 %v1231, %v1227
        %v1272 = vpack.c.b16 %v1232, %v1228
        %v1273 = vpack.c.b16 %v1233, %v1229
        %v1274 = vpack.c.b16 %v1234, %v1230
        %v1275 = vpack.c.b16 %v1239, %v1235
        %v1276 = vpack.c.b16 %v1240, %v1236
        %v1277 = vpack.c.b16 %v1241, %v1237
        %v1278 = vpack.c.b16 %v1242, %v1238
        %v1279 = vpack.c.b16 %v1247, %v1243
        %v1280 = vpack.c.b16 %v1248, %v1244
        %v1281 = vpack.c.b16 %v1249, %v1245
        %v1282 = vpack.c.b16 %v1250, %v1246
        %1315 = vmatpush.bf16.msra.mxu0 %v1279
        %1316 = vmatpush.bf16.msra.mxu0 %v1275
        %1317 = vmatpush.bf16.msra.mxu0 %v1271
        %1318 = vmatpush.bf16.msra.mxu0 %v1267
        %1319 = vmatpush.bf16.msra.mxu0 %v1263
        %1320 = vmatpush.bf16.msra.mxu0 %v1259
        %1321 = vmatpush.bf16.msra.mxu0 %v1255
        %1322 = vmatpush.bf16.msra.mxu0 %v1251
        %1323 = vmatmul.bf16.gmra.mxu0 0
        %v1324 = vpop.f32.mrf.mxu0
        %v1325 = vadd.f32 0.0, %v1324
        %v1326 = vpop.f32.mrf.mxu0
        %1327 = vdwg.mxu0
        %1328 = vmatpush.bf16.msra.mxu0 %v1280
        %1329 = vmatpush.bf16.msra.mxu0 %v1276
        %1330 = vmatpush.bf16.msra.mxu0 %v1272
        %1331 = vmatpush.bf16.msra.mxu0 %v1268
        %1332 = vmatpush.bf16.msra.mxu0 %v1264
        %1333 = vmatpush.bf16.msra.mxu0 %v1260
        %1334 = vmatpush.bf16.msra.mxu0 %v1256
        %1335 = vmatpush.bf16.msra.mxu0 %v1252
        %1336 = vmatmul.bf16.gmra.mxu0 0
        %v1337 = vpop.f32.mrf.mxu0
        %v1338 = vadd.f32 0.0, %v1337
        %v1339 = vpop.f32.mrf.mxu0
        %1340 = vdwg.mxu0
        %1341 = vmatpush.bf16.msra.mxu0 %v1281
        %1342 = vmatpush.bf16.msra.mxu0 %v1277
        %1343 = vmatpush.bf16.msra.mxu0 %v1273
        %1344 = vmatpush.bf16.msra.mxu0 %v1269
        %1345 = vmatpush.bf16.msra.mxu0 %v1265
        %1346 = vmatpush.bf16.msra.mxu0 %v1261
        %1347 = vmatpush.bf16.msra.mxu0 %v1257
        %1348 = vmatpush.bf16.msra.mxu0 %v1253
        %1349 = vmatmul.bf16.gmra.mxu0 0
        %v1350 = vpop.f32.mrf.mxu0
        %v1351 = vadd.f32 0.0, %v1350
        %v1352 = vpop.f32.mrf.mxu0
        %1353 = vdwg.mxu0
        %1354 = vmatpush.bf16.msra.mxu0 %v1282
        %1355 = vmatpush.bf16.msra.mxu0 %v1278
        %1356 = vmatpush.bf16.msra.mxu0 %v1274
        %1357 = vmatpush.bf16.msra.mxu0 %v1270
        %1358 = vmatpush.bf16.msra.mxu0 %v1266
        %1359 = vmatpush.bf16.msra.mxu0 %v1262
        %1360 = vmatpush.bf16.msra.mxu0 %v1258
        %1361 = vmatpush.bf16.msra.mxu0 %v1254
        %1362 = vmatmul.bf16.gmra.mxu0 0
        %v1363 = vpop.f32.mrf.mxu0
        %v1364 = vadd.f32 0.0, %v1363
        %v1365 = vpop.f32.mrf.mxu0
        %1366 = vdwg.mxu0
        %v1367 = vadd.f32 %v1115, %v1325
        %v1368 = vadd.f32 %v1116, %v1338
        %v1369 = vadd.f32 %v1117, %v1351
        %v1370 = vadd.f32 %v1118, %v1364
        %v1371 = vxor.u32 %v1367, 2147483648
        %v1372 = vxor.u32 %v1368, 2147483648
        %v1373 = vxor.u32 %v1369, 2147483648
        %v1374 = vmul.f32 %v1371, 1.442695
        %v1375 = vpow.pop %v1374
        %v1376 = vmul.f32 %v1372, 1.442695
        %v1377 = vpow.pop %v1376
        %v1378 = vmul.f32 %v1373, 1.442695
        %v1379 = vpow.pop %v1378
        %v1380 = vadd.f32 %v1375, 1.0
        %v1381 = vadd.f32 %v1377, 1.0
        %v1382 = vadd.f32 %v1379, 1.0
        %v1383 = vrcp.pop %v1380
        %v1384 = vmul.f32 %v1380, %v1383
        %v1385 = vsub.f32 1.0, %v1384
        %v1386 = vmul.f32 %v1383, %v1385
        %v1387 = vadd.f32 %v1383, %v1386
        %vm1388 = vweird.f32 %v1380
        %vm1389 = vweird.f32 %v1383
        %vm1390 = vmor %vm1388, %vm1389
        %v1391 = vsel %vm1390, %v1383, %v1387
        %v1392 = vand.u32 2147483647, %v1380
        %vm1393 = vcmp.eq.f32.partialorder %v1392, 8.507059e+37
        %v1394 = vand.u32 %v1380, 2147483648
        %v1395 = vor.u32 1.1754944e-38, %v1394
        %v1396 = vsel %vm1393, %v1395, %v1391
        %v1397 = vmul.f32 1.0, %v1396
        %v1398 = vrcp.pop %v1381
        %v1399 = vmul.f32 %v1381, %v1398
        %v1400 = vsub.f32 1.0, %v1399
        %v1401 = vmul.f32 %v1398, %v1400
        %v1402 = vadd.f32 %v1398, %v1401
        %vm1403 = vweird.f32 %v1381
        %vm1404 = vweird.f32 %v1398
        %vm1405 = vmor %vm1403, %vm1404
        %v1406 = vsel %vm1405, %v1398, %v1402
        %v1407 = vand.u32 2147483647, %v1381
        %vm1408 = vcmp.eq.f32.partialorder %v1407, 8.507059e+37
        %v1409 = vand.u32 %v1381, 2147483648
        %v1410 = vor.u32 1.1754944e-38, %v1409
        %v1411 = vsel %vm1408, %v1410, %v1406
        %v1412 = vmul.f32 1.0, %v1411
        %v1413 = vrcp.pop %v1382
        %v1414 = vmul.f32 %v1382, %v1413
        %v1415 = vsub.f32 1.0, %v1414
        %v1416 = vmul.f32 %v1413, %v1415
        %v1417 = vadd.f32 %v1413, %v1416
        %vm1418 = vweird.f32 %v1382
        %vm1419 = vweird.f32 %v1413
        %vm1420 = vmor %vm1418, %vm1419
        %v1421 = vsel %vm1420, %v1413, %v1417
        %v1422 = vand.u32 2147483647, %v1382
        %vm1423 = vcmp.eq.f32.partialorder %v1422, 8.507059e+37
        %v1424 = vand.u32 %v1382, 2147483648
        %v1425 = vor.u32 1.1754944e-38, %v1424
        %v1426 = vsel %vm1423, %v1425, %v1421
        %v1427 = vmul.f32 1.0, %v1426
        %v1428 = vtanh.pop %v1370
        %v1429 = vmul.f32 %v1412, 0.0
        %v1430 = vmul.f32 %v1397, %v1428
        %v1431 = vadd.f32 %v1429, %v1430
        %v1432 = vtanh.pop %v1431
        %v1433 = vmul.f32 %v1427, %v1432
        %v1434 = vmul.f32 %v1122, %v1433
        %v1435 = vpack.c.bf16 %v1434, %v1434
        %1436 = vst [vmem:[#allocation11] sm:$0xf] %v1435
        %v1437 = vadd.f32 %v1434, 0.0
        %v1438 = vmul.f32 %v1122, %v1431
        %v1439 = vadd.f32 %v1438, 0.0
        %s1440 = smul.u32 1, 4
        %s1441 = smul.addr %s1440, 4
        %s1442 = scalar_lea.vmem [#allocation2], %s1441
        %v1443 = vld [vmem:[%s1442] sm:$0xff]
        %v1444 = vld [vmem:[%s1442 + $0x8] sm:$0xff]
        %v1445 = vunpack.c.l.bf16 %v1443
        %v1446 = vunpack.c.h.bf16 %v1443
        %v1447 = vunpack.c.l.bf16 %v1444
        %v1448 = vunpack.c.h.bf16 %v1444
        %v1449 = vld [vmem:[#allocation3] sm:$0xff]
        %vm1450 = vcmp.gt.f32.partialorder %v1449, 1.0
        %v1451 = vsel %vm1450, 1, 0
        %v1452 = vcvt.s32.f32 %v1451
        %v1453 = vpack.c.bf16 %v1437, %v1437
        %v1454 = vld [vmem:[%s294] sm:$0xff]
        %v1455 = vld [vmem:[%s294 + $0x8] sm:$0xff]
        %v1456 = vld [vmem:[%s294 + $0x10] sm:$0xff]
        %v1457 = vld [vmem:[%s294 + $0x18] sm:$0xff]
        %v1458 = vld [vmem:[%s294 + $0x20] sm:$0xff]
        %v1459 = vld [vmem:[%s294 + $0x28] sm:$0xff]
        %v1460 = vld [vmem:[%s294 + $0x30] sm:$0xff]
        %v1461 = vld [vmem:[%s294 + $0x38] sm:$0xff]
        %v1462 = vld [vmem:[%s294 + $0x40] sm:$0xff]
        %v1463 = vld [vmem:[%s294 + $0x48] sm:$0xff]
        %v1464 = vld [vmem:[%s294 + $0x50] sm:$0xff]
        %v1465 = vld [vmem:[%s294 + $0x58] sm:$0xff]
        %v1466 = vld [vmem:[%s294 + $0x60] sm:$0xff]
        %v1467 = vld [vmem:[%s294 + $0x68] sm:$0xff]
        %v1468 = vld [vmem:[%s294 + $0x70] sm:$0xff]
        %v1469 = vld [vmem:[%s294 + $0x78] sm:$0xff]
        %v1470 = vld [vmem:[%s294 + $0x80] sm:$0xff]
        %v1471 = vld [vmem:[%s294 + $0x88] sm:$0xff]
        %v1472 = vld [vmem:[%s294 + $0x90] sm:$0xff]
        %v1473 = vld [vmem:[%s294 + $0x98] sm:$0xff]
        %v1474 = vld [vmem:[%s294 + $0xa0] sm:$0xff]
        %v1475 = vld [vmem:[%s294 + $0xa8] sm:$0xff]
        %v1476 = vld [vmem:[%s294 + $0xb0] sm:$0xff]
        %v1477 = vld [vmem:[%s294 + $0xb8] sm:$0xff]
        %v1478 = vld [vmem:[%s294 + $0xc0] sm:$0xff]
        %v1479 = vld [vmem:[%s294 + $0xc8] sm:$0xff]
        %v1480 = vld [vmem:[%s294 + $0xd0] sm:$0xff]
        %v1481 = vld [vmem:[%s294 + $0xd8] sm:$0xff]
        %v1482 = vld [vmem:[%s294 + $0xe0] sm:$0xff]
        %v1483 = vld [vmem:[%s294 + $0xe8] sm:$0xff]
        %v1484 = vld [vmem:[%s294 + $0xf0] sm:$0xff]
        %v1485 = vld [vmem:[%s294 + $0xf8] sm:$0xff]
        %v1518 = vunpack.c.l.b16 %v1454
        %v1519 = vunpack.c.h.b16 %v1454
        %v1520 = vunpack.c.l.b16 %v1455
        %v1521 = vunpack.c.h.b16 %v1455
        %v1522 = vunpack.c.l.b16 %v1456
        %v1523 = vunpack.c.h.b16 %v1456
        %v1524 = vunpack.c.l.b16 %v1457
        %v1525 = vunpack.c.h.b16 %v1457
        %v1526 = vunpack.c.l.b16 %v1458
        %v1527 = vunpack.c.h.b16 %v1458
        %v1528 = vunpack.c.l.b16 %v1459
        %v1529 = vunpack.c.h.b16 %v1459
        %v1530 = vunpack.c.l.b16 %v1460
        %v1531 = vunpack.c.h.b16 %v1460
        %v1532 = vunpack.c.l.b16 %v1461
        %v1533 = vunpack.c.h.b16 %v1461
        %v1534 = vunpack.c.l.b16 %v1462
        %v1535 = vunpack.c.h.b16 %v1462
        %v1536 = vunpack.c.l.b16 %v1463
        %v1537 = vunpack.c.h.b16 %v1463
        %v1538 = vunpack.c.l.b16 %v1464
        %v1539 = vunpack.c.h.b16 %v1464
        %v1540 = vunpack.c.l.b16 %v1465
        %v1541 = vunpack.c.h.b16 %v1465
        %v1542 = vunpack.c.l.b16 %v1466
        %v1543 = vunpack.c.h.b16 %v1466
        %v1544 = vunpack.c.l.b16 %v1467
        %v1545 = vunpack.c.h.b16 %v1467
        %v1546 = vunpack.c.l.b16 %v1468
        %v1547 = vunpack.c.h.b16 %v1468
        %v1548 = vunpack.c.l.b16 %v1469
        %v1549 = vunpack.c.h.b16 %v1469
        %v1550 = vunpack.c.l.b16 %v1470
        %v1551 = vunpack.c.h.b16 %v1470
        %v1552 = vunpack.c.l.b16 %v1471
        %v1553 = vunpack.c.h.b16 %v1471
        %v1554 = vunpack.c.l.b16 %v1472
        %v1555 = vunpack.c.h.b16 %v1472
        %v1556 = vunpack.c.l.b16 %v1473
        %v1557 = vunpack.c.h.b16 %v1473
        %v1558 = vunpack.c.l.b16 %v1474
        %v1559 = vunpack.c.h.b16 %v1474
        %v1560 = vunpack.c.l.b16 %v1475
        %v1561 = vunpack.c.h.b16 %v1475
        %v1562 = vunpack.c.l.b16 %v1476
        %v1563 = vunpack.c.h.b16 %v1476
        %v1564 = vunpack.c.l.b16 %v1477
        %v1565 = vunpack.c.h.b16 %v1477
        %v1566 = vunpack.c.l.b16 %v1478
        %v1567 = vunpack.c.h.b16 %v1478
        %v1568 = vunpack.c.l.b16 %v1479
        %v1569 = vunpack.c.h.b16 %v1479
        %v1570 = vunpack.c.l.b16 %v1480
        %v1571 = vunpack.c.h.b16 %v1480
        %v1572 = vunpack.c.l.b16 %v1481
        %v1573 = vunpack.c.h.b16 %v1481
        %v1574 = vunpack.c.l.b16 %v1482
        %v1575 = vunpack.c.h.b16 %v1482
        %v1576 = vunpack.c.l.b16 %v1483
        %v1577 = vunpack.c.h.b16 %v1483
        %v1578 = vunpack.c.l.b16 %v1484
        %v1579 = vunpack.c.h.b16 %v1484
        %v1580 = vunpack.c.l.b16 %v1485
        %v1581 = vunpack.c.h.b16 %v1485
        %v1582 = vpack.c.b16 %v1522, %v1518
        %v1583 = vpack.c.b16 %v1523, %v1519
        %v1584 = vpack.c.b16 %v1524, %v1520
        %v1585 = vpack.c.b16 %v1525, %v1521
        %v1586 = vpack.c.b16 %v1530, %v1526
        %v1587 = vpack.c.b16 %v1531, %v1527
        %v1588 = vpack.c.b16 %v1532, %v1528
        %v1589 = vpack.c.b16 %v1533, %v1529
        %v1590 = vpack.c.b16 %v1538, %v1534
        %v1591 = vpack.c.b16 %v1539, %v1535
        %v1592 = vpack.c.b16 %v1540, %v1536
        %v1593 = vpack.c.b16 %v1541, %v1537
        %v1594 = vpack.c.b16 %v1546, %v1542
        %v1595 = vpack.c.b16 %v1547, %v1543
        %v1596 = vpack.c.b16 %v1548, %v1544
        %v1597 = vpack.c.b16 %v1549, %v1545
        %v1598 = vpack.c.b16 %v1554, %v1550
        %v1599 = vpack.c.b16 %v1555, %v1551
        %v1600 = vpack.c.b16 %v1556, %v1552
        %v1601 = vpack.c.b16 %v1557, %v1553
        %v1602 = vpack.c.b16 %v1562, %v1558
        %v1603 = vpack.c.b16 %v1563, %v1559
        %v1604 = vpack.c.b16 %v1564, %v1560
        %v1605 = vpack.c.b16 %v1565, %v1561
        %v1606 = vpack.c.b16 %v1570, %v1566
        %v1607 = vpack.c.b16 %v1571, %v1567
        %v1608 = vpack.c.b16 %v1572, %v1568
        %v1609 = vpack.c.b16 %v1573, %v1569
        %v1610 = vpack.c.b16 %v1578, %v1574
        %v1611 = vpack.c.b16 %v1579, %v1575
        %v1612 = vpack.c.b16 %v1580, %v1576
        %v1613 = vpack.c.b16 %v1581, %v1577
        %1646 = vmatpush.bf16.msra.mxu0 %v1610
        %1647 = vmatpush.bf16.msra.mxu0 %v1606
        %1648 = vmatpush.bf16.msra.mxu0 %v1602
        %1649 = vmatpush.bf16.msra.mxu0 %v1598
        %1650 = vmatpush.bf16.msra.mxu0 %v1594
        %1651 = vmatpush.bf16.msra.mxu0 %v1590
        %1652 = vmatpush.bf16.msra.mxu0 %v1586
        %1653 = vmatpush.bf16.msra.mxu0 %v1582
        %1654 = vmatmul.bf16.gmra.mxu0 %v1453
        %v1655 = vpop.f32.mrf.mxu0
        %v1656 = vadd.f32 0.0, %v1655
        %v1657 = vpop.f32.mrf.mxu0
        %1658 = vdwg.mxu0
        %1659 = vmatpush.bf16.msra.mxu0 %v1611
        %1660 = vmatpush.bf16.msra.mxu0 %v1607
        %1661 = vmatpush.bf16.msra.mxu0 %v1603
        %1662 = vmatpush.bf16.msra.mxu0 %v1599
        %1663 = vmatpush.bf16.msra.mxu0 %v1595
        %1664 = vmatpush.bf16.msra.mxu0 %v1591
        %1665 = vmatpush.bf16.msra.mxu0 %v1587
        %1666 = vmatpush.bf16.msra.mxu0 %v1583
        %1667 = vmatmul.bf16.gmra.mxu0 %v1453
        %v1668 = vpop.f32.mrf.mxu0
        %v1669 = vadd.f32 0.0, %v1668
        %v1670 = vpop.f32.mrf.mxu0
        %1671 = vdwg.mxu0
        %1672 = vmatpush.bf16.msra.mxu0 %v1612
        %1673 = vmatpush.bf16.msra.mxu0 %v1608
        %1674 = vmatpush.bf16.msra.mxu0 %v1604
        %1675 = vmatpush.bf16.msra.mxu0 %v1600
        %1676 = vmatpush.bf16.msra.mxu0 %v1596
        %1677 = vmatpush.bf16.msra.mxu0 %v1592
        %1678 = vmatpush.bf16.msra.mxu0 %v1588
        %1679 = vmatpush.bf16.msra.mxu0 %v1584
        %1680 = vmatmul.bf16.gmra.mxu0 %v1453
        %v1681 = vpop.f32.mrf.mxu0
        %v1682 = vadd.f32 0.0, %v1681
        %v1683 = vpop.f32.mrf.mxu0
        %1684 = vdwg.mxu0
        %1685 = vmatpush.bf16.msra.mxu0 %v1613
        %1686 = vmatpush.bf16.msra.mxu0 %v1609
        %1687 = vmatpush.bf16.msra.mxu0 %v1605
        %1688 = vmatpush.bf16.msra.mxu0 %v1601
        %1689 = vmatpush.bf16.msra.mxu0 %v1597
        %1690 = vmatpush.bf16.msra.mxu0 %v1593
        %1691 = vmatpush.bf16.msra.mxu0 %v1589
        %1692 = vmatpush.bf16.msra.mxu0 %v1585
        %1693 = vmatmul.bf16.gmra.mxu0 %v1453
        %v1694 = vpop.f32.mrf.mxu0
        %v1695 = vadd.f32 0.0, %v1694
        %v1696 = vpop.f32.mrf.mxu0
        %1697 = vdwg.mxu0
        %v1698 = vadd.f32 %v1445, %v1656
        %v1699 = vadd.f32 %v1446, %v1669
        %v1700 = vadd.f32 %v1447, %v1682
        %v1701 = vadd.f32 %v1448, %v1695
        %v1702 = vxor.u32 %v1698, 2147483648
        %v1703 = vxor.u32 %v1699, 2147483648
        %v1704 = vxor.u32 %v1700, 2147483648
        %v1705 = vmul.f32 %v1702, 1.442695
        %v1706 = vpow.pop %v1705
        %v1707 = vmul.f32 %v1703, 1.442695
        %v1708 = vpow.pop %v1707
        %v1709 = vmul.f32 %v1704, 1.442695
        %v1710 = vpow.pop %v1709
        %v1711 = vadd.f32 %v1706, 1.0
        %v1712 = vadd.f32 %v1708, 1.0
        %v1713 = vadd.f32 %v1710, 1.0
        %v1714 = vrcp.pop %v1711
        %v1715 = vmul.f32 %v1711, %v1714
        %v1716 = vsub.f32 1.0, %v1715
        %v1717 = vmul.f32 %v1714, %v1716
        %v1718 = vadd.f32 %v1714, %v1717
        %vm1719 = vweird.f32 %v1711
        %vm1720 = vweird.f32 %v1714
        %vm1721 = vmor %vm1719, %vm1720
        %v1722 = vsel %vm1721, %v1714, %v1718
        %v1723 = vand.u32 2147483647, %v1711
        %vm1724 = vcmp.eq.f32.partialorder %v1723, 8.507059e+37
        %v1725 = vand.u32 %v1711, 2147483648
        %v1726 = vor.u32 1.1754944e-38, %v1725
        %v1727 = vsel %vm1724, %v1726, %v1722
        %v1728 = vmul.f32 1.0, %v1727
        %v1729 = vrcp.pop %v1712
        %v1730 = vmul.f32 %v1712, %v1729
        %v1731 = vsub.f32 1.0, %v1730
        %v1732 = vmul.f32 %v1729, %v1731
        %v1733 = vadd.f32 %v1729, %v1732
        %vm1734 = vweird.f32 %v1712
        %vm1735 = vweird.f32 %v1729
        %vm1736 = vmor %vm1734, %vm1735
        %v1737 = vsel %vm1736, %v1729, %v1733
        %v1738 = vand.u32 2147483647, %v1712
        %vm1739 = vcmp.eq.f32.partialorder %v1738, 8.507059e+37
        %v1740 = vand.u32 %v1712, 2147483648
        %v1741 = vor.u32 1.1754944e-38, %v1740
        %v1742 = vsel %vm1739, %v1741, %v1737
        %v1743 = vmul.f32 1.0, %v1742
        %v1744 = vrcp.pop %v1713
        %v1745 = vmul.f32 %v1713, %v1744
        %v1746 = vsub.f32 1.0, %v1745
        %v1747 = vmul.f32 %v1744, %v1746
        %v1748 = vadd.f32 %v1744, %v1747
        %vm1749 = vweird.f32 %v1713
        %vm1750 = vweird.f32 %v1744
        %vm1751 = vmor %vm1749, %vm1750
        %v1752 = vsel %vm1751, %v1744, %v1748
        %v1753 = vand.u32 2147483647, %v1713
        %vm1754 = vcmp.eq.f32.partialorder %v1753, 8.507059e+37
        %v1755 = vand.u32 %v1713, 2147483648
        %v1756 = vor.u32 1.1754944e-38, %v1755
        %v1757 = vsel %vm1754, %v1756, %v1752
        %v1758 = vmul.f32 1.0, %v1757
        %v1759 = vtanh.pop %v1701
        %v1760 = vmul.f32 %v1743, %v1439
        %v1761 = vmul.f32 %v1728, %v1759
        %v1762 = vadd.f32 %v1760, %v1761
        %v1763 = vtanh.pop %v1762
        %v1764 = vmul.f32 %v1758, %v1763
        %v1765 = vmul.f32 %v1452, %v1764
        %v1766 = vpack.c.bf16 %v1765, %v1765
        %s1767 = scalar_lea.vmem [#allocation11], 4
        %1768 = vst [vmem:[%s1767] sm:$0xf] %v1766
        %v1769 = vsub.f32 %v1764, %v1437
        %v1770 = vmul.f32 %v1452, %v1769
        %v1771 = vadd.f32 %v1437, %v1770
        %v1772 = vsub.f32 %v1762, %v1439
        %v1773 = vmul.f32 %v1452, %v1772
        %v1774 = vadd.f32 %v1439, %v1773
        %s1775 = smul.u32 2, 4
        %s1776 = smul.addr %s1775, 4
        %s1777 = scalar_lea.vmem [#allocation2], %s1776
        %v1778 = vld [vmem:[%s1777] sm:$0xff]
        %v1779 = vld [vmem:[%s1777 + $0x8] sm:$0xff]
        %v1780 = vunpack.c.l.bf16 %v1778
        %v1781 = vunpack.c.h.bf16 %v1778
        %v1782 = vunpack.c.l.bf16 %v1779
        %v1783 = vunpack.c.h.bf16 %v1779
        %v1784 = vld [vmem:[#allocation3] sm:$0xff]
        %vm1785 = vcmp.gt.f32.partialorder %v1784, 2.0
        %v1786 = vsel %vm1785, 1, 0
        %v1787 = vcvt.s32.f32 %v1786
        %v1788 = vpack.c.bf16 %v1771, %v1771
        %v1789 = vld [vmem:[%s294] sm:$0xff]
        %v1790 = vld [vmem:[%s294 + $0x8] sm:$0xff]
        %v1791 = vld [vmem:[%s294 + $0x10] sm:$0xff]
        %v1792 = vld [vmem:[%s294 + $0x18] sm:$0xff]
        %v1793 = vld [vmem:[%s294 + $0x20] sm:$0xff]
        %v1794 = vld [vmem:[%s294 + $0x28] sm:$0xff]
        %v1795 = vld [vmem:[%s294 + $0x30] sm:$0xff]
        %v1796 = vld [vmem:[%s294 + $0x38] sm:$0xff]
        %v1797 = vld [vmem:[%s294 + $0x40] sm:$0xff]
        %v1798 = vld [vmem:[%s294 + $0x48] sm:$0xff]
        %v1799 = vld [vmem:[%s294 + $0x50] sm:$0xff]
        %v1800 = vld [vmem:[%s294 + $0x58] sm:$0xff]
        %v1801 = vld [vmem:[%s294 + $0x60] sm:$0xff]
        %v1802 = vld [vmem:[%s294 + $0x68] sm:$0xff]
        %v1803 = vld [vmem:[%s294 + $0x70] sm:$0xff]
        %v1804 = vld [vmem:[%s294 + $0x78] sm:$0xff]
        %v1805 = vld [vmem:[%s294 + $0x80] sm:$0xff]
        %v1806 = vld [vmem:[%s294 + $0x88] sm:$0xff]
        %v1807 = vld [vmem:[%s294 + $0x90] sm:$0xff]
        %v1808 = vld [vmem:[%s294 + $0x98] sm:$0xff]
        %v1809 = vld [vmem:[%s294 + $0xa0] sm:$0xff]
        %v1810 = vld [vmem:[%s294 + $0xa8] sm:$0xff]
        %v1811 = vld [vmem:[%s294 + $0xb0] sm:$0xff]
        %v1812 = vld [vmem:[%s294 + $0xb8] sm:$0xff]
        %v1813 = vld [vmem:[%s294 + $0xc0] sm:$0xff]
        %v1814 = vld [vmem:[%s294 + $0xc8] sm:$0xff]
        %v1815 = vld [vmem:[%s294 + $0xd0] sm:$0xff]
        %v1816 = vld [vmem:[%s294 + $0xd8] sm:$0xff]
        %v1817 = vld [vmem:[%s294 + $0xe0] sm:$0xff]
        %v1818 = vld [vmem:[%s294 + $0xe8] sm:$0xff]
        %v1819 = vld [vmem:[%s294 + $0xf0] sm:$0xff]
        %v1820 = vld [vmem:[%s294 + $0xf8] sm:$0xff]
        %v1853 = vunpack.c.l.b16 %v1789
        %v1854 = vunpack.c.h.b16 %v1789
        %v1855 = vunpack.c.l.b16 %v1790
        %v1856 = vunpack.c.h.b16 %v1790
        %v1857 = vunpack.c.l.b16 %v1791
        %v1858 = vunpack.c.h.b16 %v1791
        %v1859 = vunpack.c.l.b16 %v1792
        %v1860 = vunpack.c.h.b16 %v1792
        %v1861 = vunpack.c.l.b16 %v1793
        %v1862 = vunpack.c.h.b16 %v1793
        %v1863 = vunpack.c.l.b16 %v1794
        %v1864 = vunpack.c.h.b16 %v1794
        %v1865 = vunpack.c.l.b16 %v1795
        %v1866 = vunpack.c.h.b16 %v1795
        %v1867 = vunpack.c.l.b16 %v1796
        %v1868 = vunpack.c.h.b16 %v1796
        %v1869 = vunpack.c.l.b16 %v1797
        %v1870 = vunpack.c.h.b16 %v1797
        %v1871 = vunpack.c.l.b16 %v1798
        %v1872 = vunpack.c.h.b16 %v1798
        %v1873 = vunpack.c.l.b16 %v1799
        %v1874 = vunpack.c.h.b16 %v1799
        %v1875 = vunpack.c.l.b16 %v1800
        %v1876 = vunpack.c.h.b16 %v1800
        %v1877 = vunpack.c.l.b16 %v1801
        %v1878 = vunpack.c.h.b16 %v1801
        %v1879 = vunpack.c.l.b16 %v1802
        %v1880 = vunpack.c.h.b16 %v1802
        %v1881 = vunpack.c.l.b16 %v1803
        %v1882 = vunpack.c.h.b16 %v1803
        %v1883 = vunpack.c.l.b16 %v1804
        %v1884 = vunpack.c.h.b16 %v1804
        %v1885 = vunpack.c.l.b16 %v1805
        %v1886 = vunpack.c.h.b16 %v1805
        %v1887 = vunpack.c.l.b16 %v1806
        %v1888 = vunpack.c.h.b16 %v1806
        %v1889 = vunpack.c.l.b16 %v1807
        %v1890 = vunpack.c.h.b16 %v1807
        %v1891 = vunpack.c.l.b16 %v1808
        %v1892 = vunpack.c.h.b16 %v1808
        %v1893 = vunpack.c.l.b16 %v1809
        %v1894 = vunpack.c.h.b16 %v1809
        %v1895 = vunpack.c.l.b16 %v1810
        %v1896 = vunpack.c.h.b16 %v1810
        %v1897 = vunpack.c.l.b16 %v1811
        %v1898 = vunpack.c.h.b16 %v1811
        %v1899 = vunpack.c.l.b16 %v1812
        %v1900 = vunpack.c.h.b16 %v1812
        %v1901 = vunpack.c.l.b16 %v1813
        %v1902 = vunpack.c.h.b16 %v1813
        %v1903 = vunpack.c.l.b16 %v1814
        %v1904 = vunpack.c.h.b16 %v1814
        %v1905 = vunpack.c.l.b16 %v1815
        %v1906 = vunpack.c.h.b16 %v1815
        %v1907 = vunpack.c.l.b16 %v1816
        %v1908 = vunpack.c.h.b16 %v1816
        %v1909 = vunpack.c.l.b16 %v1817
        %v1910 = vunpack.c.h.b16 %v1817
        %v1911 = vunpack.c.l.b16 %v1818
        %v1912 = vunpack.c.h.b16 %v1818
        %v1913 = vunpack.c.l.b16 %v1819
        %v1914 = vunpack.c.h.b16 %v1819
        %v1915 = vunpack.c.l.b16 %v1820
        %v1916 = vunpack.c.h.b16 %v1820
        %v1917 = vpack.c.b16 %v1857, %v1853
        %v1918 = vpack.c.b16 %v1858, %v1854
        %v1919 = vpack.c.b16 %v1859, %v1855
        %v1920 = vpack.c.b16 %v1860, %v1856
        %v1921 = vpack.c.b16 %v1865, %v1861
        %v1922 = vpack.c.b16 %v1866, %v1862
        %v1923 = vpack.c.b16 %v1867, %v1863
        %v1924 = vpack.c.b16 %v1868, %v1864
        %v1925 = vpack.c.b16 %v1873, %v1869
        %v1926 = vpack.c.b16 %v1874, %v1870
        %v1927 = vpack.c.b16 %v1875, %v1871
        %v1928 = vpack.c.b16 %v1876, %v1872
        %v1929 = vpack.c.b16 %v1881, %v1877
        %v1930 = vpack.c.b16 %v1882, %v1878
        %v1931 = vpack.c.b16 %v1883, %v1879
        %v1932 = vpack.c.b16 %v1884, %v1880
        %v1933 = vpack.c.b16 %v1889, %v1885
        %v1934 = vpack.c.b16 %v1890, %v1886
        %v1935 = vpack.c.b16 %v1891, %v1887
        %v1936 = vpack.c.b16 %v1892, %v1888
        %v1937 = vpack.c.b16 %v1897, %v1893
        %v1938 = vpack.c.b16 %v1898, %v1894
        %v1939 = vpack.c.b16 %v1899, %v1895
        %v1940 = vpack.c.b16 %v1900, %v1896
        %v1941 = vpack.c.b16 %v1905, %v1901
        %v1942 = vpack.c.b16 %v1906, %v1902
        %v1943 = vpack.c.b16 %v1907, %v1903
        %v1944 = vpack.c.b16 %v1908, %v1904
        %v1945 = vpack.c.b16 %v1913, %v1909
        %v1946 = vpack.c.b16 %v1914, %v1910
        %v1947 = vpack.c.b16 %v1915, %v1911
        %v1948 = vpack.c.b16 %v1916, %v1912
        %1981 = vmatpush.bf16.msra.mxu0 %v1945
        %1982 = vmatpush.bf16.msra.mxu0 %v1941
        %1983 = vmatpush.bf16.msra.mxu0 %v1937
        %1984 = vmatpush.bf16.msra.mxu0 %v1933
        %1985 = vmatpush.bf16.msra.mxu0 %v1929
        %1986 = vmatpush.bf16.msra.mxu0 %v1925
        %1987 = vmatpush.bf16.msra.mxu0 %v1921
        %1988 = vmatpush.bf16.msra.mxu0 %v1917
        %1989 = vmatmul.bf16.gmra.mxu0 %v1788
        %v1990 = vpop.f32.mrf.mxu0
        %v1991 = vadd.f32 0.0, %v1990
        %v1992 = vpop.f32.mrf.mxu0
        %1993 = vdwg.mxu0
        %1994 = vmatpush.bf16.msra.mxu0 %v1946
        %1995 = vmatpush.bf16.msra.mxu0 %v1942
        %1996 = vmatpush.bf16.msra.mxu0 %v1938
        %1997 = vmatpush.bf16.msra.mxu0 %v1934
        %1998 = vmatpush.bf16.msra.mxu0 %v1930
        %1999 = vmatpush.bf16.msra.mxu0 %v1926
        %2000 = vmatpush.bf16.msra.mxu0 %v1922
        %2001 = vmatpush.bf16.msra.mxu0 %v1918
        %2002 = vmatmul.bf16.gmra.mxu0 %v1788
        %v2003 = vpop.f32.mrf.mxu0
        %v2004 = vadd.f32 0.0, %v2003
        %v2005 = vpop.f32.mrf.mxu0
        %2006 = vdwg.mxu0
        %2007 = vmatpush.bf16.msra.mxu0 %v1947
        %2008 = vmatpush.bf16.msra.mxu0 %v1943
        %2009 = vmatpush.bf16.msra.mxu0 %v1939
        %2010 = vmatpush.bf16.msra.mxu0 %v1935
        %2011 = vmatpush.bf16.msra.mxu0 %v1931
        %2012 = vmatpush.bf16.msra.mxu0 %v1927
        %2013 = vmatpush.bf16.msra.mxu0 %v1923
        %2014 = vmatpush.bf16.msra.mxu0 %v1919
        %2015 = vmatmul.bf16.gmra.mxu0 %v1788
        %v2016 = vpop.f32.mrf.mxu0
        %v2017 = vadd.f32 0.0, %v2016
        %v2018 = vpop.f32.mrf.mxu0
        %2019 = vdwg.mxu0
        %2020 = vmatpush.bf16.msra.mxu0 %v1948
        %2021 = vmatpush.bf16.msra.mxu0 %v1944
        %2022 = vmatpush.bf16.msra.mxu0 %v1940
        %2023 = vmatpush.bf16.msra.mxu0 %v1936
        %2024 = vmatpush.bf16.msra.mxu0 %v1932
        %2025 = vmatpush.bf16.msra.mxu0 %v1928
        %2026 = vmatpush.bf16.msra.mxu0 %v1924
        %2027 = vmatpush.bf16.msra.mxu0 %v1920
        %2028 = vmatmul.bf16.gmra.mxu0 %v1788
        %v2029 = vpop.f32.mrf.mxu0
        %v2030 = vadd.f32 0.0, %v2029
        %v2031 = vpop.f32.mrf.mxu0
        %2032 = vdwg.mxu0
        %v2033 = vadd.f32 %v1780, %v1991
        %v2034 = vadd.f32 %v1781, %v2004
        %v2035 = vadd.f32 %v1782, %v2017
        %v2036 = vadd.f32 %v1783, %v2030
        %v2037 = vxor.u32 %v2033, 2147483648
        %v2038 = vxor.u32 %v2034, 2147483648
        %v2039 = vxor.u32 %v2035, 2147483648
        %v2040 = vmul.f32 %v2037, 1.442695
        %v2041 = vpow.pop %v2040
        %v2042 = vmul.f32 %v2038, 1.442695
        %v2043 = vpow.pop %v2042
        %v2044 = vmul.f32 %v2039, 1.442695
        %v2045 = vpow.pop %v2044
        %v2046 = vadd.f32 %v2041, 1.0
        %v2047 = vadd.f32 %v2043, 1.0
        %v2048 = vadd.f32 %v2045, 1.0
        %v2049 = vrcp.pop %v2046
        %v2050 = vmul.f32 %v2046, %v2049
        %v2051 = vsub.f32 1.0, %v2050
        %v2052 = vmul.f32 %v2049, %v2051
        %v2053 = vadd.f32 %v2049, %v2052
        %vm2054 = vweird.f32 %v2046
        %vm2055 = vweird.f32 %v2049
        %vm2056 = vmor %vm2054, %vm2055
        %v2057 = vsel %vm2056, %v2049, %v2053
        %v2058 = vand.u32 2147483647, %v2046
        %vm2059 = vcmp.eq.f32.partialorder %v2058, 8.507059e+37
        %v2060 = vand.u32 %v2046, 2147483648
        %v2061 = vor.u32 1.1754944e-38, %v2060
        %v2062 = vsel %vm2059, %v2061, %v2057
        %v2063 = vmul.f32 1.0, %v2062
        %v2064 = vrcp.pop %v2047
        %v2065 = vmul.f32 %v2047, %v2064
        %v2066 = vsub.f32 1.0, %v2065
        %v2067 = vmul.f32 %v2064, %v2066
        %v2068 = vadd.f32 %v2064, %v2067
        %vm2069 = vweird.f32 %v2047
        %vm2070 = vweird.f32 %v2064
        %vm2071 = vmor %vm2069, %vm2070
        %v2072 = vsel %vm2071, %v2064, %v2068
        %v2073 = vand.u32 2147483647, %v2047
        %vm2074 = vcmp.eq.f32.partialorder %v2073, 8.507059e+37
        %v2075 = vand.u32 %v2047, 2147483648
        %v2076 = vor.u32 1.1754944e-38, %v2075
        %v2077 = vsel %vm2074, %v2076, %v2072
        %v2078 = vmul.f32 1.0, %v2077
        %v2079 = vrcp.pop %v2048
        %v2080 = vmul.f32 %v2048, %v2079
        %v2081 = vsub.f32 1.0, %v2080
        %v2082 = vmul.f32 %v2079, %v2081
        %v2083 = vadd.f32 %v2079, %v2082
        %vm2084 = vweird.f32 %v2048
        %vm2085 = vweird.f32 %v2079
        %vm2086 = vmor %vm2084, %vm2085
        %v2087 = vsel %vm2086, %v2079, %v2083
        %v2088 = vand.u32 2147483647, %v2048
        %vm2089 = vcmp.eq.f32.partialorder %v2088, 8.507059e+37
        %v2090 = vand.u32 %v2048, 2147483648
        %v2091 = vor.u32 1.1754944e-38, %v2090
        %v2092 = vsel %vm2089, %v2091, %v2087
        %v2093 = vmul.f32 1.0, %v2092
        %v2094 = vtanh.pop %v2036
        %v2095 = vmul.f32 %v2078, %v1774
        %v2096 = vmul.f32 %v2063, %v2094
        %v2097 = vadd.f32 %v2095, %v2096
        %v2098 = vtanh.pop %v2097
        %v2099 = vmul.f32 %v2093, %v2098
        %v2100 = vmul.f32 %v1787, %v2099
        %v2101 = vpack.c.bf16 %v2100, %v2100
        %s2102 = scalar_lea.vmem [#allocation11], 8
        %2103 = vst [vmem:[%s2102] sm:$0xf] %v2101
        %v2104 = vsub.f32 %v2099, %v1771
        %v2105 = vmul.f32 %v1787, %v2104
        %v2106 = vadd.f32 %v1771, %v2105
        %v2107 = vsub.f32 %v2097, %v1774
        %v2108 = vmul.f32 %v1787, %v2107
        %v2109 = vadd.f32 %v1774, %v2108
        %s2110 = smul.u32 3, 4
        %s2111 = smul.addr %s2110, 4
        %s2112 = scalar_lea.vmem [#allocation2], %s2111
        %v2113 = vld [vmem:[%s2112] sm:$0xff]
        %v2114 = vld [vmem:[%s2112 + $0x8] sm:$0xff]
        %v2115 = vunpack.c.l.bf16 %v2113
        %v2116 = vunpack.c.h.bf16 %v2113
        %v2117 = vunpack.c.l.bf16 %v2114
        %v2118 = vunpack.c.h.bf16 %v2114
        %v2119 = vld [vmem:[#allocation3] sm:$0xff]
        %vm2120 = vcmp.gt.f32.partialorder %v2119, 3.0
        %v2121 = vsel %vm2120, 1, 0
        %v2122 = vcvt.s32.f32 %v2121
        %v2123 = vpack.c.bf16 %v2106, %v2106
        %v2124 = vld [vmem:[%s294] sm:$0xff]
        %v2125 = vld [vmem:[%s294 + $0x8] sm:$0xff]
        %v2126 = vld [vmem:[%s294 + $0x10] sm:$0xff]
        %v2127 = vld [vmem:[%s294 + $0x18] sm:$0xff]
        %v2128 = vld [vmem:[%s294 + $0x20] sm:$0xff]
        %v2129 = vld [vmem:[%s294 + $0x28] sm:$0xff]
        %v2130 = vld [vmem:[%s294 + $0x30] sm:$0xff]
        %v2131 = vld [vmem:[%s294 + $0x38] sm:$0xff]
        %v2132 = vld [vmem:[%s294 + $0x40] sm:$0xff]
        %v2133 = vld [vmem:[%s294 + $0x48] sm:$0xff]
        %v2134 = vld [vmem:[%s294 + $0x50] sm:$0xff]
        %v2135 = vld [vmem:[%s294 + $0x58] sm:$0xff]
        %v2136 = vld [vmem:[%s294 + $0x60] sm:$0xff]
        %v2137 = vld [vmem:[%s294 + $0x68] sm:$0xff]
        %v2138 = vld [vmem:[%s294 + $0x70] sm:$0xff]
        %v2139 = vld [vmem:[%s294 + $0x78] sm:$0xff]
        %v2140 = vld [vmem:[%s294 + $0x80] sm:$0xff]
        %v2141 = vld [vmem:[%s294 + $0x88] sm:$0xff]
        %v2142 = vld [vmem:[%s294 + $0x90] sm:$0xff]
        %v2143 = vld [vmem:[%s294 + $0x98] sm:$0xff]
        %v2144 = vld [vmem:[%s294 + $0xa0] sm:$0xff]
        %v2145 = vld [vmem:[%s294 + $0xa8] sm:$0xff]
        %v2146 = vld [vmem:[%s294 + $0xb0] sm:$0xff]
        %v2147 = vld [vmem:[%s294 + $0xb8] sm:$0xff]
        %v2148 = vld [vmem:[%s294 + $0xc0] sm:$0xff]
        %v2149 = vld [vmem:[%s294 + $0xc8] sm:$0xff]
        %v2150 = vld [vmem:[%s294 + $0xd0] sm:$0xff]
        %v2151 = vld [vmem:[%s294 + $0xd8] sm:$0xff]
        %v2152 = vld [vmem:[%s294 + $0xe0] sm:$0xff]
        %v2153 = vld [vmem:[%s294 + $0xe8] sm:$0xff]
        %v2154 = vld [vmem:[%s294 + $0xf0] sm:$0xff]
        %v2155 = vld [vmem:[%s294 + $0xf8] sm:$0xff]
        %v2188 = vunpack.c.l.b16 %v2124
        %v2189 = vunpack.c.h.b16 %v2124
        %v2190 = vunpack.c.l.b16 %v2125
        %v2191 = vunpack.c.h.b16 %v2125
        %v2192 = vunpack.c.l.b16 %v2126
        %v2193 = vunpack.c.h.b16 %v2126
        %v2194 = vunpack.c.l.b16 %v2127
        %v2195 = vunpack.c.h.b16 %v2127
        %v2196 = vunpack.c.l.b16 %v2128
        %v2197 = vunpack.c.h.b16 %v2128
        %v2198 = vunpack.c.l.b16 %v2129
        %v2199 = vunpack.c.h.b16 %v2129
        %v2200 = vunpack.c.l.b16 %v2130
        %v2201 = vunpack.c.h.b16 %v2130
        %v2202 = vunpack.c.l.b16 %v2131
        %v2203 = vunpack.c.h.b16 %v2131
        %v2204 = vunpack.c.l.b16 %v2132
        %v2205 = vunpack.c.h.b16 %v2132
        %v2206 = vunpack.c.l.b16 %v2133
        %v2207 = vunpack.c.h.b16 %v2133
        %v2208 = vunpack.c.l.b16 %v2134
        %v2209 = vunpack.c.h.b16 %v2134
        %v2210 = vunpack.c.l.b16 %v2135
        %v2211 = vunpack.c.h.b16 %v2135
        %v2212 = vunpack.c.l.b16 %v2136
        %v2213 = vunpack.c.h.b16 %v2136
        %v2214 = vunpack.c.l.b16 %v2137
        %v2215 = vunpack.c.h.b16 %v2137
        %v2216 = vunpack.c.l.b16 %v2138
        %v2217 = vunpack.c.h.b16 %v2138
        %v2218 = vunpack.c.l.b16 %v2139
        %v2219 = vunpack.c.h.b16 %v2139
        %v2220 = vunpack.c.l.b16 %v2140
        %v2221 = vunpack.c.h.b16 %v2140
        %v2222 = vunpack.c.l.b16 %v2141
        %v2223 = vunpack.c.h.b16 %v2141
        %v2224 = vunpack.c.l.b16 %v2142
        %v2225 = vunpack.c.h.b16 %v2142
        %v2226 = vunpack.c.l.b16 %v2143
        %v2227 = vunpack.c.h.b16 %v2143
        %v2228 = vunpack.c.l.b16 %v2144
        %v2229 = vunpack.c.h.b16 %v2144
        %v2230 = vunpack.c.l.b16 %v2145
        %v2231 = vunpack.c.h.b16 %v2145
        %v2232 = vunpack.c.l.b16 %v2146
        %v2233 = vunpack.c.h.b16 %v2146
        %v2234 = vunpack.c.l.b16 %v2147
        %v2235 = vunpack.c.h.b16 %v2147
        %v2236 = vunpack.c.l.b16 %v2148
        %v2237 = vunpack.c.h.b16 %v2148
        %v2238 = vunpack.c.l.b16 %v2149
        %v2239 = vunpack.c.h.b16 %v2149
        %v2240 = vunpack.c.l.b16 %v2150
        %v2241 = vunpack.c.h.b16 %v2150
        %v2242 = vunpack.c.l.b16 %v2151
        %v2243 = vunpack.c.h.b16 %v2151
        %v2244 = vunpack.c.l.b16 %v2152
        %v2245 = vunpack.c.h.b16 %v2152
        %v2246 = vunpack.c.l.b16 %v2153
        %v2247 = vunpack.c.h.b16 %v2153
        %v2248 = vunpack.c.l.b16 %v2154
        %v2249 = vunpack.c.h.b16 %v2154
        %v2250 = vunpack.c.l.b16 %v2155
        %v2251 = vunpack.c.h.b16 %v2155
        %v2252 = vpack.c.b16 %v2192, %v2188
        %v2253 = vpack.c.b16 %v2193, %v2189
        %v2254 = vpack.c.b16 %v2194, %v2190
        %v2255 = vpack.c.b16 %v2195, %v2191
        %v2256 = vpack.c.b16 %v2200, %v2196
        %v2257 = vpack.c.b16 %v2201, %v2197
        %v2258 = vpack.c.b16 %v2202, %v2198
        %v2259 = vpack.c.b16 %v2203, %v2199
        %v2260 = vpack.c.b16 %v2208, %v2204
        %v2261 = vpack.c.b16 %v2209, %v2205
        %v2262 = vpack.c.b16 %v2210, %v2206
        %v2263 = vpack.c.b16 %v2211, %v2207
        %v2264 = vpack.c.b16 %v2216, %v2212
        %v2265 = vpack.c.b16 %v2217, %v2213
        %v2266 = vpack.c.b16 %v2218, %v2214
        %v2267 = vpack.c.b16 %v2219, %v2215
        %v2268 = vpack.c.b16 %v2224, %v2220
        %v2269 = vpack.c.b16 %v2225, %v2221
        %v2270 = vpack.c.b16 %v2226, %v2222
        %v2271 = vpack.c.b16 %v2227, %v2223
        %v2272 = vpack.c.b16 %v2232, %v2228
        %v2273 = vpack.c.b16 %v2233, %v2229
        %v2274 = vpack.c.b16 %v2234, %v2230
        %v2275 = vpack.c.b16 %v2235, %v2231
        %v2276 = vpack.c.b16 %v2240, %v2236
        %v2277 = vpack.c.b16 %v2241, %v2237
        %v2278 = vpack.c.b16 %v2242, %v2238
        %v2279 = vpack.c.b16 %v2243, %v2239
        %v2280 = vpack.c.b16 %v2248, %v2244
        %v2281 = vpack.c.b16 %v2249, %v2245
        %v2282 = vpack.c.b16 %v2250, %v2246
        %v2283 = vpack.c.b16 %v2251, %v2247
        %2316 = vmatpush.bf16.msra.mxu0 %v2280
        %2317 = vmatpush.bf16.msra.mxu0 %v2276
        %2318 = vmatpush.bf16.msra.mxu0 %v2272
        %2319 = vmatpush.bf16.msra.mxu0 %v2268
        %2320 = vmatpush.bf16.msra.mxu0 %v2264
        %2321 = vmatpush.bf16.msra.mxu0 %v2260
        %2322 = vmatpush.bf16.msra.mxu0 %v2256
        %2323 = vmatpush.bf16.msra.mxu0 %v2252
        %2324 = vmatmul.bf16.gmra.mxu0 %v2123
        %v2325 = vpop.f32.mrf.mxu0
        %v2326 = vadd.f32 0.0, %v2325
        %v2327 = vpop.f32.mrf.mxu0
        %2328 = vdwg.mxu0
        %2329 = vmatpush.bf16.msra.mxu0 %v2281
        %2330 = vmatpush.bf16.msra.mxu0 %v2277
        %2331 = vmatpush.bf16.msra.mxu0 %v2273
        %2332 = vmatpush.bf16.msra.mxu0 %v2269
        %2333 = vmatpush.bf16.msra.mxu0 %v2265
        %2334 = vmatpush.bf16.msra.mxu0 %v2261
        %2335 = vmatpush.bf16.msra.mxu0 %v2257
        %2336 = vmatpush.bf16.msra.mxu0 %v2253
        %2337 = vmatmul.bf16.gmra.mxu0 %v2123
        %v2338 = vpop.f32.mrf.mxu0
        %v2339 = vadd.f32 0.0, %v2338
        %v2340 = vpop.f32.mrf.mxu0
        %2341 = vdwg.mxu0
        %2342 = vmatpush.bf16.msra.mxu0 %v2282
        %2343 = vmatpush.bf16.msra.mxu0 %v2278
        %2344 = vmatpush.bf16.msra.mxu0 %v2274
        %2345 = vmatpush.bf16.msra.mxu0 %v2270
        %2346 = vmatpush.bf16.msra.mxu0 %v2266
        %2347 = vmatpush.bf16.msra.mxu0 %v2262
        %2348 = vmatpush.bf16.msra.mxu0 %v2258
        %2349 = vmatpush.bf16.msra.mxu0 %v2254
        %2350 = vmatmul.bf16.gmra.mxu0 %v2123
        %v2351 = vpop.f32.mrf.mxu0
        %v2352 = vadd.f32 0.0, %v2351
        %v2353 = vpop.f32.mrf.mxu0
        %2354 = vdwg.mxu0
        %2355 = vmatpush.bf16.msra.mxu0 %v2283
        %2356 = vmatpush.bf16.msra.mxu0 %v2279
        %2357 = vmatpush.bf16.msra.mxu0 %v2275
        %2358 = vmatpush.bf16.msra.mxu0 %v2271
        %2359 = vmatpush.bf16.msra.mxu0 %v2267
        %2360 = vmatpush.bf16.msra.mxu0 %v2263
        %2361 = vmatpush.bf16.msra.mxu0 %v2259
        %2362 = vmatpush.bf16.msra.mxu0 %v2255
        %2363 = vmatmul.bf16.gmra.mxu0 %v2123
        %v2364 = vpop.f32.mrf.mxu0
        %v2365 = vadd.f32 0.0, %v2364
        %v2366 = vpop.f32.mrf.mxu0
        %2367 = vdwg.mxu0
        %v2368 = vadd.f32 %v2115, %v2326
        %v2369 = vadd.f32 %v2116, %v2339
        %v2370 = vadd.f32 %v2117, %v2352
        %v2371 = vadd.f32 %v2118, %v2365
        %v2372 = vxor.u32 %v2368, 2147483648
        %v2373 = vxor.u32 %v2369, 2147483648
        %v2374 = vxor.u32 %v2370, 2147483648
        %v2375 = vmul.f32 %v2372, 1.442695
        %v2376 = vpow.pop %v2375
        %v2377 = vmul.f32 %v2373, 1.442695
        %v2378 = vpow.pop %v2377
        %v2379 = vmul.f32 %v2374, 1.442695
        %v2380 = vpow.pop %v2379
        %v2381 = vadd.f32 %v2376, 1.0
        %v2382 = vadd.f32 %v2378, 1.0
        %v2383 = vadd.f32 %v2380, 1.0
        %v2384 = vrcp.pop %v2381
        %v2385 = vmul.f32 %v2381, %v2384
        %v2386 = vsub.f32 1.0, %v2385
        %v2387 = vmul.f32 %v2384, %v2386
        %v2388 = vadd.f32 %v2384, %v2387
        %vm2389 = vweird.f32 %v2381
        %vm2390 = vweird.f32 %v2384
        %vm2391 = vmor %vm2389, %vm2390
        %v2392 = vsel %vm2391, %v2384, %v2388
        %v2393 = vand.u32 2147483647, %v2381
        %vm2394 = vcmp.eq.f32.partialorder %v2393, 8.507059e+37
        %v2395 = vand.u32 %v2381, 2147483648
        %v2396 = vor.u32 1.1754944e-38, %v2395
        %v2397 = vsel %vm2394, %v2396, %v2392
        %v2398 = vmul.f32 1.0, %v2397
        %v2399 = vrcp.pop %v2382
        %v2400 = vmul.f32 %v2382, %v2399
        %v2401 = vsub.f32 1.0, %v2400
        %v2402 = vmul.f32 %v2399, %v2401
        %v2403 = vadd.f32 %v2399, %v2402
        %vm2404 = vweird.f32 %v2382
        %vm2405 = vweird.f32 %v2399
        %vm2406 = vmor %vm2404, %vm2405
        %v2407 = vsel %vm2406, %v2399, %v2403
        %v2408 = vand.u32 2147483647, %v2382
        %vm2409 = vcmp.eq.f32.partialorder %v2408, 8.507059e+37
        %v2410 = vand.u32 %v2382, 2147483648
        %v2411 = vor.u32 1.1754944e-38, %v2410
        %v2412 = vsel %vm2409, %v2411, %v2407
        %v2413 = vmul.f32 1.0, %v2412
        %v2414 = vrcp.pop %v2383
        %v2415 = vmul.f32 %v2383, %v2414
        %v2416 = vsub.f32 1.0, %v2415
        %v2417 = vmul.f32 %v2414, %v2416
        %v2418 = vadd.f32 %v2414, %v2417
        %vm2419 = vweird.f32 %v2383
        %vm2420 = vweird.f32 %v2414
        %vm2421 = vmor %vm2419, %vm2420
        %v2422 = vsel %vm2421, %v2414, %v2418
        %v2423 = vand.u32 2147483647, %v2383
        %vm2424 = vcmp.eq.f32.partialorder %v2423, 8.507059e+37
        %v2425 = vand.u32 %v2383, 2147483648
        %v2426 = vor.u32 1.1754944e-38, %v2425
        %v2427 = vsel %vm2424, %v2426, %v2422
        %v2428 = vmul.f32 1.0, %v2427
        %v2429 = vtanh.pop %v2371
        %v2430 = vmul.f32 %v2413, %v2109
        %v2431 = vmul.f32 %v2398, %v2429
        %v2432 = vadd.f32 %v2430, %v2431
        %v2433 = vtanh.pop %v2432
        %v2434 = vmul.f32 %v2428, %v2433
        %v2435 = vmul.f32 %v2122, %v2434
        %v2436 = vpack.c.bf16 %v2435, %v2435
        %s2437 = scalar_lea.vmem [#allocation11], 12
        %2438 = vst [vmem:[%s2437] sm:$0xf] %v2436
        %v2439 = vsub.f32 %v2434, %v2106
        %v2440 = vmul.f32 %v2122, %v2439
        %v2441 = vadd.f32 %v2106, %v2440
        %v2442 = vsub.f32 %v2432, %v2109
        %v2443 = vmul.f32 %v2122, %v2442
        %v2444 = vadd.f32 %v2109, %v2443
        %s2445 = smul.u32 4, 4
        %s2446 = smul.addr %s2445, 4
        %s2447 = scalar_lea.vmem [#allocation2], %s2446
        %v2448 = vld [vmem:[%s2447] sm:$0xff]
        %v2449 = vld [vmem:[%s2447 + $0x8] sm:$0xff]
        %v2450 = vunpack.c.l.bf16 %v2448
        %v2451 = vunpack.c.h.bf16 %v2448
        %v2452 = vunpack.c.l.bf16 %v2449
        %v2453 = vunpack.c.h.bf16 %v2449
        %v2454 = vld [vmem:[#allocation3] sm:$0xff]
        %vm2455 = vcmp.gt.f32.partialorder %v2454, 4.0
        %v2456 = vsel %vm2455, 1, 0
        %v2457 = vcvt.s32.f32 %v2456
        %v2458 = vpack.c.bf16 %v2441, %v2441
        %v2459 = vld [vmem:[%s294] sm:$0xff]
        %v2460 = vld [vmem:[%s294 + $0x8] sm:$0xff]
        %v2461 = vld [vmem:[%s294 + $0x10] sm:$0xff]
        %v2462 = vld [vmem:[%s294 + $0x18] sm:$0xff]
        %v2463 = vld [vmem:[%s294 + $0x20] sm:$0xff]
        %v2464 = vld [vmem:[%s294 + $0x28] sm:$0xff]
        %v2465 = vld [vmem:[%s294 + $0x30] sm:$0xff]
        %v2466 = vld [vmem:[%s294 + $0x38] sm:$0xff]
        %v2467 = vld [vmem:[%s294 + $0x40] sm:$0xff]
        %v2468 = vld [vmem:[%s294 + $0x48] sm:$0xff]
        %v2469 = vld [vmem:[%s294 + $0x50] sm:$0xff]
        %v2470 = vld [vmem:[%s294 + $0x58] sm:$0xff]
        %v2471 = vld [vmem:[%s294 + $0x60] sm:$0xff]
        %v2472 = vld [vmem:[%s294 + $0x68] sm:$0xff]
        %v2473 = vld [vmem:[%s294 + $0x70] sm:$0xff]
        %v2474 = vld [vmem:[%s294 + $0x78] sm:$0xff]
        %v2475 = vld [vmem:[%s294 + $0x80] sm:$0xff]
        %v2476 = vld [vmem:[%s294 + $0x88] sm:$0xff]
        %v2477 = vld [vmem:[%s294 + $0x90] sm:$0xff]
        %v2478 = vld [vmem:[%s294 + $0x98] sm:$0xff]
        %v2479 = vld [vmem:[%s294 + $0xa0] sm:$0xff]
        %v2480 = vld [vmem:[%s294 + $0xa8] sm:$0xff]
        %v2481 = vld [vmem:[%s294 + $0xb0] sm:$0xff]
        %v2482 = vld [vmem:[%s294 + $0xb8] sm:$0xff]
        %v2483 = vld [vmem:[%s294 + $0xc0] sm:$0xff]
        %v2484 = vld [vmem:[%s294 + $0xc8] sm:$0xff]
        %v2485 = vld [vmem:[%s294 + $0xd0] sm:$0xff]
        %v2486 = vld [vmem:[%s294 + $0xd8] sm:$0xff]
        %v2487 = vld [vmem:[%s294 + $0xe0] sm:$0xff]
        %v2488 = vld [vmem:[%s294 + $0xe8] sm:$0xff]
        %v2489 = vld [vmem:[%s294 + $0xf0] sm:$0xff]
        %v2490 = vld [vmem:[%s294 + $0xf8] sm:$0xff]
        %v2523 = vunpack.c.l.b16 %v2459
        %v2524 = vunpack.c.h.b16 %v2459
        %v2525 = vunpack.c.l.b16 %v2460
        %v2526 = vunpack.c.h.b16 %v2460
        %v2527 = vunpack.c.l.b16 %v2461
        %v2528 = vunpack.c.h.b16 %v2461
        %v2529 = vunpack.c.l.b16 %v2462
        %v2530 = vunpack.c.h.b16 %v2462
        %v2531 = vunpack.c.l.b16 %v2463
        %v2532 = vunpack.c.h.b16 %v2463
        %v2533 = vunpack.c.l.b16 %v2464
        %v2534 = vunpack.c.h.b16 %v2464
        %v2535 = vunpack.c.l.b16 %v2465
        %v2536 = vunpack.c.h.b16 %v2465
        %v2537 = vunpack.c.l.b16 %v2466
        %v2538 = vunpack.c.h.b16 %v2466
        %v2539 = vunpack.c.l.b16 %v2467
        %v2540 = vunpack.c.h.b16 %v2467
        %v2541 = vunpack.c.l.b16 %v2468
        %v2542 = vunpack.c.h.b16 %v2468
        %v2543 = vunpack.c.l.b16 %v2469
        %v2544 = vunpack.c.h.b16 %v2469
        %v2545 = vunpack.c.l.b16 %v2470
        %v2546 = vunpack.c.h.b16 %v2470
        %v2547 = vunpack.c.l.b16 %v2471
        %v2548 = vunpack.c.h.b16 %v2471
        %v2549 = vunpack.c.l.b16 %v2472
        %v2550 = vunpack.c.h.b16 %v2472
        %v2551 = vunpack.c.l.b16 %v2473
        %v2552 = vunpack.c.h.b16 %v2473
        %v2553 = vunpack.c.l.b16 %v2474
        %v2554 = vunpack.c.h.b16 %v2474
        %v2555 = vunpack.c.l.b16 %v2475
        %v2556 = vunpack.c.h.b16 %v2475
        %v2557 = vunpack.c.l.b16 %v2476
        %v2558 = vunpack.c.h.b16 %v2476
        %v2559 = vunpack.c.l.b16 %v2477
        %v2560 = vunpack.c.h.b16 %v2477
        %v2561 = vunpack.c.l.b16 %v2478
        %v2562 = vunpack.c.h.b16 %v2478
        %v2563 = vunpack.c.l.b16 %v2479
        %v2564 = vunpack.c.h.b16 %v2479
        %v2565 = vunpack.c.l.b16 %v2480
        %v2566 = vunpack.c.h.b16 %v2480
        %v2567 = vunpack.c.l.b16 %v2481
        %v2568 = vunpack.c.h.b16 %v2481
        %v2569 = vunpack.c.l.b16 %v2482
        %v2570 = vunpack.c.h.b16 %v2482
        %v2571 = vunpack.c.l.b16 %v2483
        %v2572 = vunpack.c.h.b16 %v2483
        %v2573 = vunpack.c.l.b16 %v2484
        %v2574 = vunpack.c.h.b16 %v2484
        %v2575 = vunpack.c.l.b16 %v2485
        %v2576 = vunpack.c.h.b16 %v2485
        %v2577 = vunpack.c.l.b16 %v2486
        %v2578 = vunpack.c.h.b16 %v2486
        %v2579 = vunpack.c.l.b16 %v2487
        %v2580 = vunpack.c.h.b16 %v2487
        %v2581 = vunpack.c.l.b16 %v2488
        %v2582 = vunpack.c.h.b16 %v2488
        %v2583 = vunpack.c.l.b16 %v2489
        %v2584 = vunpack.c.h.b16 %v2489
        %v2585 = vunpack.c.l.b16 %v2490
        %v2586 = vunpack.c.h.b16 %v2490
        %v2587 = vpack.c.b16 %v2527, %v2523
        %v2588 = vpack.c.b16 %v2528, %v2524
        %v2589 = vpack.c.b16 %v2529, %v2525
        %v2590 = vpack.c.b16 %v2530, %v2526
        %v2591 = vpack.c.b16 %v2535, %v2531
        %v2592 = vpack.c.b16 %v2536, %v2532
        %v2593 = vpack.c.b16 %v2537, %v2533
        %v2594 = vpack.c.b16 %v2538, %v2534
        %v2595 = vpack.c.b16 %v2543, %v2539
        %v2596 = vpack.c.b16 %v2544, %v2540
        %v2597 = vpack.c.b16 %v2545, %v2541
        %v2598 = vpack.c.b16 %v2546, %v2542
        %v2599 = vpack.c.b16 %v2551, %v2547
        %v2600 = vpack.c.b16 %v2552, %v2548
        %v2601 = vpack.c.b16 %v2553, %v2549
        %v2602 = vpack.c.b16 %v2554, %v2550
        %v2603 = vpack.c.b16 %v2559, %v2555
        %v2604 = vpack.c.b16 %v2560, %v2556
        %v2605 = vpack.c.b16 %v2561, %v2557
        %v2606 = vpack.c.b16 %v2562, %v2558
        %v2607 = vpack.c.b16 %v2567, %v2563
        %v2608 = vpack.c.b16 %v2568, %v2564
        %v2609 = vpack.c.b16 %v2569, %v2565
        %v2610 = vpack.c.b16 %v2570, %v2566
        %v2611 = vpack.c.b16 %v2575, %v2571
        %v2612 = vpack.c.b16 %v2576, %v2572
        %v2613 = vpack.c.b16 %v2577, %v2573
        %v2614 = vpack.c.b16 %v2578, %v2574
        %v2615 = vpack.c.b16 %v2583, %v2579
        %v2616 = vpack.c.b16 %v2584, %v2580
        %v2617 = vpack.c.b16 %v2585, %v2581
        %v2618 = vpack.c.b16 %v2586, %v2582
        %2651 = vmatpush.bf16.msra.mxu0 %v2615
        %2652 = vmatpush.bf16.msra.mxu0 %v2611
        %2653 = vmatpush.bf16.msra.mxu0 %v2607
        %2654 = vmatpush.bf16.msra.mxu0 %v2603
        %2655 = vmatpush.bf16.msra.mxu0 %v2599
        %2656 = vmatpush.bf16.msra.mxu0 %v2595
        %2657 = vmatpush.bf16.msra.mxu0 %v2591
        %2658 = vmatpush.bf16.msra.mxu0 %v2587
        %2659 = vmatmul.bf16.gmra.mxu0 %v2458
        %v2660 = vpop.f32.mrf.mxu0
        %v2661 = vadd.f32 0.0, %v2660
        %v2662 = vpop.f32.mrf.mxu0
        %2663 = vdwg.mxu0
        %2664 = vmatpush.bf16.msra.mxu0 %v2616
        %2665 = vmatpush.bf16.msra.mxu0 %v2612
        %2666 = vmatpush.bf16.msra.mxu0 %v2608
        %2667 = vmatpush.bf16.msra.mxu0 %v2604
        %2668 = vmatpush.bf16.msra.mxu0 %v2600
        %2669 = vmatpush.bf16.msra.mxu0 %v2596
        %2670 = vmatpush.bf16.msra.mxu0 %v2592
        %2671 = vmatpush.bf16.msra.mxu0 %v2588
        %2672 = vmatmul.bf16.gmra.mxu0 %v2458
        %v2673 = vpop.f32.mrf.mxu0
        %v2674 = vadd.f32 0.0, %v2673
        %v2675 = vpop.f32.mrf.mxu0
        %2676 = vdwg.mxu0
        %2677 = vmatpush.bf16.msra.mxu0 %v2617
        %2678 = vmatpush.bf16.msra.mxu0 %v2613
        %2679 = vmatpush.bf16.msra.mxu0 %v2609
        %2680 = vmatpush.bf16.msra.mxu0 %v2605
        %2681 = vmatpush.bf16.msra.mxu0 %v2601
        %2682 = vmatpush.bf16.msra.mxu0 %v2597
        %2683 = vmatpush.bf16.msra.mxu0 %v2593
        %2684 = vmatpush.bf16.msra.mxu0 %v2589
        %2685 = vmatmul.bf16.gmra.mxu0 %v2458
        %v2686 = vpop.f32.mrf.mxu0
        %v2687 = vadd.f32 0.0, %v2686
        %v2688 = vpop.f32.mrf.mxu0
        %2689 = vdwg.mxu0
        %2690 = vmatpush.bf16.msra.mxu0 %v2618
        %2691 = vmatpush.bf16.msra.mxu0 %v2614
        %2692 = vmatpush.bf16.msra.mxu0 %v2610
        %2693 = vmatpush.bf16.msra.mxu0 %v2606
        %2694 = vmatpush.bf16.msra.mxu0 %v2602
        %2695 = vmatpush.bf16.msra.mxu0 %v2598
        %2696 = vmatpush.bf16.msra.mxu0 %v2594
        %2697 = vmatpush.bf16.msra.mxu0 %v2590
        %2698 = vmatmul.bf16.gmra.mxu0 %v2458
        %v2699 = vpop.f32.mrf.mxu0
        %v2700 = vadd.f32 0.0, %v2699
        %v2701 = vpop.f32.mrf.mxu0
        %2702 = vdwg.mxu0
        %v2703 = vadd.f32 %v2450, %v2661
        %v2704 = vadd.f32 %v2451, %v2674
        %v2705 = vadd.f32 %v2452, %v2687
        %v2706 = vadd.f32 %v2453, %v2700
        %v2707 = vxor.u32 %v2703, 2147483648
        %v2708 = vxor.u32 %v2704, 2147483648
        %v2709 = vxor.u32 %v2705, 2147483648
        %v2710 = vmul.f32 %v2707, 1.442695
        %v2711 = vpow.pop %v2710
        %v2712 = vmul.f32 %v2708, 1.442695
        %v2713 = vpow.pop %v2712
        %v2714 = vmul.f32 %v2709, 1.442695
        %v2715 = vpow.pop %v2714
        %v2716 = vadd.f32 %v2711, 1.0
        %v2717 = vadd.f32 %v2713, 1.0
        %v2718 = vadd.f32 %v2715, 1.0
        %v2719 = vrcp.pop %v2716
        %v2720 = vmul.f32 %v2716, %v2719
        %v2721 = vsub.f32 1.0, %v2720
        %v2722 = vmul.f32 %v2719, %v2721
        %v2723 = vadd.f32 %v2719, %v2722
        %vm2724 = vweird.f32 %v2716
        %vm2725 = vweird.f32 %v2719
        %vm2726 = vmor %vm2724, %vm2725
        %v2727 = vsel %vm2726, %v2719, %v2723
        %v2728 = vand.u32 2147483647, %v2716
        %vm2729 = vcmp.eq.f32.partialorder %v2728, 8.507059e+37
        %v2730 = vand.u32 %v2716, 2147483648
        %v2731 = vor.u32 1.1754944e-38, %v2730
        %v2732 = vsel %vm2729, %v2731, %v2727
        %v2733 = vmul.f32 1.0, %v2732
        %v2734 = vrcp.pop %v2717
        %v2735 = vmul.f32 %v2717, %v2734
        %v2736 = vsub.f32 1.0, %v2735
        %v2737 = vmul.f32 %v2734, %v2736
        %v2738 = vadd.f32 %v2734, %v2737
        %vm2739 = vweird.f32 %v2717
        %vm2740 = vweird.f32 %v2734
        %vm2741 = vmor %vm2739, %vm2740
        %v2742 = vsel %vm2741, %v2734, %v2738
        %v2743 = vand.u32 2147483647, %v2717
        %vm2744 = vcmp.eq.f32.partialorder %v2743, 8.507059e+37
        %v2745 = vand.u32 %v2717, 2147483648
        %v2746 = vor.u32 1.1754944e-38, %v2745
        %v2747 = vsel %vm2744, %v2746, %v2742
        %v2748 = vmul.f32 1.0, %v2747
        %v2749 = vrcp.pop %v2718
        %v2750 = vmul.f32 %v2718, %v2749
        %v2751 = vsub.f32 1.0, %v2750
        %v2752 = vmul.f32 %v2749, %v2751
        %v2753 = vadd.f32 %v2749, %v2752
        %vm2754 = vweird.f32 %v2718
        %vm2755 = vweird.f32 %v2749
        %vm2756 = vmor %vm2754, %vm2755
        %v2757 = vsel %vm2756, %v2749, %v2753
        %v2758 = vand.u32 2147483647, %v2718
        %vm2759 = vcmp.eq.f32.partialorder %v2758, 8.507059e+37
        %v2760 = vand.u32 %v2718, 2147483648
        %v2761 = vor.u32 1.1754944e-38, %v2760
        %v2762 = vsel %vm2759, %v2761, %v2757
        %v2763 = vmul.f32 1.0, %v2762
        %v2764 = vtanh.pop %v2706
        %v2765 = vmul.f32 %v2748, %v2444
        %v2766 = vmul.f32 %v2733, %v2764
        %v2767 = vadd.f32 %v2765, %v2766
        %v2768 = vtanh.pop %v2767
        %v2769 = vmul.f32 %v2763, %v2768
        %v2770 = vmul.f32 %v2457, %v2769
        %v2771 = vpack.c.bf16 %v2770, %v2770
        %s2772 = scalar_lea.vmem [#allocation11], 16
        %2773 = vst [vmem:[%s2772] sm:$0xf] %v2771
        %v2774 = vsub.f32 %v2769, %v2441
        %v2775 = vmul.f32 %v2457, %v2774
        %v2776 = vadd.f32 %v2441, %v2775
        %v2777 = vsub.f32 %v2767, %v2444
        %v2778 = vmul.f32 %v2457, %v2777
        %v2779 = vadd.f32 %v2444, %v2778
        %s2780 = smul.u32 5, 4
        %s2781 = smul.addr %s2780, 4
        %s2782 = scalar_lea.vmem [#allocation2], %s2781
        %v2783 = vld [vmem:[%s2782] sm:$0xff]
        %v2784 = vld [vmem:[%s2782 + $0x8] sm:$0xff]
        %v2785 = vunpack.c.l.bf16 %v2783
        %v2786 = vunpack.c.h.bf16 %v2783
        %v2787 = vunpack.c.l.bf16 %v2784
        %v2788 = vunpack.c.h.bf16 %v2784
        %v2789 = vld [vmem:[#allocation3] sm:$0xff]
        %vm2790 = vcmp.gt.f32.partialorder %v2789, 5.0
        %v2791 = vsel %vm2790, 1, 0
        %v2792 = vcvt.s32.f32 %v2791
        %v2793 = vpack.c.bf16 %v2776, %v2776
        %v2794 = vld [vmem:[%s294] sm:$0xff]
        %v2795 = vld [vmem:[%s294 + $0x8] sm:$0xff]
        %v2796 = vld [vmem:[%s294 + $0x10] sm:$0xff]
        %v2797 = vld [vmem:[%s294 + $0x18] sm:$0xff]
        %v2798 = vld [vmem:[%s294 + $0x20] sm:$0xff]
        %v2799 = vld [vmem:[%s294 + $0x28] sm:$0xff]
        %v2800 = vld [vmem:[%s294 + $0x30] sm:$0xff]
        %v2801 = vld [vmem:[%s294 + $0x38] sm:$0xff]
        %v2802 = vld [vmem:[%s294 + $0x40] sm:$0xff]
        %v2803 = vld [vmem:[%s294 + $0x48] sm:$0xff]
        %v2804 = vld [vmem:[%s294 + $0x50] sm:$0xff]
        %v2805 = vld [vmem:[%s294 + $0x58] sm:$0xff]
        %v2806 = vld [vmem:[%s294 + $0x60] sm:$0xff]
        %v2807 = vld [vmem:[%s294 + $0x68] sm:$0xff]
        %v2808 = vld [vmem:[%s294 + $0x70] sm:$0xff]
        %v2809 = vld [vmem:[%s294 + $0x78] sm:$0xff]
        %v2810 = vld [vmem:[%s294 + $0x80] sm:$0xff]
        %v2811 = vld [vmem:[%s294 + $0x88] sm:$0xff]
        %v2812 = vld [vmem:[%s294 + $0x90] sm:$0xff]
        %v2813 = vld [vmem:[%s294 + $0x98] sm:$0xff]
        %v2814 = vld [vmem:[%s294 + $0xa0] sm:$0xff]
        %v2815 = vld [vmem:[%s294 + $0xa8] sm:$0xff]
        %v2816 = vld [vmem:[%s294 + $0xb0] sm:$0xff]
        %v2817 = vld [vmem:[%s294 + $0xb8] sm:$0xff]
        %v2818 = vld [vmem:[%s294 + $0xc0] sm:$0xff]
        %v2819 = vld [vmem:[%s294 + $0xc8] sm:$0xff]
        %v2820 = vld [vmem:[%s294 + $0xd0] sm:$0xff]
        %v2821 = vld [vmem:[%s294 + $0xd8] sm:$0xff]
        %v2822 = vld [vmem:[%s294 + $0xe0] sm:$0xff]
        %v2823 = vld [vmem:[%s294 + $0xe8] sm:$0xff]
        %v2824 = vld [vmem:[%s294 + $0xf0] sm:$0xff]
        %v2825 = vld [vmem:[%s294 + $0xf8] sm:$0xff]
        %v2858 = vunpack.c.l.b16 %v2794
        %v2859 = vunpack.c.h.b16 %v2794
        %v2860 = vunpack.c.l.b16 %v2795
        %v2861 = vunpack.c.h.b16 %v2795
        %v2862 = vunpack.c.l.b16 %v2796
        %v2863 = vunpack.c.h.b16 %v2796
        %v2864 = vunpack.c.l.b16 %v2797
        %v2865 = vunpack.c.h.b16 %v2797
        %v2866 = vunpack.c.l.b16 %v2798
        %v2867 = vunpack.c.h.b16 %v2798
        %v2868 = vunpack.c.l.b16 %v2799
        %v2869 = vunpack.c.h.b16 %v2799
        %v2870 = vunpack.c.l.b16 %v2800
        %v2871 = vunpack.c.h.b16 %v2800
        %v2872 = vunpack.c.l.b16 %v2801
        %v2873 = vunpack.c.h.b16 %v2801
        %v2874 = vunpack.c.l.b16 %v2802
        %v2875 = vunpack.c.h.b16 %v2802
        %v2876 = vunpack.c.l.b16 %v2803
        %v2877 = vunpack.c.h.b16 %v2803
        %v2878 = vunpack.c.l.b16 %v2804
        %v2879 = vunpack.c.h.b16 %v2804
        %v2880 = vunpack.c.l.b16 %v2805
        %v2881 = vunpack.c.h.b16 %v2805
        %v2882 = vunpack.c.l.b16 %v2806
        %v2883 = vunpack.c.h.b16 %v2806
        %v2884 = vunpack.c.l.b16 %v2807
        %v2885 = vunpack.c.h.b16 %v2807
        %v2886 = vunpack.c.l.b16 %v2808
        %v2887 = vunpack.c.h.b16 %v2808
        %v2888 = vunpack.c.l.b16 %v2809
        %v2889 = vunpack.c.h.b16 %v2809
        %v2890 = vunpack.c.l.b16 %v2810
        %v2891 = vunpack.c.h.b16 %v2810
        %v2892 = vunpack.c.l.b16 %v2811
        %v2893 = vunpack.c.h.b16 %v2811
        %v2894 = vunpack.c.l.b16 %v2812
        %v2895 = vunpack.c.h.b16 %v2812
        %v2896 = vunpack.c.l.b16 %v2813
        %v2897 = vunpack.c.h.b16 %v2813
        %v2898 = vunpack.c.l.b16 %v2814
        %v2899 = vunpack.c.h.b16 %v2814
        %v2900 = vunpack.c.l.b16 %v2815
        %v2901 = vunpack.c.h.b16 %v2815
        %v2902 = vunpack.c.l.b16 %v2816
        %v2903 = vunpack.c.h.b16 %v2816
        %v2904 = vunpack.c.l.b16 %v2817
        %v2905 = vunpack.c.h.b16 %v2817
        %v2906 = vunpack.c.l.b16 %v2818
        %v2907 = vunpack.c.h.b16 %v2818
        %v2908 = vunpack.c.l.b16 %v2819
        %v2909 = vunpack.c.h.b16 %v2819
        %v2910 = vunpack.c.l.b16 %v2820
        %v2911 = vunpack.c.h.b16 %v2820
        %v2912 = vunpack.c.l.b16 %v2821
        %v2913 = vunpack.c.h.b16 %v2821
        %v2914 = vunpack.c.l.b16 %v2822
        %v2915 = vunpack.c.h.b16 %v2822
        %v2916 = vunpack.c.l.b16 %v2823
        %v2917 = vunpack.c.h.b16 %v2823
        %v2918 = vunpack.c.l.b16 %v2824
        %v2919 = vunpack.c.h.b16 %v2824
        %v2920 = vunpack.c.l.b16 %v2825
        %v2921 = vunpack.c.h.b16 %v2825
        %v2922 = vpack.c.b16 %v2862, %v2858
        %v2923 = vpack.c.b16 %v2863, %v2859
        %v2924 = vpack.c.b16 %v2864, %v2860
        %v2925 = vpack.c.b16 %v2865, %v2861
        %v2926 = vpack.c.b16 %v2870, %v2866
        %v2927 = vpack.c.b16 %v2871, %v2867
        %v2928 = vpack.c.b16 %v2872, %v2868
        %v2929 = vpack.c.b16 %v2873, %v2869
        %v2930 = vpack.c.b16 %v2878, %v2874
        %v2931 = vpack.c.b16 %v2879, %v2875
        %v2932 = vpack.c.b16 %v2880, %v2876
        %v2933 = vpack.c.b16 %v2881, %v2877
        %v2934 = vpack.c.b16 %v2886, %v2882
        %v2935 = vpack.c.b16 %v2887, %v2883
        %v2936 = vpack.c.b16 %v2888, %v2884
        %v2937 = vpack.c.b16 %v2889, %v2885
        %v2938 = vpack.c.b16 %v2894, %v2890
        %v2939 = vpack.c.b16 %v2895, %v2891
        %v2940 = vpack.c.b16 %v2896, %v2892
        %v2941 = vpack.c.b16 %v2897, %v2893
        %v2942 = vpack.c.b16 %v2902, %v2898
        %v2943 = vpack.c.b16 %v2903, %v2899
        %v2944 = vpack.c.b16 %v2904, %v2900
        %v2945 = vpack.c.b16 %v2905, %v2901
        %v2946 = vpack.c.b16 %v2910, %v2906
        %v2947 = vpack.c.b16 %v2911, %v2907
        %v2948 = vpack.c.b16 %v2912, %v2908
        %v2949 = vpack.c.b16 %v2913, %v2909
        %v2950 = vpack.c.b16 %v2918, %v2914
        %v2951 = vpack.c.b16 %v2919, %v2915
        %v2952 = vpack.c.b16 %v2920, %v2916
        %v2953 = vpack.c.b16 %v2921, %v2917
        %2986 = vmatpush.bf16.msra.mxu0 %v2950
        %2987 = vmatpush.bf16.msra.mxu0 %v2946
        %2988 = vmatpush.bf16.msra.mxu0 %v2942
        %2989 = vmatpush.bf16.msra.mxu0 %v2938
        %2990 = vmatpush.bf16.msra.mxu0 %v2934
        %2991 = vmatpush.bf16.msra.mxu0 %v2930
        %2992 = vmatpush.bf16.msra.mxu0 %v2926
        %2993 = vmatpush.bf16.msra.mxu0 %v2922
        %2994 = vmatmul.bf16.gmra.mxu0 %v2793
        %v2995 = vpop.f32.mrf.mxu0
        %v2996 = vadd.f32 0.0, %v2995
        %v2997 = vpop.f32.mrf.mxu0
        %2998 = vdwg.mxu0
        %2999 = vmatpush.bf16.msra.mxu0 %v2951
        %3000 = vmatpush.bf16.msra.mxu0 %v2947
        %3001 = vmatpush.bf16.msra.mxu0 %v2943
        %3002 = vmatpush.bf16.msra.mxu0 %v2939
        %3003 = vmatpush.bf16.msra.mxu0 %v2935
        %3004 = vmatpush.bf16.msra.mxu0 %v2931
        %3005 = vmatpush.bf16.msra.mxu0 %v2927
        %3006 = vmatpush.bf16.msra.mxu0 %v2923
        %3007 = vmatmul.bf16.gmra.mxu0 %v2793
        %v3008 = vpop.f32.mrf.mxu0
        %v3009 = vadd.f32 0.0, %v3008
        %v3010 = vpop.f32.mrf.mxu0
        %3011 = vdwg.mxu0
        %3012 = vmatpush.bf16.msra.mxu0 %v2952
        %3013 = vmatpush.bf16.msra.mxu0 %v2948
        %3014 = vmatpush.bf16.msra.mxu0 %v2944
        %3015 = vmatpush.bf16.msra.mxu0 %v2940
        %3016 = vmatpush.bf16.msra.mxu0 %v2936
        %3017 = vmatpush.bf16.msra.mxu0 %v2932
        %3018 = vmatpush.bf16.msra.mxu0 %v2928
        %3019 = vmatpush.bf16.msra.mxu0 %v2924
        %3020 = vmatmul.bf16.gmra.mxu0 %v2793
        %v3021 = vpop.f32.mrf.mxu0
        %v3022 = vadd.f32 0.0, %v3021
        %v3023 = vpop.f32.mrf.mxu0
        %3024 = vdwg.mxu0
        %3025 = vmatpush.bf16.msra.mxu0 %v2953
        %3026 = vmatpush.bf16.msra.mxu0 %v2949
        %3027 = vmatpush.bf16.msra.mxu0 %v2945
        %3028 = vmatpush.bf16.msra.mxu0 %v2941
        %3029 = vmatpush.bf16.msra.mxu0 %v2937
        %3030 = vmatpush.bf16.msra.mxu0 %v2933
        %3031 = vmatpush.bf16.msra.mxu0 %v2929
        %3032 = vmatpush.bf16.msra.mxu0 %v2925
        %3033 = vmatmul.bf16.gmra.mxu0 %v2793
        %v3034 = vpop.f32.mrf.mxu0
        %v3035 = vadd.f32 0.0, %v3034
        %v3036 = vpop.f32.mrf.mxu0
        %3037 = vdwg.mxu0
        %v3038 = vadd.f32 %v2785, %v2996
        %v3039 = vadd.f32 %v2786, %v3009
        %v3040 = vadd.f32 %v2787, %v3022
        %v3041 = vadd.f32 %v2788, %v3035
        %v3042 = vxor.u32 %v3038, 2147483648
        %v3043 = vxor.u32 %v3039, 2147483648
        %v3044 = vxor.u32 %v3040, 2147483648
        %v3045 = vmul.f32 %v3042, 1.442695
        %v3046 = vpow.pop %v3045
        %v3047 = vmul.f32 %v3043, 1.442695
        %v3048 = vpow.pop %v3047
        %v3049 = vmul.f32 %v3044, 1.442695
        %v3050 = vpow.pop %v3049
        %v3051 = vadd.f32 %v3046, 1.0
        %v3052 = vadd.f32 %v3048, 1.0
        %v3053 = vadd.f32 %v3050, 1.0
        %v3054 = vrcp.pop %v3051
        %v3055 = vmul.f32 %v3051, %v3054
        %v3056 = vsub.f32 1.0, %v3055
        %v3057 = vmul.f32 %v3054, %v3056
        %v3058 = vadd.f32 %v3054, %v3057
        %vm3059 = vweird.f32 %v3051
        %vm3060 = vweird.f32 %v3054
        %vm3061 = vmor %vm3059, %vm3060
        %v3062 = vsel %vm3061, %v3054, %v3058
        %v3063 = vand.u32 2147483647, %v3051
        %vm3064 = vcmp.eq.f32.partialorder %v3063, 8.507059e+37
        %v3065 = vand.u32 %v3051, 2147483648
        %v3066 = vor.u32 1.1754944e-38, %v3065
        %v3067 = vsel %vm3064, %v3066, %v3062
        %v3068 = vmul.f32 1.0, %v3067
        %v3069 = vrcp.pop %v3052
        %v3070 = vmul.f32 %v3052, %v3069
        %v3071 = vsub.f32 1.0, %v3070
        %v3072 = vmul.f32 %v3069, %v3071
        %v3073 = vadd.f32 %v3069, %v3072
        %vm3074 = vweird.f32 %v3052
        %vm3075 = vweird.f32 %v3069
        %vm3076 = vmor %vm3074, %vm3075
        %v3077 = vsel %vm3076, %v3069, %v3073
        %v3078 = vand.u32 2147483647, %v3052
        %vm3079 = vcmp.eq.f32.partialorder %v3078, 8.507059e+37
        %v3080 = vand.u32 %v3052, 2147483648
        %v3081 = vor.u32 1.1754944e-38, %v3080
        %v3082 = vsel %vm3079, %v3081, %v3077
        %v3083 = vmul.f32 1.0, %v3082
        %v3084 = vrcp.pop %v3053
        %v3085 = vmul.f32 %v3053, %v3084
        %v3086 = vsub.f32 1.0, %v3085
        %v3087 = vmul.f32 %v3084, %v3086
        %v3088 = vadd.f32 %v3084, %v3087
        %vm3089 = vweird.f32 %v3053
        %vm3090 = vweird.f32 %v3084
        %vm3091 = vmor %vm3089, %vm3090
        %v3092 = vsel %vm3091, %v3084, %v3088
        %v3093 = vand.u32 2147483647, %v3053
        %vm3094 = vcmp.eq.f32.partialorder %v3093, 8.507059e+37
        %v3095 = vand.u32 %v3053, 2147483648
        %v3096 = vor.u32 1.1754944e-38, %v3095
        %v3097 = vsel %vm3094, %v3096, %v3092
        %v3098 = vmul.f32 1.0, %v3097
        %v3099 = vtanh.pop %v3041
        %v3100 = vmul.f32 %v3083, %v2779
        %v3101 = vmul.f32 %v3068, %v3099
        %v3102 = vadd.f32 %v3100, %v3101
        %v3103 = vtanh.pop %v3102
        %v3104 = vmul.f32 %v3098, %v3103
        %v3105 = vmul.f32 %v2792, %v3104
        %v3106 = vpack.c.bf16 %v3105, %v3105
        %s3107 = scalar_lea.vmem [#allocation11], 20
        %3108 = vst [vmem:[%s3107] sm:$0xf] %v3106
        %v3109 = vsub.f32 %v3104, %v2776
        %v3110 = vmul.f32 %v2792, %v3109
        %v3111 = vadd.f32 %v2776, %v3110
        %v3112 = vsub.f32 %v3102, %v2779
        %v3113 = vmul.f32 %v2792, %v3112
        %v3114 = vadd.f32 %v2779, %v3113
        %s3115 = smul.u32 6, 4
        %s3116 = smul.addr %s3115, 4
        %s3117 = scalar_lea.vmem [#allocation2], %s3116
        %v3118 = vld [vmem:[%s3117] sm:$0xff]
        %v3119 = vld [vmem:[%s3117 + $0x8] sm:$0xff]
        %v3120 = vunpack.c.l.bf16 %v3118
        %v3121 = vunpack.c.h.bf16 %v3118
        %v3122 = vunpack.c.l.bf16 %v3119
        %v3123 = vunpack.c.h.bf16 %v3119
        %v3124 = vld [vmem:[#allocation3] sm:$0xff]
        %vm3125 = vcmp.gt.f32.partialorder %v3124, 6.0
        %v3126 = vsel %vm3125, 1, 0
        %v3127 = vcvt.s32.f32 %v3126
        %v3128 = vpack.c.bf16 %v3111, %v3111
        %v3129 = vld [vmem:[%s294] sm:$0xff]
        %v3130 = vld [vmem:[%s294 + $0x8] sm:$0xff]
        %v3131 = vld [vmem:[%s294 + $0x10] sm:$0xff]
        %v3132 = vld [vmem:[%s294 + $0x18] sm:$0xff]
        %v3133 = vld [vmem:[%s294 + $0x20] sm:$0xff]
        %v3134 = vld [vmem:[%s294 + $0x28] sm:$0xff]
        %v3135 = vld [vmem:[%s294 + $0x30] sm:$0xff]
        %v3136 = vld [vmem:[%s294 + $0x38] sm:$0xff]
        %v3137 = vld [vmem:[%s294 + $0x40] sm:$0xff]
        %v3138 = vld [vmem:[%s294 + $0x48] sm:$0xff]
        %v3139 = vld [vmem:[%s294 + $0x50] sm:$0xff]
        %v3140 = vld [vmem:[%s294 + $0x58] sm:$0xff]
        %v3141 = vld [vmem:[%s294 + $0x60] sm:$0xff]
        %v3142 = vld [vmem:[%s294 + $0x68] sm:$0xff]
        %v3143 = vld [vmem:[%s294 + $0x70] sm:$0xff]
        %v3144 = vld [vmem:[%s294 + $0x78] sm:$0xff]
        %v3145 = vld [vmem:[%s294 + $0x80] sm:$0xff]
        %v3146 = vld [vmem:[%s294 + $0x88] sm:$0xff]
        %v3147 = vld [vmem:[%s294 + $0x90] sm:$0xff]
        %v3148 = vld [vmem:[%s294 + $0x98] sm:$0xff]
        %v3149 = vld [vmem:[%s294 + $0xa0] sm:$0xff]
        %v3150 = vld [vmem:[%s294 + $0xa8] sm:$0xff]
        %v3151 = vld [vmem:[%s294 + $0xb0] sm:$0xff]
        %v3152 = vld [vmem:[%s294 + $0xb8] sm:$0xff]
        %v3153 = vld [vmem:[%s294 + $0xc0] sm:$0xff]
        %v3154 = vld [vmem:[%s294 + $0xc8] sm:$0xff]
        %v3155 = vld [vmem:[%s294 + $0xd0] sm:$0xff]
        %v3156 = vld [vmem:[%s294 + $0xd8] sm:$0xff]
        %v3157 = vld [vmem:[%s294 + $0xe0] sm:$0xff]
        %v3158 = vld [vmem:[%s294 + $0xe8] sm:$0xff]
        %v3159 = vld [vmem:[%s294 + $0xf0] sm:$0xff]
        %v3160 = vld [vmem:[%s294 + $0xf8] sm:$0xff]
        %v3193 = vunpack.c.l.b16 %v3129
        %v3194 = vunpack.c.h.b16 %v3129
        %v3195 = vunpack.c.l.b16 %v3130
        %v3196 = vunpack.c.h.b16 %v3130
        %v3197 = vunpack.c.l.b16 %v3131
        %v3198 = vunpack.c.h.b16 %v3131
        %v3199 = vunpack.c.l.b16 %v3132
        %v3200 = vunpack.c.h.b16 %v3132
        %v3201 = vunpack.c.l.b16 %v3133
        %v3202 = vunpack.c.h.b16 %v3133
        %v3203 = vunpack.c.l.b16 %v3134
        %v3204 = vunpack.c.h.b16 %v3134
        %v3205 = vunpack.c.l.b16 %v3135
        %v3206 = vunpack.c.h.b16 %v3135
        %v3207 = vunpack.c.l.b16 %v3136
        %v3208 = vunpack.c.h.b16 %v3136
        %v3209 = vunpack.c.l.b16 %v3137
        %v3210 = vunpack.c.h.b16 %v3137
        %v3211 = vunpack.c.l.b16 %v3138
        %v3212 = vunpack.c.h.b16 %v3138
        %v3213 = vunpack.c.l.b16 %v3139
        %v3214 = vunpack.c.h.b16 %v3139
        %v3215 = vunpack.c.l.b16 %v3140
        %v3216 = vunpack.c.h.b16 %v3140
        %v3217 = vunpack.c.l.b16 %v3141
        %v3218 = vunpack.c.h.b16 %v3141
        %v3219 = vunpack.c.l.b16 %v3142
        %v3220 = vunpack.c.h.b16 %v3142
        %v3221 = vunpack.c.l.b16 %v3143
        %v3222 = vunpack.c.h.b16 %v3143
        %v3223 = vunpack.c.l.b16 %v3144
        %v3224 = vunpack.c.h.b16 %v3144
        %v3225 = vunpack.c.l.b16 %v3145
        %v3226 = vunpack.c.h.b16 %v3145
        %v3227 = vunpack.c.l.b16 %v3146
        %v3228 = vunpack.c.h.b16 %v3146
        %v3229 = vunpack.c.l.b16 %v3147
        %v3230 = vunpack.c.h.b16 %v3147
        %v3231 = vunpack.c.l.b16 %v3148
        %v3232 = vunpack.c.h.b16 %v3148
        %v3233 = vunpack.c.l.b16 %v3149
        %v3234 = vunpack.c.h.b16 %v3149
        %v3235 = vunpack.c.l.b16 %v3150
        %v3236 = vunpack.c.h.b16 %v3150
        %v3237 = vunpack.c.l.b16 %v3151
        %v3238 = vunpack.c.h.b16 %v3151
        %v3239 = vunpack.c.l.b16 %v3152
        %v3240 = vunpack.c.h.b16 %v3152
        %v3241 = vunpack.c.l.b16 %v3153
        %v3242 = vunpack.c.h.b16 %v3153
        %v3243 = vunpack.c.l.b16 %v3154
        %v3244 = vunpack.c.h.b16 %v3154
        %v3245 = vunpack.c.l.b16 %v3155
        %v3246 = vunpack.c.h.b16 %v3155
        %v3247 = vunpack.c.l.b16 %v3156
        %v3248 = vunpack.c.h.b16 %v3156
        %v3249 = vunpack.c.l.b16 %v3157
        %v3250 = vunpack.c.h.b16 %v3157
        %v3251 = vunpack.c.l.b16 %v3158
        %v3252 = vunpack.c.h.b16 %v3158
        %v3253 = vunpack.c.l.b16 %v3159
        %v3254 = vunpack.c.h.b16 %v3159
        %v3255 = vunpack.c.l.b16 %v3160
        %v3256 = vunpack.c.h.b16 %v3160
        %v3257 = vpack.c.b16 %v3197, %v3193
        %v3258 = vpack.c.b16 %v3198, %v3194
        %v3259 = vpack.c.b16 %v3199, %v3195
        %v3260 = vpack.c.b16 %v3200, %v3196
        %v3261 = vpack.c.b16 %v3205, %v3201
        %v3262 = vpack.c.b16 %v3206, %v3202
        %v3263 = vpack.c.b16 %v3207, %v3203
        %v3264 = vpack.c.b16 %v3208, %v3204
        %v3265 = vpack.c.b16 %v3213, %v3209
        %v3266 = vpack.c.b16 %v3214, %v3210
        %v3267 = vpack.c.b16 %v3215, %v3211
        %v3268 = vpack.c.b16 %v3216, %v3212
        %v3269 = vpack.c.b16 %v3221, %v3217
        %v3270 = vpack.c.b16 %v3222, %v3218
        %v3271 = vpack.c.b16 %v3223, %v3219
        %v3272 = vpack.c.b16 %v3224, %v3220
        %v3273 = vpack.c.b16 %v3229, %v3225
        %v3274 = vpack.c.b16 %v3230, %v3226
        %v3275 = vpack.c.b16 %v3231, %v3227
        %v3276 = vpack.c.b16 %v3232, %v3228
        %v3277 = vpack.c.b16 %v3237, %v3233
        %v3278 = vpack.c.b16 %v3238, %v3234
        %v3279 = vpack.c.b16 %v3239, %v3235
        %v3280 = vpack.c.b16 %v3240, %v3236
        %v3281 = vpack.c.b16 %v3245, %v3241
        %v3282 = vpack.c.b16 %v3246, %v3242
        %v3283 = vpack.c.b16 %v3247, %v3243
        %v3284 = vpack.c.b16 %v3248, %v3244
        %v3285 = vpack.c.b16 %v3253, %v3249
        %v3286 = vpack.c.b16 %v3254, %v3250
        %v3287 = vpack.c.b16 %v3255, %v3251
        %v3288 = vpack.c.b16 %v3256, %v3252
        %3321 = vmatpush.bf16.msra.mxu0 %v3285
        %3322 = vmatpush.bf16.msra.mxu0 %v3281
        %3323 = vmatpush.bf16.msra.mxu0 %v3277
        %3324 = vmatpush.bf16.msra.mxu0 %v3273
        %3325 = vmatpush.bf16.msra.mxu0 %v3269
        %3326 = vmatpush.bf16.msra.mxu0 %v3265
        %3327 = vmatpush.bf16.msra.mxu0 %v3261
        %3328 = vmatpush.bf16.msra.mxu0 %v3257
        %3329 = vmatmul.bf16.gmra.mxu0 %v3128
        %v3330 = vpop.f32.mrf.mxu0
        %v3331 = vadd.f32 0.0, %v3330
        %v3332 = vpop.f32.mrf.mxu0
        %3333 = vdwg.mxu0
        %3334 = vmatpush.bf16.msra.mxu0 %v3286
        %3335 = vmatpush.bf16.msra.mxu0 %v3282
        %3336 = vmatpush.bf16.msra.mxu0 %v3278
        %3337 = vmatpush.bf16.msra.mxu0 %v3274
        %3338 = vmatpush.bf16.msra.mxu0 %v3270
        %3339 = vmatpush.bf16.msra.mxu0 %v3266
        %3340 = vmatpush.bf16.msra.mxu0 %v3262
        %3341 = vmatpush.bf16.msra.mxu0 %v3258
        %3342 = vmatmul.bf16.gmra.mxu0 %v3128
        %v3343 = vpop.f32.mrf.mxu0
        %v3344 = vadd.f32 0.0, %v3343
        %v3345 = vpop.f32.mrf.mxu0
        %3346 = vdwg.mxu0
        %3347 = vmatpush.bf16.msra.mxu0 %v3287
        %3348 = vmatpush.bf16.msra.mxu0 %v3283
        %3349 = vmatpush.bf16.msra.mxu0 %v3279
        %3350 = vmatpush.bf16.msra.mxu0 %v3275
        %3351 = vmatpush.bf16.msra.mxu0 %v3271
        %3352 = vmatpush.bf16.msra.mxu0 %v3267
        %3353 = vmatpush.bf16.msra.mxu0 %v3263
        %3354 = vmatpush.bf16.msra.mxu0 %v3259
        %3355 = vmatmul.bf16.gmra.mxu0 %v3128
        %v3356 = vpop.f32.mrf.mxu0
        %v3357 = vadd.f32 0.0, %v3356
        %v3358 = vpop.f32.mrf.mxu0
        %3359 = vdwg.mxu0
        %3360 = vmatpush.bf16.msra.mxu0 %v3288
        %3361 = vmatpush.bf16.msra.mxu0 %v3284
        %3362 = vmatpush.bf16.msra.mxu0 %v3280
        %3363 = vmatpush.bf16.msra.mxu0 %v3276
        %3364 = vmatpush.bf16.msra.mxu0 %v3272
        %3365 = vmatpush.bf16.msra.mxu0 %v3268
        %3366 = vmatpush.bf16.msra.mxu0 %v3264
        %3367 = vmatpush.bf16.msra.mxu0 %v3260
        %3368 = vmatmul.bf16.gmra.mxu0 %v3128
        %v3369 = vpop.f32.mrf.mxu0
        %v3370 = vadd.f32 0.0, %v3369
        %v3371 = vpop.f32.mrf.mxu0
        %3372 = vdwg.mxu0
        %v3373 = vadd.f32 %v3120, %v3331
        %v3374 = vadd.f32 %v3121, %v3344
        %v3375 = vadd.f32 %v3122, %v3357
        %v3376 = vadd.f32 %v3123, %v3370
        %v3377 = vxor.u32 %v3373, 2147483648
        %v3378 = vxor.u32 %v3374, 2147483648
        %v3379 = vxor.u32 %v3375, 2147483648
        %v3380 = vmul.f32 %v3377, 1.442695
        %v3381 = vpow.pop %v3380
        %v3382 = vmul.f32 %v3378, 1.442695
        %v3383 = vpow.pop %v3382
        %v3384 = vmul.f32 %v3379, 1.442695
        %v3385 = vpow.pop %v3384
        %v3386 = vadd.f32 %v3381, 1.0
        %v3387 = vadd.f32 %v3383, 1.0
        %v3388 = vadd.f32 %v3385, 1.0
        %v3389 = vrcp.pop %v3386
        %v3390 = vmul.f32 %v3386, %v3389
        %v3391 = vsub.f32 1.0, %v3390
        %v3392 = vmul.f32 %v3389, %v3391
        %v3393 = vadd.f32 %v3389, %v3392
        %vm3394 = vweird.f32 %v3386
        %vm3395 = vweird.f32 %v3389
        %vm3396 = vmor %vm3394, %vm3395
        %v3397 = vsel %vm3396, %v3389, %v3393
        %v3398 = vand.u32 2147483647, %v3386
        %vm3399 = vcmp.eq.f32.partialorder %v3398, 8.507059e+37
        %v3400 = vand.u32 %v3386, 2147483648
        %v3401 = vor.u32 1.1754944e-38, %v3400
        %v3402 = vsel %vm3399, %v3401, %v3397
        %v3403 = vmul.f32 1.0, %v3402
        %v3404 = vrcp.pop %v3387
        %v3405 = vmul.f32 %v3387, %v3404
        %v3406 = vsub.f32 1.0, %v3405
        %v3407 = vmul.f32 %v3404, %v3406
        %v3408 = vadd.f32 %v3404, %v3407
        %vm3409 = vweird.f32 %v3387
        %vm3410 = vweird.f32 %v3404
        %vm3411 = vmor %vm3409, %vm3410
        %v3412 = vsel %vm3411, %v3404, %v3408
        %v3413 = vand.u32 2147483647, %v3387
        %vm3414 = vcmp.eq.f32.partialorder %v3413, 8.507059e+37
        %v3415 = vand.u32 %v3387, 2147483648
        %v3416 = vor.u32 1.1754944e-38, %v3415
        %v3417 = vsel %vm3414, %v3416, %v3412
        %v3418 = vmul.f32 1.0, %v3417
        %v3419 = vrcp.pop %v3388
        %v3420 = vmul.f32 %v3388, %v3419
        %v3421 = vsub.f32 1.0, %v3420
        %v3422 = vmul.f32 %v3419, %v3421
        %v3423 = vadd.f32 %v3419, %v3422
        %vm3424 = vweird.f32 %v3388
        %vm3425 = vweird.f32 %v3419
        %vm3426 = vmor %vm3424, %vm3425
        %v3427 = vsel %vm3426, %v3419, %v3423
        %v3428 = vand.u32 2147483647, %v3388
        %vm3429 = vcmp.eq.f32.partialorder %v3428, 8.507059e+37
        %v3430 = vand.u32 %v3388, 2147483648
        %v3431 = vor.u32 1.1754944e-38, %v3430
        %v3432 = vsel %vm3429, %v3431, %v3427
        %v3433 = vmul.f32 1.0, %v3432
        %v3434 = vtanh.pop %v3376
        %v3435 = vmul.f32 %v3418, %v3114
        %v3436 = vmul.f32 %v3403, %v3434
        %v3437 = vadd.f32 %v3435, %v3436
        %v3438 = vtanh.pop %v3437
        %v3439 = vmul.f32 %v3433, %v3438
        %v3440 = vmul.f32 %v3127, %v3439
        %v3441 = vpack.c.bf16 %v3440, %v3440
        %s3442 = scalar_lea.vmem [#allocation11], 24
        %3443 = vst [vmem:[%s3442] sm:$0xf] %v3441
        %v3444 = vsub.f32 %v3439, %v3111
        %v3445 = vmul.f32 %v3127, %v3444
        %v3446 = vadd.f32 %v3111, %v3445
        %v3447 = vsub.f32 %v3437, %v3114
        %v3448 = vmul.f32 %v3127, %v3447
        %v3449 = vadd.f32 %v3114, %v3448
        %s3450 = smul.u32 7, 4
        %s3451 = smul.addr %s3450, 4
        %s3452 = scalar_lea.vmem [#allocation2], %s3451
        %v3453 = vld [vmem:[%s3452] sm:$0xff]
        %v3454 = vld [vmem:[%s3452 + $0x8] sm:$0xff]
        %v3455 = vunpack.c.l.bf16 %v3453
        %v3456 = vunpack.c.h.bf16 %v3453
        %v3457 = vunpack.c.l.bf16 %v3454
        %v3458 = vunpack.c.h.bf16 %v3454
        %v3459 = vld [vmem:[#allocation3] sm:$0xff]
        %vm3460 = vcmp.gt.f32.partialorder %v3459, 7.0
        %v3461 = vsel %vm3460, 1, 0
        %v3462 = vcvt.s32.f32 %v3461
        %v3463 = vpack.c.bf16 %v3446, %v3446
        %v3464 = vld [vmem:[%s294] sm:$0xff]
        %v3465 = vld [vmem:[%s294 + $0x8] sm:$0xff]
        %v3466 = vld [vmem:[%s294 + $0x10] sm:$0xff]
        %v3467 = vld [vmem:[%s294 + $0x18] sm:$0xff]
        %v3468 = vld [vmem:[%s294 + $0x20] sm:$0xff]
        %v3469 = vld [vmem:[%s294 + $0x28] sm:$0xff]
        %v3470 = vld [vmem:[%s294 + $0x30] sm:$0xff]
        %v3471 = vld [vmem:[%s294 + $0x38] sm:$0xff]
        %v3472 = vld [vmem:[%s294 + $0x40] sm:$0xff]
        %v3473 = vld [vmem:[%s294 + $0x48] sm:$0xff]
        %v3474 = vld [vmem:[%s294 + $0x50] sm:$0xff]
        %v3475 = vld [vmem:[%s294 + $0x58] sm:$0xff]
        %v3476 = vld [vmem:[%s294 + $0x60] sm:$0xff]
        %v3477 = vld [vmem:[%s294 + $0x68] sm:$0xff]
        %v3478 = vld [vmem:[%s294 + $0x70] sm:$0xff]
        %v3479 = vld [vmem:[%s294 + $0x78] sm:$0xff]
        %v3480 = vld [vmem:[%s294 + $0x80] sm:$0xff]
        %v3481 = vld [vmem:[%s294 + $0x88] sm:$0xff]
        %v3482 = vld [vmem:[%s294 + $0x90] sm:$0xff]
        %v3483 = vld [vmem:[%s294 + $0x98] sm:$0xff]
        %v3484 = vld [vmem:[%s294 + $0xa0] sm:$0xff]
        %v3485 = vld [vmem:[%s294 + $0xa8] sm:$0xff]
        %v3486 = vld [vmem:[%s294 + $0xb0] sm:$0xff]
        %v3487 = vld [vmem:[%s294 + $0xb8] sm:$0xff]
        %v3488 = vld [vmem:[%s294 + $0xc0] sm:$0xff]
        %v3489 = vld [vmem:[%s294 + $0xc8] sm:$0xff]
        %v3490 = vld [vmem:[%s294 + $0xd0] sm:$0xff]
        %v3491 = vld [vmem:[%s294 + $0xd8] sm:$0xff]
        %v3492 = vld [vmem:[%s294 + $0xe0] sm:$0xff]
        %v3493 = vld [vmem:[%s294 + $0xe8] sm:$0xff]
        %v3494 = vld [vmem:[%s294 + $0xf0] sm:$0xff]
        %v3495 = vld [vmem:[%s294 + $0xf8] sm:$0xff]
        %v3528 = vunpack.c.l.b16 %v3464
        %v3529 = vunpack.c.h.b16 %v3464
        %v3530 = vunpack.c.l.b16 %v3465
        %v3531 = vunpack.c.h.b16 %v3465
        %v3532 = vunpack.c.l.b16 %v3466
        %v3533 = vunpack.c.h.b16 %v3466
        %v3534 = vunpack.c.l.b16 %v3467
        %v3535 = vunpack.c.h.b16 %v3467
        %v3536 = vunpack.c.l.b16 %v3468
        %v3537 = vunpack.c.h.b16 %v3468
        %v3538 = vunpack.c.l.b16 %v3469
        %v3539 = vunpack.c.h.b16 %v3469
        %v3540 = vunpack.c.l.b16 %v3470
        %v3541 = vunpack.c.h.b16 %v3470
        %v3542 = vunpack.c.l.b16 %v3471
        %v3543 = vunpack.c.h.b16 %v3471
        %v3544 = vunpack.c.l.b16 %v3472
        %v3545 = vunpack.c.h.b16 %v3472
        %v3546 = vunpack.c.l.b16 %v3473
        %v3547 = vunpack.c.h.b16 %v3473
        %v3548 = vunpack.c.l.b16 %v3474
        %v3549 = vunpack.c.h.b16 %v3474
        %v3550 = vunpack.c.l.b16 %v3475
        %v3551 = vunpack.c.h.b16 %v3475
        %v3552 = vunpack.c.l.b16 %v3476
        %v3553 = vunpack.c.h.b16 %v3476
        %v3554 = vunpack.c.l.b16 %v3477
        %v3555 = vunpack.c.h.b16 %v3477
        %v3556 = vunpack.c.l.b16 %v3478
        %v3557 = vunpack.c.h.b16 %v3478
        %v3558 = vunpack.c.l.b16 %v3479
        %v3559 = vunpack.c.h.b16 %v3479
        %v3560 = vunpack.c.l.b16 %v3480
        %v3561 = vunpack.c.h.b16 %v3480
        %v3562 = vunpack.c.l.b16 %v3481
        %v3563 = vunpack.c.h.b16 %v3481
        %v3564 = vunpack.c.l.b16 %v3482
        %v3565 = vunpack.c.h.b16 %v3482
        %v3566 = vunpack.c.l.b16 %v3483
        %v3567 = vunpack.c.h.b16 %v3483
        %v3568 = vunpack.c.l.b16 %v3484
        %v3569 = vunpack.c.h.b16 %v3484
        %v3570 = vunpack.c.l.b16 %v3485
        %v3571 = vunpack.c.h.b16 %v3485
        %v3572 = vunpack.c.l.b16 %v3486
        %v3573 = vunpack.c.h.b16 %v3486
        %v3574 = vunpack.c.l.b16 %v3487
        %v3575 = vunpack.c.h.b16 %v3487
        %v3576 = vunpack.c.l.b16 %v3488
        %v3577 = vunpack.c.h.b16 %v3488
        %v3578 = vunpack.c.l.b16 %v3489
        %v3579 = vunpack.c.h.b16 %v3489
        %v3580 = vunpack.c.l.b16 %v3490
        %v3581 = vunpack.c.h.b16 %v3490
        %v3582 = vunpack.c.l.b16 %v3491
        %v3583 = vunpack.c.h.b16 %v3491
        %v3584 = vunpack.c.l.b16 %v3492
        %v3585 = vunpack.c.h.b16 %v3492
        %v3586 = vunpack.c.l.b16 %v3493
        %v3587 = vunpack.c.h.b16 %v3493
        %v3588 = vunpack.c.l.b16 %v3494
        %v3589 = vunpack.c.h.b16 %v3494
        %v3590 = vunpack.c.l.b16 %v3495
        %v3591 = vunpack.c.h.b16 %v3495
        %v3592 = vpack.c.b16 %v3532, %v3528
        %v3593 = vpack.c.b16 %v3533, %v3529
        %v3594 = vpack.c.b16 %v3534, %v3530
        %v3595 = vpack.c.b16 %v3535, %v3531
        %v3596 = vpack.c.b16 %v3540, %v3536
        %v3597 = vpack.c.b16 %v3541, %v3537
        %v3598 = vpack.c.b16 %v3542, %v3538
        %v3599 = vpack.c.b16 %v3543, %v3539
        %v3600 = vpack.c.b16 %v3548, %v3544
        %v3601 = vpack.c.b16 %v3549, %v3545
        %v3602 = vpack.c.b16 %v3550, %v3546
        %v3603 = vpack.c.b16 %v3551, %v3547
        %v3604 = vpack.c.b16 %v3556, %v3552
        %v3605 = vpack.c.b16 %v3557, %v3553
        %v3606 = vpack.c.b16 %v3558, %v3554
        %v3607 = vpack.c.b16 %v3559, %v3555
        %v3608 = vpack.c.b16 %v3564, %v3560
        %v3609 = vpack.c.b16 %v3565, %v3561
        %v3610 = vpack.c.b16 %v3566, %v3562
        %v3611 = vpack.c.b16 %v3567, %v3563
        %v3612 = vpack.c.b16 %v3572, %v3568
        %v3613 = vpack.c.b16 %v3573, %v3569
        %v3614 = vpack.c.b16 %v3574, %v3570
        %v3615 = vpack.c.b16 %v3575, %v3571
        %v3616 = vpack.c.b16 %v3580, %v3576
        %v3617 = vpack.c.b16 %v3581, %v3577
        %v3618 = vpack.c.b16 %v3582, %v3578
        %v3619 = vpack.c.b16 %v3583, %v3579
        %v3620 = vpack.c.b16 %v3588, %v3584
        %v3621 = vpack.c.b16 %v3589, %v3585
        %v3622 = vpack.c.b16 %v3590, %v3586
        %v3623 = vpack.c.b16 %v3591, %v3587
        %3656 = vmatpush.bf16.msra.mxu0 %v3620
        %3657 = vmatpush.bf16.msra.mxu0 %v3616
        %3658 = vmatpush.bf16.msra.mxu0 %v3612
        %3659 = vmatpush.bf16.msra.mxu0 %v3608
        %3660 = vmatpush.bf16.msra.mxu0 %v3604
        %3661 = vmatpush.bf16.msra.mxu0 %v3600
        %3662 = vmatpush.bf16.msra.mxu0 %v3596
        %3663 = vmatpush.bf16.msra.mxu0 %v3592
        %3664 = vmatmul.bf16.gmra.mxu0 %v3463
        %v3665 = vpop.f32.mrf.mxu0
        %v3666 = vadd.f32 0.0, %v3665
        %v3667 = vpop.f32.mrf.mxu0
        %3668 = vdwg.mxu0
        %3669 = vmatpush.bf16.msra.mxu0 %v3621
        %3670 = vmatpush.bf16.msra.mxu0 %v3617
        %3671 = vmatpush.bf16.msra.mxu0 %v3613
        %3672 = vmatpush.bf16.msra.mxu0 %v3609
        %3673 = vmatpush.bf16.msra.mxu0 %v3605
        %3674 = vmatpush.bf16.msra.mxu0 %v3601
        %3675 = vmatpush.bf16.msra.mxu0 %v3597
        %3676 = vmatpush.bf16.msra.mxu0 %v3593
        %3677 = vmatmul.bf16.gmra.mxu0 %v3463
        %v3678 = vpop.f32.mrf.mxu0
        %v3679 = vadd.f32 0.0, %v3678
        %v3680 = vpop.f32.mrf.mxu0
        %3681 = vdwg.mxu0
        %3682 = vmatpush.bf16.msra.mxu0 %v3622
        %3683 = vmatpush.bf16.msra.mxu0 %v3618
        %3684 = vmatpush.bf16.msra.mxu0 %v3614
        %3685 = vmatpush.bf16.msra.mxu0 %v3610
        %3686 = vmatpush.bf16.msra.mxu0 %v3606
        %3687 = vmatpush.bf16.msra.mxu0 %v3602
        %3688 = vmatpush.bf16.msra.mxu0 %v3598
        %3689 = vmatpush.bf16.msra.mxu0 %v3594
        %3690 = vmatmul.bf16.gmra.mxu0 %v3463
        %v3691 = vpop.f32.mrf.mxu0
        %v3692 = vadd.f32 0.0, %v3691
        %v3693 = vpop.f32.mrf.mxu0
        %3694 = vdwg.mxu0
        %3695 = vmatpush.bf16.msra.mxu0 %v3623
        %3696 = vmatpush.bf16.msra.mxu0 %v3619
        %3697 = vmatpush.bf16.msra.mxu0 %v3615
        %3698 = vmatpush.bf16.msra.mxu0 %v3611
        %3699 = vmatpush.bf16.msra.mxu0 %v3607
        %3700 = vmatpush.bf16.msra.mxu0 %v3603
        %3701 = vmatpush.bf16.msra.mxu0 %v3599
        %3702 = vmatpush.bf16.msra.mxu0 %v3595
        %3703 = vmatmul.bf16.gmra.mxu0 %v3463
        %v3704 = vpop.f32.mrf.mxu0
        %v3705 = vadd.f32 0.0, %v3704
        %v3706 = vpop.f32.mrf.mxu0
        %3707 = vdwg.mxu0
        %v3708 = vadd.f32 %v3455, %v3666
        %v3709 = vadd.f32 %v3456, %v3679
        %v3710 = vadd.f32 %v3457, %v3692
        %v3711 = vadd.f32 %v3458, %v3705
        %v3712 = vxor.u32 %v3708, 2147483648
        %v3713 = vxor.u32 %v3709, 2147483648
        %v3714 = vxor.u32 %v3710, 2147483648
        %v3715 = vmul.f32 %v3712, 1.442695
        %v3716 = vpow.pop %v3715
        %v3717 = vmul.f32 %v3713, 1.442695
        %v3718 = vpow.pop %v3717
        %v3719 = vmul.f32 %v3714, 1.442695
        %v3720 = vpow.pop %v3719
        %v3721 = vadd.f32 %v3716, 1.0
        %v3722 = vadd.f32 %v3718, 1.0
        %v3723 = vadd.f32 %v3720, 1.0
        %v3724 = vrcp.pop %v3721
        %v3725 = vmul.f32 %v3721, %v3724
        %v3726 = vsub.f32 1.0, %v3725
        %v3727 = vmul.f32 %v3724, %v3726
        %v3728 = vadd.f32 %v3724, %v3727
        %vm3729 = vweird.f32 %v3721
        %vm3730 = vweird.f32 %v3724
        %vm3731 = vmor %vm3729, %vm3730
        %v3732 = vsel %vm3731, %v3724, %v3728
        %v3733 = vand.u32 2147483647, %v3721
        %vm3734 = vcmp.eq.f32.partialorder %v3733, 8.507059e+37
        %v3735 = vand.u32 %v3721, 2147483648
        %v3736 = vor.u32 1.1754944e-38, %v3735
        %v3737 = vsel %vm3734, %v3736, %v3732
        %v3738 = vmul.f32 1.0, %v3737
        %v3739 = vrcp.pop %v3722
        %v3740 = vmul.f32 %v3722, %v3739
        %v3741 = vsub.f32 1.0, %v3740
        %v3742 = vmul.f32 %v3739, %v3741
        %v3743 = vadd.f32 %v3739, %v3742
        %vm3744 = vweird.f32 %v3722
        %vm3745 = vweird.f32 %v3739
        %vm3746 = vmor %vm3744, %vm3745
        %v3747 = vsel %vm3746, %v3739, %v3743
        %v3748 = vand.u32 2147483647, %v3722
        %vm3749 = vcmp.eq.f32.partialorder %v3748, 8.507059e+37
        %v3750 = vand.u32 %v3722, 2147483648
        %v3751 = vor.u32 1.1754944e-38, %v3750
        %v3752 = vsel %vm3749, %v3751, %v3747
        %v3753 = vmul.f32 1.0, %v3752
        %v3754 = vrcp.pop %v3723
        %v3755 = vmul.f32 %v3723, %v3754
        %v3756 = vsub.f32 1.0, %v3755
        %v3757 = vmul.f32 %v3754, %v3756
        %v3758 = vadd.f32 %v3754, %v3757
        %vm3759 = vweird.f32 %v3723
        %vm3760 = vweird.f32 %v3754
        %vm3761 = vmor %vm3759, %vm3760
        %v3762 = vsel %vm3761, %v3754, %v3758
        %v3763 = vand.u32 2147483647, %v3723
        %vm3764 = vcmp.eq.f32.partialorder %v3763, 8.507059e+37
        %v3765 = vand.u32 %v3723, 2147483648
        %v3766 = vor.u32 1.1754944e-38, %v3765
        %v3767 = vsel %vm3764, %v3766, %v3762
        %v3768 = vmul.f32 1.0, %v3767
        %v3769 = vtanh.pop %v3711
        %v3770 = vmul.f32 %v3753, %v3449
        %v3771 = vmul.f32 %v3738, %v3769
        %v3772 = vadd.f32 %v3770, %v3771
        %v3773 = vtanh.pop %v3772
        %v3774 = vmul.f32 %v3768, %v3773
        %v3775 = vmul.f32 %v3462, %v3774
        %v3776 = vpack.c.bf16 %v3775, %v3775
        %s3777 = scalar_lea.vmem [#allocation11], 28
        %3778 = vst [vmem:[%s3777] sm:$0xf] %v3776
        // Predicated region
        $region69: #{tpu_custom_call.1} parent=39 // pred_check
          %p3779 = pneg %p152
        $region70: #{tpu_custom_call.1} parent=39 // pred_check_branch
          %3781 = sbr.rel (%p3779) target = $region72
        $region71: #{tpu_custom_call.1} parent=39 // pred_region
          %3783 = vsyncadd [#allocation5], 0
          %s3784 = sshll.u32 [#allocation11], 4
          %s3785 = int_to_ptr.vmem [resolvable:$true] %s3784
          %s3786 = sshll.u32 %s5, 4
          %s3787 = int_to_ptr.hbm [resolvable:$true] %s3786
          %3792 = dma.vmem_to_hbm [thread:$0]  %s3785, 512, %s3787, [#allocation5], 64, 64, 4
        $region72: #{tpu_custom_call.1} parent=39 // pred_fallthru
          _
        // Predicated region
        $region73: #{tpu_custom_call.1} parent=39 // pred_check
          %p3793 = pneg %p152
        $region74: #{tpu_custom_call.1} parent=39 // pred_check_branch
          %3795 = sbr.rel (%p3793) target = $region76
        $region75: #{tpu_custom_call.1} parent=39 // pred_region
          %3797 = dma.done [#allocation5], 512
        $region76: #{tpu_custom_call.1} parent=39 // pred_fallthru
          _
      $region40: #{tpu_custom_call.1} parent=5 // pred_fallthru
        _
      %p3798 = scmp.le.s32.totalorder 2, %s14
      // Predicated region
      $region77: #{tpu_custom_call.1} parent=5 // pred_check
        %p3799 = pneg %p3798
      $region78: #{tpu_custom_call.1} parent=5 // pred_check_branch
        %3801 = sbr.rel (%p3799) target = $region80
      $region79: #{tpu_custom_call.1} parent=5 // pred_region
        %s3802 = ssub.s32 %s14, 2
      $region80: #{tpu_custom_call.1} parent=5 // pred_fallthru
        _
    $region6: #{tpu_custom_call.1} parent=1 // loop_footer
      %s18 = sadd.s32 1, %s14
    $region7: #{tpu_custom_call.1} parent=1 // loop_footer_branch
      %13 = sbr.rel target = $region3
    $region8: #{tpu_custom_call.1} parent=1 // loop_exit
      _
    %3803 = vsyncpa [#allocation4], 1
    %s3804 = scalar_lea.sflag [#allocation4], 1
    %3805 = vsyncpa %s3804, 1
    %3806 = vsyncpa [#allocation7], 1
    %3807 = vsyncpa [#allocation5], 1
    %s3808 = scalar_lea.sflag [#allocation5], 1
    %3809 = vsyncpa %s3808, 1

</llo_original>
